<compile_context>
chip_gen: v7x
topology: tpu7x:2x2x1
jax: 0.10.0
libtpu: 0.0.40
codegen_flags: <defaults>
</compile_context>

<pallas_src>
import functools
import math

import jax
import jax.numpy as jnp
from jax.experimental import pallas as pl
from jax.experimental.pallas import tpu as pltpu

# ---------------- model config (small, consistent with the forward) ----------
VOCAB = 100
HIDDEN = 32
N_HEADS = 4
N_LAYERS = 2
INTERMEDIATE = 64
SEQ = 8
BATCH = 2
PAD_IDX = 1
MAX_POS = 16
LN_EPS = 1e-5
CLS_PAD = 128          # classifier output padded to a full lane width

event_tags = ['Shareholder Meeting', 'None/Other', 'Earnings Release', 'Conference', 'Conference',
              'Earnings Call', 'Shareholder Meeting', 'Conference', 'Conference', 'Shareholder Meeting',
              'Shareholder Meeting', 'Conference', 'Earnings Call', 'Earnings Call', 'Earnings Call',
              'Earnings Release', 'Conference', 'Earnings Call', 'Earnings Release', 'Earnings Call',
              'Earnings Release', 'Earnings Release', 'Earnings Call', 'Earnings Release', 'Earnings Release',
              'Shareholder Meeting', 'Earnings Release', 'Earnings Release', 'Earnings Call', 'Earnings Call',
              'Earnings Call', 'Earnings Release', 'Earnings Call', 'Earnings Call', 'None/Other',
              'Earnings Call', 'Earnings Release', 'Conference', 'Earnings Call', 'Earnings Release',
              'Shareholder Meeting', 'Earnings Release', 'Conference', 'Earnings Call', 'Earnings Call',
              'Earnings Call', 'Merger/Acquisition', 'Earnings Call', 'Earnings Call', 'Earnings Call',
              'Earnings Call', 'Earnings Release', 'Earnings Release']
NUM_INTENT_LABELS = len(event_tags)

VSPEC = pl.BlockSpec(memory_space=pltpu.MemorySpace.VMEM)


# ---------------- in-kernel helpers (f32 elementwise, v5e-safe) ---------------
def _layernorm(x, g, b, eps=LN_EPS):
    mu = jnp.mean(x, axis=-1, keepdims=True)
    var = jnp.mean((x - mu) ** 2, axis=-1, keepdims=True)
    return (x - mu) * jax.lax.rsqrt(var + eps) * g + b


def _gelu(x):
    # TODO(synk): RoBERTa uses erf-GELU; tanh approximation kept for simple EUP lowering.
    c = math.sqrt(2.0 / math.pi)
    return 0.5 * x * (1.0 + jnp.tanh(c * (x + 0.044715 * x * x * x)))


# ---------------- fused forward kernel ----------------------------------------
def fused_parser_kernel(ids_ref, mask_ref, label_ref,
                        wemb_ref, pemb_ref, temb_ref, embln_ref,
                        wqkv_ref, wo_ref, w1_ref, w2_ref, vech_ref, veci_ref,
                        poolw_ref, poolb_ref, clsw_ref, clsb_ref,
                        logits_ref, loss_ref,
                        ctx_ref,
                        *, B, S, nh, n_layers, n_labels):
    BS = B * S
    H = wemb_ref.shape[1]
    hd = H // nh
    scale = 1.0 / math.sqrt(hd)
    bf16 = jnp.bfloat16

    # ---- embeddings: one-hot @ table on the MXU (no XLA gathers) -------------
    ids = ids_ref[...]                                      # (BS, 3) int32

    def embed(col, table_ref):
        n_rows = table_ref.shape[0]
        iota = jax.lax.broadcasted_iota(jnp.int32, (BS, n_rows), 1)
        onehot = (iota == ids[:, col:col + 1]).astype(jnp.float32).astype(bf16)
        return jnp.dot(onehot, table_ref[...], preferred_element_type=jnp.float32)

    x = embed(0, wemb_ref) + embed(1, pemb_ref) + embed(2, temb_ref)   # (BS, H) f32
    x = _layernorm(x, embln_ref[0:1, :], embln_ref[1:2, :])
    # TODO(synk): embedding / hidden dropout skipped (eval mode, identity).

    # additive attention mask, (B, S)
    mask_add = (1.0 - mask_ref[...]) * -1e9

    # ---- transformer encoder layers (static unroll, weights stay in VMEM) ----
    for l in range(n_layers):
        vec = vech_ref[l]                                   # (9, H) f32
        xb = x.astype(bf16)
        qkv = jnp.dot(xb, wqkv_ref[l], preferred_element_type=jnp.float32)  # (BS, 3H)
        q = qkv[:, 0:H] + vec[0:1, :]
        k = qkv[:, H:2 * H] + vec[1:2, :]
        v = qkv[:, 2 * H:3 * H] + vec[2:3, :]

        # per-(batch, head) attention; heads written straight into VMEM scratch
        # (no concatenates / cross-lane relayouts).
        for b in range(B):
            mb = mask_add[b:b + 1, :]                       # (1, S)
            for h in range(nh):
                qh = q[b * S:(b + 1) * S, h * hd:(h + 1) * hd]
                kh = k[b * S:(b + 1) * S, h * hd:(h + 1) * hd]
                vh = v[b * S:(b + 1) * S, h * hd:(h + 1) * hd]
                s = jax.lax.dot_general(qh, kh, (((1,), (1,)), ((), ())),
                                        preferred_element_type=jnp.float32) * scale
                s = s + mb
                s = s - jnp.max(s, axis=-1, keepdims=True)
                p = jnp.exp(s)
                p = p * pl.reciprocal(jnp.sum(p, axis=-1, keepdims=True), approx=True)
                ctx_ref[b * S:(b + 1) * S, h * hd:(h + 1) * hd] = jnp.dot(
                    p, vh, preferred_element_type=jnp.float32)

        ctx = ctx_ref[...]                                  # (BS, H) f32
        attn = jnp.dot(ctx.astype(bf16), wo_ref[l],
                       preferred_element_type=jnp.float32) + vec[3:4, :]
        h1 = _layernorm(x + attn, vec[5:6, :], vec[6:7, :])

        ff = _gelu(jnp.dot(h1.astype(bf16), w1_ref[l],
                           preferred_element_type=jnp.float32) + veci_ref[l])
        ff = jnp.dot(ff.astype(bf16), w2_ref[l],
                     preferred_element_type=jnp.float32) + vec[4:5, :]
        x = _layernorm(h1 + ff, vec[7:8, :], vec[8:9, :])

    # ---- pooler: select CLS rows via a tiny selection matmul (no concat) -----
    riota = jax.lax.broadcasted_iota(jnp.int32, (B, BS), 1)
    biota = jax.lax.broadcasted_iota(jnp.int32, (B, BS), 0)
    sel = (riota == biota * S).astype(jnp.float32)          # sel[b, b*S] = 1
    cls = jnp.dot(sel, x, preferred_element_type=jnp.float32)          # (B, H)
    pooled = jnp.tanh(jnp.dot(cls.astype(bf16), poolw_ref[...],
                              preferred_element_type=jnp.float32) + poolb_ref[...])
    # dropout on pooled output is identity (eval mode).

    # ---- classifier (lane-padded to CLS_PAD) + cross-entropy -----------------
    logits = jnp.dot(pooled.astype(bf16), clsw_ref[...],
                     preferred_element_type=jnp.float32) + clsb_ref[...]  # (B, CLS_PAD)
    logits_ref[...] = logits

    c_pad = clsw_ref.shape[1]
    ciota = jax.lax.broadcasted_iota(jnp.int32, (B, c_pad), 1)
    valid = ciota < n_labels
    masked = jnp.where(valid, logits, -1e30)
    m = jnp.max(masked, axis=-1, keepdims=True)
    lse = m + jnp.log(jnp.sum(jnp.exp(masked - m), axis=-1, keepdims=True))
    lab_onehot = (ciota == label_ref[...]).astype(jnp.float32)
    picked = jnp.sum(logits * lab_onehot, axis=-1, keepdims=True)
    nll = lse - picked                                      # (B, 1)
    loss_ref[...] = jnp.sum(nll, axis=0, keepdims=True) / nll.shape[0]


# ---------------- wrapper ------------------------------------------------------
@jax.jit
def parser_model_forward(params, input_ids, attention_mask, token_type_ids, intent_label):
    B, S = input_ids.shape
    BS = B * S

    # RoBERTa position ids (tiny integer glue; everything heavy is in the kernel).
    pos_ids = (jnp.cumsum(attention_mask, axis=1) * attention_mask).astype(jnp.int32) + PAD_IDX
    ids_all = jnp.stack([input_ids.reshape(-1).astype(jnp.int32),
                         pos_ids.reshape(-1),
                         token_type_ids.reshape(-1).astype(jnp.int32)], axis=1)   # (BS, 3)
    mask_f = attention_mask.astype(jnp.float32)                                    # (B, S)
    label = intent_label.astype(jnp.int32).reshape(B, 1)                           # (B, 1)

    kern = functools.partial(fused_parser_kernel, B=B, S=S, nh=N_HEADS,
                             n_layers=N_LAYERS, n_labels=NUM_INTENT_LABELS)
    args = (ids_all, mask_f, label,
            params['word_emb'], params['pos_emb'], params['type_emb'], params['emb_ln'],
            params['wqkv'], params['wo'], params['w1'], params['w2'],
            params['vec_h'], params['vec_i'],
            params['pool_w'], params['pool_b'], params['cls_w'], params['cls_b'])

    logits_pad, loss = pl.pallas_call(
        kern,
        out_shape=(jax.ShapeDtypeStruct((B, CLS_PAD), jnp.float32),
                   jax.ShapeDtypeStruct((1, 1), jnp.float32)),
        in_specs=[VSPEC] * len(args),
        out_specs=(VSPEC, VSPEC),
        scratch_shapes=[pltpu.VMEM((BS, HIDDEN), jnp.float32)],
    )(*args)

    return logits_pad[:, :NUM_INTENT_LABELS], loss[0, 0]


# ---------------- deterministic parameter init --------------------------------
def init_params(key):
    keys = iter(jax.random.split(key, 16))

    def w(shape):
        return (0.02 * jax.random.normal(next(keys), shape)).astype(jnp.bfloat16)

    # packed per-layer vector slab: rows = [bq, bk, bv, bo, b2, ln1_g, ln1_b, ln2_g, ln2_b]
    vec_h = jnp.zeros((N_LAYERS, 9, HIDDEN), jnp.float32)
    vec_h = vec_h.at[:, 5, :].set(1.0)    # ln1 gamma
    vec_h = vec_h.at[:, 7, :].set(1.0)    # ln2 gamma

    cls_w_full = jnp.zeros((HIDDEN, CLS_PAD), jnp.float32)
    cls_w_full = cls_w_full.at[:, :NUM_INTENT_LABELS].set(
        0.02 * jax.random.normal(next(keys), (HIDDEN, NUM_INTENT_LABELS)))

    return dict(
        word_emb=w((VOCAB, HIDDEN)),
        pos_emb=w((MAX_POS, HIDDEN)),
        type_emb=w((2, HIDDEN)),
        emb_ln=jnp.concatenate([jnp.ones((1, HIDDEN), jnp.float32),
                                jnp.zeros((1, HIDDEN), jnp.float32)], axis=0),
        wqkv=w((N_LAYERS, HIDDEN, 3 * HIDDEN)),
        wo=w((N_LAYERS, HIDDEN, HIDDEN)),
        w1=w((N_LAYERS, HIDDEN, INTERMEDIATE)),
        w2=w((N_LAYERS, INTERMEDIATE, HIDDEN)),
        vec_h=vec_h,
        vec_i=jnp.zeros((N_LAYERS, 1, INTERMEDIATE), jnp.float32),
        pool_w=w((HIDDEN, HIDDEN)),
        pool_b=jnp.zeros((1, HIDDEN), jnp.float32),
        cls_w=cls_w_full.astype(jnp.bfloat16),
        cls_b=jnp.zeros((1, CLS_PAD), jnp.float32),
    )


# ---------------- main ---------------------------------------------------------
if __name__ == "__main__":
    root = jax.random.PRNGKey(0)
    k_param, k_ids, k_lbl = jax.random.split(root, 3)

    params = init_params(k_param)

    input_ids = jax.random.randint(k_ids, (BATCH, SEQ), 3, VOCAB, dtype=jnp.int32)
    attention_mask = jnp.ones((BATCH, SEQ), dtype=jnp.int32)
    token_type_ids = jnp.zeros((BATCH, SEQ), dtype=jnp.int32)
    intent_label = jax.random.randint(k_lbl, (BATCH,), 0, NUM_INTENT_LABELS, dtype=jnp.int32)

    logits, loss = parser_model_forward(params, input_ids, attention_mask,
                                        token_type_ids, intent_label)
    jax.block_until_ready((logits, loss))

    assert logits.shape == (BATCH, NUM_INTENT_LABELS)
    assert bool(jnp.isfinite(loss))
    print("KERNEL_OK")
</pallas_src>

<mosaic_0001>
module attributes {stable_mosaic.version = 11 : i64} {
  func.func @fused_parser_kernel(%arg0: memref<16x3xi32, #tpu.memory_space<vmem>>, %arg1: memref<2x8xf32, #tpu.memory_space<vmem>>, %arg2: memref<2x1xi32, #tpu.memory_space<vmem>>, %arg3: memref<100x32xbf16, #tpu.memory_space<vmem>>, %arg4: memref<16x32xbf16, #tpu.memory_space<vmem>>, %arg5: memref<2x32xbf16, #tpu.memory_space<vmem>>, %arg6: memref<2x32xf32, #tpu.memory_space<vmem>>, %arg7: memref<2x32x96xbf16, #tpu.memory_space<vmem>>, %arg8: memref<2x32x32xbf16, #tpu.memory_space<vmem>>, %arg9: memref<2x32x64xbf16, #tpu.memory_space<vmem>>, %arg10: memref<2x64x32xbf16, #tpu.memory_space<vmem>>, %arg11: memref<2x9x32xf32, #tpu.memory_space<vmem>>, %arg12: memref<2x1x64xf32, #tpu.memory_space<vmem>>, %arg13: memref<32x32xbf16, #tpu.memory_space<vmem>>, %arg14: memref<1x32xf32, #tpu.memory_space<vmem>>, %arg15: memref<32x128xbf16, #tpu.memory_space<vmem>>, %arg16: memref<1x128xf32, #tpu.memory_space<vmem>>, %arg17: memref<2x128xf32, #tpu.memory_space<vmem>>, %arg18: memref<1x1xf32, #tpu.memory_space<vmem>>, %arg19: memref<16x32xf32, #tpu.memory_space<vmem>>) attributes {dimension_semantics = [], scalar_prefetch = 0 : i64, scratch_operands = 1 : i64, tpu.core_type = #tpu.core_type<tc>} {
    %c0 = arith.constant 0 : index
    %c0_0 = arith.constant 0 : index
    %0 = vector.load %arg0[%c0, %c0_0] : memref<16x3xi32, #tpu.memory_space<vmem>>, vector<16x3xi32>
    %1 = tpu.iota {dimensions = array<i32: 1>} : vector<16x100xi32>
    %2 = vector.extract_strided_slice %0 {offsets = [0, 0], sizes = [16, 1], strides = [1, 1]} : vector<16x3xi32> to vector<16x1xi32>
    %3 = vector.broadcast %2 : vector<16x1xi32> to vector<16x100xi32>
    %4 = arith.cmpi eq, %1, %3 : vector<16x100xi32>
    %5 = arith.extui %4 : vector<16x100xi1> to vector<16x100xi32>
    %6 = arith.sitofp %5 : vector<16x100xi32> to vector<16x100xf32>
    %7 = arith.truncf %6 : vector<16x100xf32> to vector<16x100xbf16>
    %c0_1 = arith.constant 0 : index
    %c0_2 = arith.constant 0 : index
    %8 = vector.load %arg3[%c0_1, %c0_2] : memref<100x32xbf16, #tpu.memory_space<vmem>>, vector<100x32xbf16>
    %cst = arith.constant dense<0.000000e+00> : vector<16x32xf32>
    %9 = tpu.matmul %7, %8, %cst {dimension_numbers = #tpu.dot_dimension_numbers<[1], [0], [0], [1], [0, 0, 1, 1], [], []>} : vector<16x100xbf16>, vector<100x32xbf16>, vector<16x32xf32> -> vector<16x32xf32>
    %10 = tpu.iota {dimensions = array<i32: 1>} : vector<16x16xi32>
    %11 = vector.extract_strided_slice %0 {offsets = [0, 1], sizes = [16, 1], strides = [1, 1]} : vector<16x3xi32> to vector<16x1xi32>
    %12 = vector.broadcast %11 : vector<16x1xi32> to vector<16x16xi32>
    %13 = arith.cmpi eq, %10, %12 : vector<16x16xi32>
    %14 = arith.extui %13 : vector<16x16xi1> to vector<16x16xi32>
    %15 = arith.sitofp %14 : vector<16x16xi32> to vector<16x16xf32>
    %16 = arith.truncf %15 : vector<16x16xf32> to vector<16x16xbf16>
    %c0_3 = arith.constant 0 : index
    %c0_4 = arith.constant 0 : index
    %17 = vector.load %arg4[%c0_3, %c0_4] : memref<16x32xbf16, #tpu.memory_space<vmem>>, vector<16x32xbf16>
    %cst_5 = arith.constant dense<0.000000e+00> : vector<16x32xf32>
    %18 = tpu.matmul %16, %17, %cst_5 {dimension_numbers = #tpu.dot_dimension_numbers<[1], [0], [0], [1], [0, 0, 1, 1], [], []>} : vector<16x16xbf16>, vector<16x32xbf16>, vector<16x32xf32> -> vector<16x32xf32>
    %19 = arith.addf %9, %18 : vector<16x32xf32>
    %20 = tpu.iota {dimensions = array<i32: 1>} : vector<16x2xi32>
    %21 = vector.extract_strided_slice %0 {offsets = [0, 2], sizes = [16, 1], strides = [1, 1]} : vector<16x3xi32> to vector<16x1xi32>
    %22 = vector.broadcast %21 : vector<16x1xi32> to vector<16x2xi32>
    %23 = arith.cmpi eq, %20, %22 : vector<16x2xi32>
    %24 = arith.extui %23 : vector<16x2xi1> to vector<16x2xi32>
    %25 = arith.sitofp %24 : vector<16x2xi32> to vector<16x2xf32>
    %26 = arith.truncf %25 : vector<16x2xf32> to vector<16x2xbf16>
    %c0_6 = arith.constant 0 : index
    %c0_7 = arith.constant 0 : index
    %27 = vector.load %arg5[%c0_6, %c0_7] : memref<2x32xbf16, #tpu.memory_space<vmem>>, vector<2x32xbf16>
    %cst_8 = arith.constant dense<0.000000e+00> : vector<16x32xf32>
    %28 = tpu.matmul %26, %27, %cst_8 {dimension_numbers = #tpu.dot_dimension_numbers<[1], [0], [0], [1], [0, 0, 1, 1], [], []>} : vector<16x2xbf16>, vector<2x32xbf16>, vector<16x32xf32> -> vector<16x32xf32>
    %29 = arith.addf %19, %28 : vector<16x32xf32>
    %c0_9 = arith.constant 0 : index
    %c0_10 = arith.constant 0 : index
    %30 = vector.load %arg6[%c0_9, %c0_10] : memref<2x32xf32, #tpu.memory_space<vmem>>, vector<1x32xf32>
    %c1 = arith.constant 1 : index
    %c0_11 = arith.constant 0 : index
    %31 = vector.load %arg6[%c1, %c0_11] : memref<2x32xf32, #tpu.memory_space<vmem>>, vector<1x32xf32>
    %cst_12 = arith.constant dense<0.000000e+00> : vector<16xf32>
    %32 = vector.multi_reduction <add>, %29, %cst_12 [1] : vector<16x32xf32> to vector<16xf32>
    %33 = vector.shape_cast %32 : vector<16xf32> to vector<16x1xf32>
    %cst_13 = arith.constant 3.200000e+01 : f32
    %34 = vector.broadcast %cst_13 : f32 to vector<16x1xf32>
    %35 = arith.divf %33, %34 : vector<16x1xf32>
    %36 = vector.broadcast %35 : vector<16x1xf32> to vector<16x32xf32>
    %37 = arith.subf %29, %36 : vector<16x32xf32>
    %38 = arith.mulf %37, %37 : vector<16x32xf32>
    %cst_14 = arith.constant dense<0.000000e+00> : vector<16xf32>
    %39 = vector.multi_reduction <add>, %38, %cst_14 [1] : vector<16x32xf32> to vector<16xf32>
    %40 = vector.shape_cast %39 : vector<16xf32> to vector<16x1xf32>
    %cst_15 = arith.constant 3.200000e+01 : f32
    %41 = vector.broadcast %cst_15 : f32 to vector<16x1xf32>
    %42 = arith.divf %40, %41 : vector<16x1xf32>
    %43 = vector.broadcast %35 : vector<16x1xf32> to vector<16x32xf32>
    %44 = arith.subf %29, %43 : vector<16x32xf32>
    %cst_16 = arith.constant 9.99999974E-6 : f32
    %45 = vector.broadcast %cst_16 : f32 to vector<16x1xf32>
    %46 = arith.addf %42, %45 : vector<16x1xf32>
    %47 = math.rsqrt %46 : vector<16x1xf32>
    %48 = vector.broadcast %47 : vector<16x1xf32> to vector<16x32xf32>
    %49 = arith.mulf %44, %48 : vector<16x32xf32>
    %50 = vector.broadcast %30 : vector<1x32xf32> to vector<16x32xf32>
    %51 = arith.mulf %49, %50 : vector<16x32xf32>
    %52 = vector.broadcast %31 : vector<1x32xf32> to vector<16x32xf32>
    %53 = arith.addf %51, %52 : vector<16x32xf32>
    %c0_17 = arith.constant 0 : index
    %c0_18 = arith.constant 0 : index
    %54 = vector.load %arg1[%c0_17, %c0_18] : memref<2x8xf32, #tpu.memory_space<vmem>>, vector<2x8xf32>
    %cst_19 = arith.constant 1.000000e+00 : f32
    %55 = vector.broadcast %cst_19 : f32 to vector<2x8xf32>
    %56 = arith.subf %55, %54 : vector<2x8xf32>
    %cst_20 = arith.constant -1.000000e+09 : f32
    %57 = vector.broadcast %cst_20 : f32 to vector<2x8xf32>
    %58 = arith.mulf %56, %57 : vector<2x8xf32>
    %c0_21 = arith.constant 0 : index
    %c0_22 = arith.constant 0 : index
    %c0_23 = arith.constant 0 : index
    %59 = vector.load %arg11[%c0_21, %c0_22, %c0_23] : memref<2x9x32xf32, #tpu.memory_space<vmem>>, vector<1x9x32xf32>
    %60 = vector.shape_cast %59 : vector<1x9x32xf32> to vector<9x32xf32>
    %61 = arith.truncf %53 : vector<16x32xf32> to vector<16x32xbf16>
    %c0_24 = arith.constant 0 : index
    %c0_25 = arith.constant 0 : index
    %c0_26 = arith.constant 0 : index
    %62 = vector.load %arg7[%c0_24, %c0_25, %c0_26] : memref<2x32x96xbf16, #tpu.memory_space<vmem>>, vector<1x32x96xbf16>
    %63 = vector.shape_cast %62 : vector<1x32x96xbf16> to vector<32x96xbf16>
    %cst_27 = arith.constant dense<0.000000e+00> : vector<16x96xf32>
    %64 = tpu.matmul %61, %63, %cst_27 {dimension_numbers = #tpu.dot_dimension_numbers<[1], [0], [0], [1], [0, 0, 1, 1], [], []>} : vector<16x32xbf16>, vector<32x96xbf16>, vector<16x96xf32> -> vector<16x96xf32>
    %65 = vector.extract_strided_slice %64 {offsets = [0, 0], sizes = [16, 32], strides = [1, 1]} : vector<16x96xf32> to vector<16x32xf32>
    %66 = vector.extract_strided_slice %60 {offsets = [0, 0], sizes = [1, 32], strides = [1, 1]} : vector<9x32xf32> to vector<1x32xf32>
    %67 = vector.broadcast %66 : vector<1x32xf32> to vector<16x32xf32>
    %68 = arith.addf %65, %67 : vector<16x32xf32>
    %69 = vector.extract_strided_slice %64 {offsets = [0, 32], sizes = [16, 32], strides = [1, 1]} : vector<16x96xf32> to vector<16x32xf32>
    %70 = vector.extract_strided_slice %60 {offsets = [1, 0], sizes = [1, 32], strides = [1, 1]} : vector<9x32xf32> to vector<1x32xf32>
    %71 = vector.broadcast %70 : vector<1x32xf32> to vector<16x32xf32>
    %72 = arith.addf %69, %71 : vector<16x32xf32>
    %73 = vector.extract_strided_slice %64 {offsets = [0, 64], sizes = [16, 32], strides = [1, 1]} : vector<16x96xf32> to vector<16x32xf32>
    %74 = vector.extract_strided_slice %60 {offsets = [2, 0], sizes = [1, 32], strides = [1, 1]} : vector<9x32xf32> to vector<1x32xf32>
    %75 = vector.broadcast %74 : vector<1x32xf32> to vector<16x32xf32>
    %76 = arith.addf %73, %75 : vector<16x32xf32>
    %77 = vector.extract_strided_slice %58 {offsets = [0, 0], sizes = [1, 8], strides = [1, 1]} : vector<2x8xf32> to vector<1x8xf32>
    %78 = vector.extract_strided_slice %68 {offsets = [0, 0], sizes = [8, 8], strides = [1, 1]} : vector<16x32xf32> to vector<8x8xf32>
    %79 = vector.extract_strided_slice %72 {offsets = [0, 0], sizes = [8, 8], strides = [1, 1]} : vector<16x32xf32> to vector<8x8xf32>
    %80 = vector.extract_strided_slice %76 {offsets = [0, 0], sizes = [8, 8], strides = [1, 1]} : vector<16x32xf32> to vector<8x8xf32>
    %cst_28 = arith.constant dense<0.000000e+00> : vector<8x8xf32>
    %81 = tpu.matmul %78, %79, %cst_28 {dimension_numbers = #tpu.dot_dimension_numbers<[1], [1], [0], [0], [0, 0, 1, 0], [], []>} : vector<8x8xf32>, vector<8x8xf32>, vector<8x8xf32> -> vector<8x8xf32>
    %cst_29 = arith.constant 0.353553385 : f32
    %82 = vector.broadcast %cst_29 : f32 to vector<8x8xf32>
    %83 = arith.mulf %81, %82 : vector<8x8xf32>
    %84 = vector.broadcast %77 : vector<1x8xf32> to vector<8x8xf32>
    %85 = arith.addf %83, %84 : vector<8x8xf32>
    %cst_30 = arith.constant dense<0xFF800000> : vector<8xf32>
    %86 = vector.multi_reduction <maximumf>, %85, %cst_30 [1] : vector<8x8xf32> to vector<8xf32>
    %87 = vector.shape_cast %86 : vector<8xf32> to vector<8x1xf32>
    %88 = vector.broadcast %87 : vector<8x1xf32> to vector<8x8xf32>
    %89 = arith.subf %85, %88 : vector<8x8xf32>
    %90 = math.exp %89 : vector<8x8xf32>
    %cst_31 = arith.constant dense<0.000000e+00> : vector<8xf32>
    %91 = vector.multi_reduction <add>, %90, %cst_31 [1] : vector<8x8xf32> to vector<8xf32>
    %92 = vector.shape_cast %91 : vector<8xf32> to vector<8x1xf32>
    %93 = tpu.reciprocal %92 {approx = true} : vector<8x1xf32> -> vector<8x1xf32>
    %94 = vector.broadcast %93 : vector<8x1xf32> to vector<8x8xf32>
    %95 = arith.mulf %90, %94 : vector<8x8xf32>
    %cst_32 = arith.constant dense<0.000000e+00> : vector<8x8xf32>
    %96 = tpu.matmul %95, %80, %cst_32 {dimension_numbers = #tpu.dot_dimension_numbers<[1], [0], [0], [1], [0, 0, 1, 1], [], []>} : vector<8x8xf32>, vector<8x8xf32>, vector<8x8xf32> -> vector<8x8xf32>
    %c0_33 = arith.constant 0 : index
    %c0_34 = arith.constant 0 : index
    %97 = vector.load %arg19[%c0_33, %c0_34] : memref<16x32xf32, #tpu.memory_space<vmem>>, vector<8x8xf32>
    tpu.vector_store %arg19[%c0_33, %c0_34], %96 {strides = array<i32>} : memref<16x32xf32, #tpu.memory_space<vmem>>, vector<8x8xf32>,
    %98 = vector.extract_strided_slice %68 {offsets = [0, 8], sizes = [8, 8], strides = [1, 1]} : vector<16x32xf32> to vector<8x8xf32>
    %99 = vector.extract_strided_slice %72 {offsets = [0, 8], sizes = [8, 8], strides = [1, 1]} : vector<16x32xf32> to vector<8x8xf32>
    %100 = vector.extract_strided_slice %76 {offsets = [0, 8], sizes = [8, 8], strides = [1, 1]} : vector<16x32xf32> to vector<8x8xf32>
    %cst_35 = arith.constant dense<0.000000e+00> : vector<8x8xf32>
    %101 = tpu.matmul %98, %99, %cst_35 {dimension_numbers = #tpu.dot_dimension_numbers<[1], [1], [0], [0], [0, 0, 1, 0], [], []>} : vector<8x8xf32>, vector<8x8xf32>, vector<8x8xf32> -> vector<8x8xf32>
    %cst_36 = arith.constant 0.353553385 : f32
    %102 = vector.broadcast %cst_36 : f32 to vector<8x8xf32>
    %103 = arith.mulf %101, %102 : vector<8x8xf32>
    %104 = vector.broadcast %77 : vector<1x8xf32> to vector<8x8xf32>
    %105 = arith.addf %103, %104 : vector<8x8xf32>
    %cst_37 = arith.constant dense<0xFF800000> : vector<8xf32>
    %106 = vector.multi_reduction <maximumf>, %105, %cst_37 [1] : vector<8x8xf32> to vector<8xf32>
    %107 = vector.shape_cast %106 : vector<8xf32> to vector<8x1xf32>
    %108 = vector.broadcast %107 : vector<8x1xf32> to vector<8x8xf32>
    %109 = arith.subf %105, %108 : vector<8x8xf32>
    %110 = math.exp %109 : vector<8x8xf32>
    %cst_38 = arith.constant dense<0.000000e+00> : vector<8xf32>
    %111 = vector.multi_reduction <add>, %110, %cst_38 [1] : vector<8x8xf32> to vector<8xf32>
    %112 = vector.shape_cast %111 : vector<8xf32> to vector<8x1xf32>
    %113 = tpu.reciprocal %112 {approx = true} : vector<8x1xf32> -> vector<8x1xf32>
    %114 = vector.broadcast %113 : vector<8x1xf32> to vector<8x8xf32>
    %115 = arith.mulf %110, %114 : vector<8x8xf32>
    %cst_39 = arith.constant dense<0.000000e+00> : vector<8x8xf32>
    %116 = tpu.matmul %115, %100, %cst_39 {dimension_numbers = #tpu.dot_dimension_numbers<[1], [0], [0], [1], [0, 0, 1, 1], [], []>} : vector<8x8xf32>, vector<8x8xf32>, vector<8x8xf32> -> vector<8x8xf32>
    %c0_40 = arith.constant 0 : index
    %c8 = arith.constant 8 : index
    %117 = vector.load %arg19[%c0_40, %c8] : memref<16x32xf32, #tpu.memory_space<vmem>>, vector<8x8xf32>
    tpu.vector_store %arg19[%c0_40, %c8], %116 {strides = array<i32>} : memref<16x32xf32, #tpu.memory_space<vmem>>, vector<8x8xf32>,
    %118 = vector.extract_strided_slice %68 {offsets = [0, 16], sizes = [8, 8], strides = [1, 1]} : vector<16x32xf32> to vector<8x8xf32>
    %119 = vector.extract_strided_slice %72 {offsets = [0, 16], sizes = [8, 8], strides = [1, 1]} : vector<16x32xf32> to vector<8x8xf32>
    %120 = vector.extract_strided_slice %76 {offsets = [0, 16], sizes = [8, 8], strides = [1, 1]} : vector<16x32xf32> to vector<8x8xf32>
    %cst_41 = arith.constant dense<0.000000e+00> : vector<8x8xf32>
    %121 = tpu.matmul %118, %119, %cst_41 {dimension_numbers = #tpu.dot_dimension_numbers<[1], [1], [0], [0], [0, 0, 1, 0], [], []>} : vector<8x8xf32>, vector<8x8xf32>, vector<8x8xf32> -> vector<8x8xf32>
    %cst_42 = arith.constant 0.353553385 : f32
    %122 = vector.broadcast %cst_42 : f32 to vector<8x8xf32>
    %123 = arith.mulf %121, %122 : vector<8x8xf32>
    %124 = vector.broadcast %77 : vector<1x8xf32> to vector<8x8xf32>
    %125 = arith.addf %123, %124 : vector<8x8xf32>
    %cst_43 = arith.constant dense<0xFF800000> : vector<8xf32>
    %126 = vector.multi_reduction <maximumf>, %125, %cst_43 [1] : vector<8x8xf32> to vector<8xf32>
    %127 = vector.shape_cast %126 : vector<8xf32> to vector<8x1xf32>
    %128 = vector.broadcast %127 : vector<8x1xf32> to vector<8x8xf32>
    %129 = arith.subf %125, %128 : vector<8x8xf32>
    %130 = math.exp %129 : vector<8x8xf32>
    %cst_44 = arith.constant dense<0.000000e+00> : vector<8xf32>
    %131 = vector.multi_reduction <add>, %130, %cst_44 [1] : vector<8x8xf32> to vector<8xf32>
    %132 = vector.shape_cast %131 : vector<8xf32> to vector<8x1xf32>
    %133 = tpu.reciprocal %132 {approx = true} : vector<8x1xf32> -> vector<8x1xf32>
    %134 = vector.broadcast %133 : vector<8x1xf32> to vector<8x8xf32>
    %135 = arith.mulf %130, %134 : vector<8x8xf32>
    %cst_45 = arith.constant dense<0.000000e+00> : vector<8x8xf32>
    %136 = tpu.matmul %135, %120, %cst_45 {dimension_numbers = #tpu.dot_dimension_numbers<[1], [0], [0], [1], [0, 0, 1, 1], [], []>} : vector<8x8xf32>, vector<8x8xf32>, vector<8x8xf32> -> vector<8x8xf32>
    %c0_46 = arith.constant 0 : index
    %c16 = arith.constant 16 : index
    %137 = vector.load %arg19[%c0_46, %c16] : memref<16x32xf32, #tpu.memory_space<vmem>>, vector<8x8xf32>
    tpu.vector_store %arg19[%c0_46, %c16], %136 {strides = array<i32>} : memref<16x32xf32, #tpu.memory_space<vmem>>, vector<8x8xf32>,
    %138 = vector.extract_strided_slice %68 {offsets = [0, 24], sizes = [8, 8], strides = [1, 1]} : vector<16x32xf32> to vector<8x8xf32>
    %139 = vector.extract_strided_slice %72 {offsets = [0, 24], sizes = [8, 8], strides = [1, 1]} : vector<16x32xf32> to vector<8x8xf32>
    %140 = vector.extract_strided_slice %76 {offsets = [0, 24], sizes = [8, 8], strides = [1, 1]} : vector<16x32xf32> to vector<8x8xf32>
    %cst_47 = arith.constant dense<0.000000e+00> : vector<8x8xf32>
    %141 = tpu.matmul %138, %139, %cst_47 {dimension_numbers = #tpu.dot_dimension_numbers<[1], [1], [0], [0], [0, 0, 1, 0], [], []>} : vector<8x8xf32>, vector<8x8xf32>, vector<8x8xf32> -> vector<8x8xf32>
    %cst_48 = arith.constant 0.353553385 : f32
    %142 = vector.broadcast %cst_48 : f32 to vector<8x8xf32>
    %143 = arith.mulf %141, %142 : vector<8x8xf32>
    %144 = vector.broadcast %77 : vector<1x8xf32> to vector<8x8xf32>
    %145 = arith.addf %143, %144 : vector<8x8xf32>
    %cst_49 = arith.constant dense<0xFF800000> : vector<8xf32>
    %146 = vector.multi_reduction <maximumf>, %145, %cst_49 [1] : vector<8x8xf32> to vector<8xf32>
    %147 = vector.shape_cast %146 : vector<8xf32> to vector<8x1xf32>
    %148 = vector.broadcast %147 : vector<8x1xf32> to vector<8x8xf32>
    %149 = arith.subf %145, %148 : vector<8x8xf32>
    %150 = math.exp %149 : vector<8x8xf32>
    %cst_50 = arith.constant dense<0.000000e+00> : vector<8xf32>
    %151 = vector.multi_reduction <add>, %150, %cst_50 [1] : vector<8x8xf32> to vector<8xf32>
    %152 = vector.shape_cast %151 : vector<8xf32> to vector<8x1xf32>
    %153 = tpu.reciprocal %152 {approx = true} : vector<8x1xf32> -> vector<8x1xf32>
    %154 = vector.broadcast %153 : vector<8x1xf32> to vector<8x8xf32>
    %155 = arith.mulf %150, %154 : vector<8x8xf32>
    %cst_51 = arith.constant dense<0.000000e+00> : vector<8x8xf32>
    %156 = tpu.matmul %155, %140, %cst_51 {dimension_numbers = #tpu.dot_dimension_numbers<[1], [0], [0], [1], [0, 0, 1, 1], [], []>} : vector<8x8xf32>, vector<8x8xf32>, vector<8x8xf32> -> vector<8x8xf32>
    %c0_52 = arith.constant 0 : index
    %c24 = arith.constant 24 : index
    %157 = vector.load %arg19[%c0_52, %c24] : memref<16x32xf32, #tpu.memory_space<vmem>>, vector<8x8xf32>
    tpu.vector_store %arg19[%c0_52, %c24], %156 {strides = array<i32>} : memref<16x32xf32, #tpu.memory_space<vmem>>, vector<8x8xf32>,
    %158 = vector.extract_strided_slice %58 {offsets = [1, 0], sizes = [1, 8], strides = [1, 1]} : vector<2x8xf32> to vector<1x8xf32>
    %159 = vector.extract_strided_slice %68 {offsets = [8, 0], sizes = [8, 8], strides = [1, 1]} : vector<16x32xf32> to vector<8x8xf32>
    %160 = vector.extract_strided_slice %72 {offsets = [8, 0], sizes = [8, 8], strides = [1, 1]} : vector<16x32xf32> to vector<8x8xf32>
    %161 = vector.extract_strided_slice %76 {offsets = [8, 0], sizes = [8, 8], strides = [1, 1]} : vector<16x32xf32> to vector<8x8xf32>
    %cst_53 = arith.constant dense<0.000000e+00> : vector<8x8xf32>
    %162 = tpu.matmul %159, %160, %cst_53 {dimension_numbers = #tpu.dot_dimension_numbers<[1], [1], [0], [0], [0, 0, 1, 0], [], []>} : vector<8x8xf32>, vector<8x8xf32>, vector<8x8xf32> -> vector<8x8xf32>
    %cst_54 = arith.constant 0.353553385 : f32
    %163 = vector.broadcast %cst_54 : f32 to vector<8x8xf32>
    %164 = arith.mulf %162, %163 : vector<8x8xf32>
    %165 = vector.broadcast %158 : vector<1x8xf32> to vector<8x8xf32>
    %166 = arith.addf %164, %165 : vector<8x8xf32>
    %cst_55 = arith.constant dense<0xFF800000> : vector<8xf32>
    %167 = vector.multi_reduction <maximumf>, %166, %cst_55 [1] : vector<8x8xf32> to vector<8xf32>
    %168 = vector.shape_cast %167 : vector<8xf32> to vector<8x1xf32>
    %169 = vector.broadcast %168 : vector<8x1xf32> to vector<8x8xf32>
    %170 = arith.subf %166, %169 : vector<8x8xf32>
    %171 = math.exp %170 : vector<8x8xf32>
    %cst_56 = arith.constant dense<0.000000e+00> : vector<8xf32>
    %172 = vector.multi_reduction <add>, %171, %cst_56 [1] : vector<8x8xf32> to vector<8xf32>
    %173 = vector.shape_cast %172 : vector<8xf32> to vector<8x1xf32>
    %174 = tpu.reciprocal %173 {approx = true} : vector<8x1xf32> -> vector<8x1xf32>
    %175 = vector.broadcast %174 : vector<8x1xf32> to vector<8x8xf32>
    %176 = arith.mulf %171, %175 : vector<8x8xf32>
    %cst_57 = arith.constant dense<0.000000e+00> : vector<8x8xf32>
    %177 = tpu.matmul %176, %161, %cst_57 {dimension_numbers = #tpu.dot_dimension_numbers<[1], [0], [0], [1], [0, 0, 1, 1], [], []>} : vector<8x8xf32>, vector<8x8xf32>, vector<8x8xf32> -> vector<8x8xf32>
    %c8_58 = arith.constant 8 : index
    %c0_59 = arith.constant 0 : index
    %178 = vector.load %arg19[%c8_58, %c0_59] : memref<16x32xf32, #tpu.memory_space<vmem>>, vector<8x8xf32>
    tpu.vector_store %arg19[%c8_58, %c0_59], %177 {strides = array<i32>} : memref<16x32xf32, #tpu.memory_space<vmem>>, vector<8x8xf32>,
    %179 = vector.extract_strided_slice %68 {offsets = [8, 8], sizes = [8, 8], strides = [1, 1]} : vector<16x32xf32> to vector<8x8xf32>
    %180 = vector.extract_strided_slice %72 {offsets = [8, 8], sizes = [8, 8], strides = [1, 1]} : vector<16x32xf32> to vector<8x8xf32>
    %181 = vector.extract_strided_slice %76 {offsets = [8, 8], sizes = [8, 8], strides = [1, 1]} : vector<16x32xf32> to vector<8x8xf32>
    %cst_60 = arith.constant dense<0.000000e+00> : vector<8x8xf32>
    %182 = tpu.matmul %179, %180, %cst_60 {dimension_numbers = #tpu.dot_dimension_numbers<[1], [1], [0], [0], [0, 0, 1, 0], [], []>} : vector<8x8xf32>, vector<8x8xf32>, vector<8x8xf32> -> vector<8x8xf32>
    %cst_61 = arith.constant 0.353553385 : f32
    %183 = vector.broadcast %cst_61 : f32 to vector<8x8xf32>
    %184 = arith.mulf %182, %183 : vector<8x8xf32>
    %185 = vector.broadcast %158 : vector<1x8xf32> to vector<8x8xf32>
    %186 = arith.addf %184, %185 : vector<8x8xf32>
    %cst_62 = arith.constant dense<0xFF800000> : vector<8xf32>
    %187 = vector.multi_reduction <maximumf>, %186, %cst_62 [1] : vector<8x8xf32> to vector<8xf32>
    %188 = vector.shape_cast %187 : vector<8xf32> to vector<8x1xf32>
    %189 = vector.broadcast %188 : vector<8x1xf32> to vector<8x8xf32>
    %190 = arith.subf %186, %189 : vector<8x8xf32>
    %191 = math.exp %190 : vector<8x8xf32>
    %cst_63 = arith.constant dense<0.000000e+00> : vector<8xf32>
    %192 = vector.multi_reduction <add>, %191, %cst_63 [1] : vector<8x8xf32> to vector<8xf32>
    %193 = vector.shape_cast %192 : vector<8xf32> to vector<8x1xf32>
    %194 = tpu.reciprocal %193 {approx = true} : vector<8x1xf32> -> vector<8x1xf32>
    %195 = vector.broadcast %194 : vector<8x1xf32> to vector<8x8xf32>
    %196 = arith.mulf %191, %195 : vector<8x8xf32>
    %cst_64 = arith.constant dense<0.000000e+00> : vector<8x8xf32>
    %197 = tpu.matmul %196, %181, %cst_64 {dimension_numbers = #tpu.dot_dimension_numbers<[1], [0], [0], [1], [0, 0, 1, 1], [], []>} : vector<8x8xf32>, vector<8x8xf32>, vector<8x8xf32> -> vector<8x8xf32>
    %c8_65 = arith.constant 8 : index
    %c8_66 = arith.constant 8 : index
    %198 = vector.load %arg19[%c8_65, %c8_66] : memref<16x32xf32, #tpu.memory_space<vmem>>, vector<8x8xf32>
    tpu.vector_store %arg19[%c8_65, %c8_66], %197 {strides = array<i32>} : memref<16x32xf32, #tpu.memory_space<vmem>>, vector<8x8xf32>,
    %199 = vector.extract_strided_slice %68 {offsets = [8, 16], sizes = [8, 8], strides = [1, 1]} : vector<16x32xf32> to vector<8x8xf32>
    %200 = vector.extract_strided_slice %72 {offsets = [8, 16], sizes = [8, 8], strides = [1, 1]} : vector<16x32xf32> to vector<8x8xf32>
    %201 = vector.extract_strided_slice %76 {offsets = [8, 16], sizes = [8, 8], strides = [1, 1]} : vector<16x32xf32> to vector<8x8xf32>
    %cst_67 = arith.constant dense<0.000000e+00> : vector<8x8xf32>
    %202 = tpu.matmul %199, %200, %cst_67 {dimension_numbers = #tpu.dot_dimension_numbers<[1], [1], [0], [0], [0, 0, 1, 0], [], []>} : vector<8x8xf32>, vector<8x8xf32>, vector<8x8xf32> -> vector<8x8xf32>
    %cst_68 = arith.constant 0.353553385 : f32
    %203 = vector.broadcast %cst_68 : f32 to vector<8x8xf32>
    %204 = arith.mulf %202, %203 : vector<8x8xf32>
    %205 = vector.broadcast %158 : vector<1x8xf32> to vector<8x8xf32>
    %206 = arith.addf %204, %205 : vector<8x8xf32>
    %cst_69 = arith.constant dense<0xFF800000> : vector<8xf32>
    %207 = vector.multi_reduction <maximumf>, %206, %cst_69 [1] : vector<8x8xf32> to vector<8xf32>
    %208 = vector.shape_cast %207 : vector<8xf32> to vector<8x1xf32>
    %209 = vector.broadcast %208 : vector<8x1xf32> to vector<8x8xf32>
    %210 = arith.subf %206, %209 : vector<8x8xf32>
    %211 = math.exp %210 : vector<8x8xf32>
    %cst_70 = arith.constant dense<0.000000e+00> : vector<8xf32>
    %212 = vector.multi_reduction <add>, %211, %cst_70 [1] : vector<8x8xf32> to vector<8xf32>
    %213 = vector.shape_cast %212 : vector<8xf32> to vector<8x1xf32>
    %214 = tpu.reciprocal %213 {approx = true} : vector<8x1xf32> -> vector<8x1xf32>
    %215 = vector.broadcast %214 : vector<8x1xf32> to vector<8x8xf32>
    %216 = arith.mulf %211, %215 : vector<8x8xf32>
    %cst_71 = arith.constant dense<0.000000e+00> : vector<8x8xf32>
    %217 = tpu.matmul %216, %201, %cst_71 {dimension_numbers = #tpu.dot_dimension_numbers<[1], [0], [0], [1], [0, 0, 1, 1], [], []>} : vector<8x8xf32>, vector<8x8xf32>, vector<8x8xf32> -> vector<8x8xf32>
    %c8_72 = arith.constant 8 : index
    %c16_73 = arith.constant 16 : index
    %218 = vector.load %arg19[%c8_72, %c16_73] : memref<16x32xf32, #tpu.memory_space<vmem>>, vector<8x8xf32>
    tpu.vector_store %arg19[%c8_72, %c16_73], %217 {strides = array<i32>} : memref<16x32xf32, #tpu.memory_space<vmem>>, vector<8x8xf32>,
    %219 = vector.extract_strided_slice %68 {offsets = [8, 24], sizes = [8, 8], strides = [1, 1]} : vector<16x32xf32> to vector<8x8xf32>
    %220 = vector.extract_strided_slice %72 {offsets = [8, 24], sizes = [8, 8], strides = [1, 1]} : vector<16x32xf32> to vector<8x8xf32>
    %221 = vector.extract_strided_slice %76 {offsets = [8, 24], sizes = [8, 8], strides = [1, 1]} : vector<16x32xf32> to vector<8x8xf32>
    %cst_74 = arith.constant dense<0.000000e+00> : vector<8x8xf32>
    %222 = tpu.matmul %219, %220, %cst_74 {dimension_numbers = #tpu.dot_dimension_numbers<[1], [1], [0], [0], [0, 0, 1, 0], [], []>} : vector<8x8xf32>, vector<8x8xf32>, vector<8x8xf32> -> vector<8x8xf32>
    %cst_75 = arith.constant 0.353553385 : f32
    %223 = vector.broadcast %cst_75 : f32 to vector<8x8xf32>
    %224 = arith.mulf %222, %223 : vector<8x8xf32>
    %225 = vector.broadcast %158 : vector<1x8xf32> to vector<8x8xf32>
    %226 = arith.addf %224, %225 : vector<8x8xf32>
    %cst_76 = arith.constant dense<0xFF800000> : vector<8xf32>
    %227 = vector.multi_reduction <maximumf>, %226, %cst_76 [1] : vector<8x8xf32> to vector<8xf32>
    %228 = vector.shape_cast %227 : vector<8xf32> to vector<8x1xf32>
    %229 = vector.broadcast %228 : vector<8x1xf32> to vector<8x8xf32>
    %230 = arith.subf %226, %229 : vector<8x8xf32>
    %231 = math.exp %230 : vector<8x8xf32>
    %cst_77 = arith.constant dense<0.000000e+00> : vector<8xf32>
    %232 = vector.multi_reduction <add>, %231, %cst_77 [1] : vector<8x8xf32> to vector<8xf32>
    %233 = vector.shape_cast %232 : vector<8xf32> to vector<8x1xf32>
    %234 = tpu.reciprocal %233 {approx = true} : vector<8x1xf32> -> vector<8x1xf32>
    %235 = vector.broadcast %234 : vector<8x1xf32> to vector<8x8xf32>
    %236 = arith.mulf %231, %235 : vector<8x8xf32>
    %cst_78 = arith.constant dense<0.000000e+00> : vector<8x8xf32>
    %237 = tpu.matmul %236, %221, %cst_78 {dimension_numbers = #tpu.dot_dimension_numbers<[1], [0], [0], [1], [0, 0, 1, 1], [], []>} : vector<8x8xf32>, vector<8x8xf32>, vector<8x8xf32> -> vector<8x8xf32>
    %c8_79 = arith.constant 8 : index
    %c24_80 = arith.constant 24 : index
    %238 = vector.load %arg19[%c8_79, %c24_80] : memref<16x32xf32, #tpu.memory_space<vmem>>, vector<8x8xf32>
    tpu.vector_store %arg19[%c8_79, %c24_80], %237 {strides = array<i32>} : memref<16x32xf32, #tpu.memory_space<vmem>>, vector<8x8xf32>,
    %c0_81 = arith.constant 0 : index
    %c0_82 = arith.constant 0 : index
    %239 = vector.load %arg19[%c0_81, %c0_82] : memref<16x32xf32, #tpu.memory_space<vmem>>, vector<16x32xf32>
    %240 = arith.truncf %239 : vector<16x32xf32> to vector<16x32xbf16>
    %c0_83 = arith.constant 0 : index
    %c0_84 = arith.constant 0 : index
    %c0_85 = arith.constant 0 : index
    %241 = vector.load %arg8[%c0_83, %c0_84, %c0_85] : memref<2x32x32xbf16, #tpu.memory_space<vmem>>, vector<1x32x32xbf16>
    %242 = vector.shape_cast %241 : vector<1x32x32xbf16> to vector<32x32xbf16>
    %cst_86 = arith.constant dense<0.000000e+00> : vector<16x32xf32>
    %243 = tpu.matmul %240, %242, %cst_86 {dimension_numbers = #tpu.dot_dimension_numbers<[1], [0], [0], [1], [0, 0, 1, 1], [], []>} : vector<16x32xbf16>, vector<32x32xbf16>, vector<16x32xf32> -> vector<16x32xf32>
    %244 = vector.extract_strided_slice %60 {offsets = [3, 0], sizes = [1, 32], strides = [1, 1]} : vector<9x32xf32> to vector<1x32xf32>
    %245 = vector.broadcast %244 : vector<1x32xf32> to vector<16x32xf32>
    %246 = arith.addf %243, %245 : vector<16x32xf32>
    %247 = arith.addf %53, %246 : vector<16x32xf32>
    %248 = vector.extract_strided_slice %60 {offsets = [5, 0], sizes = [1, 32], strides = [1, 1]} : vector<9x32xf32> to vector<1x32xf32>
    %249 = vector.extract_strided_slice %60 {offsets = [6, 0], sizes = [1, 32], strides = [1, 1]} : vector<9x32xf32> to vector<1x32xf32>
    %cst_87 = arith.constant dense<0.000000e+00> : vector<16xf32>
    %250 = vector.multi_reduction <add>, %247, %cst_87 [1] : vector<16x32xf32> to vector<16xf32>
    %251 = vector.shape_cast %250 : vector<16xf32> to vector<16x1xf32>
    %cst_88 = arith.constant 3.200000e+01 : f32
    %252 = vector.broadcast %cst_88 : f32 to vector<16x1xf32>
    %253 = arith.divf %251, %252 : vector<16x1xf32>
    %254 = vector.broadcast %253 : vector<16x1xf32> to vector<16x32xf32>
    %255 = arith.subf %247, %254 : vector<16x32xf32>
    %256 = arith.mulf %255, %255 : vector<16x32xf32>
    %cst_89 = arith.constant dense<0.000000e+00> : vector<16xf32>
    %257 = vector.multi_reduction <add>, %256, %cst_89 [1] : vector<16x32xf32> to vector<16xf32>
    %258 = vector.shape_cast %257 : vector<16xf32> to vector<16x1xf32>
    %cst_90 = arith.constant 3.200000e+01 : f32
    %259 = vector.broadcast %cst_90 : f32 to vector<16x1xf32>
    %260 = arith.divf %258, %259 : vector<16x1xf32>
    %261 = vector.broadcast %253 : vector<16x1xf32> to vector<16x32xf32>
    %262 = arith.subf %247, %261 : vector<16x32xf32>
    %cst_91 = arith.constant 9.99999974E-6 : f32
    %263 = vector.broadcast %cst_91 : f32 to vector<16x1xf32>
    %264 = arith.addf %260, %263 : vector<16x1xf32>
    %265 = math.rsqrt %264 : vector<16x1xf32>
    %266 = vector.broadcast %265 : vector<16x1xf32> to vector<16x32xf32>
    %267 = arith.mulf %262, %266 : vector<16x32xf32>
    %268 = vector.broadcast %248 : vector<1x32xf32> to vector<16x32xf32>
    %269 = arith.mulf %267, %268 : vector<16x32xf32>
    %270 = vector.broadcast %249 : vector<1x32xf32> to vector<16x32xf32>
    %271 = arith.addf %269, %270 : vector<16x32xf32>
    %272 = arith.truncf %271 : vector<16x32xf32> to vector<16x32xbf16>
    %c0_92 = arith.constant 0 : index
    %c0_93 = arith.constant 0 : index
    %c0_94 = arith.constant 0 : index
    %273 = vector.load %arg9[%c0_92, %c0_93, %c0_94] : memref<2x32x64xbf16, #tpu.memory_space<vmem>>, vector<1x32x64xbf16>
    %274 = vector.shape_cast %273 : vector<1x32x64xbf16> to vector<32x64xbf16>
    %cst_95 = arith.constant dense<0.000000e+00> : vector<16x64xf32>
    %275 = tpu.matmul %272, %274, %cst_95 {dimension_numbers = #tpu.dot_dimension_numbers<[1], [0], [0], [1], [0, 0, 1, 1], [], []>} : vector<16x32xbf16>, vector<32x64xbf16>, vector<16x64xf32> -> vector<16x64xf32>
    %c0_96 = arith.constant 0 : index
    %c0_97 = arith.constant 0 : index
    %c0_98 = arith.constant 0 : index
    %276 = vector.load %arg12[%c0_96, %c0_97, %c0_98] : memref<2x1x64xf32, #tpu.memory_space<vmem>>, vector<1x1x64xf32>
    %277 = vector.shape_cast %276 : vector<1x1x64xf32> to vector<1x64xf32>
    %278 = vector.broadcast %277 : vector<1x64xf32> to vector<16x64xf32>
    %279 = arith.addf %275, %278 : vector<16x64xf32>
    %cst_99 = arith.constant 5.000000e-01 : f32
    %280 = vector.broadcast %cst_99 : f32 to vector<16x64xf32>
    %281 = arith.mulf %280, %279 : vector<16x64xf32>
    %cst_100 = arith.constant 4.471500e-02 : f32
    %282 = vector.broadcast %cst_100 : f32 to vector<16x64xf32>
    %283 = arith.mulf %282, %279 : vector<16x64xf32>
    %284 = arith.mulf %283, %279 : vector<16x64xf32>
    %285 = arith.mulf %284, %279 : vector<16x64xf32>
    %286 = arith.addf %279, %285 : vector<16x64xf32>
    %cst_101 = arith.constant 0.797884583 : f32
    %287 = vector.broadcast %cst_101 : f32 to vector<16x64xf32>
    %288 = arith.mulf %287, %286 : vector<16x64xf32>
    %289 = math.tanh %288 : vector<16x64xf32>
    %cst_102 = arith.constant 1.000000e+00 : f32
    %290 = vector.broadcast %cst_102 : f32 to vector<16x64xf32>
    %291 = arith.addf %290, %289 : vector<16x64xf32>
    %292 = arith.mulf %281, %291 : vector<16x64xf32>
    %293 = arith.truncf %292 : vector<16x64xf32> to vector<16x64xbf16>
    %c0_103 = arith.constant 0 : index
    %c0_104 = arith.constant 0 : index
    %c0_105 = arith.constant 0 : index
    %294 = vector.load %arg10[%c0_103, %c0_104, %c0_105] : memref<2x64x32xbf16, #tpu.memory_space<vmem>>, vector<1x64x32xbf16>
    %295 = vector.shape_cast %294 : vector<1x64x32xbf16> to vector<64x32xbf16>
    %cst_106 = arith.constant dense<0.000000e+00> : vector<16x32xf32>
    %296 = tpu.matmul %293, %295, %cst_106 {dimension_numbers = #tpu.dot_dimension_numbers<[1], [0], [0], [1], [0, 0, 1, 1], [], []>} : vector<16x64xbf16>, vector<64x32xbf16>, vector<16x32xf32> -> vector<16x32xf32>
    %297 = vector.extract_strided_slice %60 {offsets = [4, 0], sizes = [1, 32], strides = [1, 1]} : vector<9x32xf32> to vector<1x32xf32>
    %298 = vector.broadcast %297 : vector<1x32xf32> to vector<16x32xf32>
    %299 = arith.addf %296, %298 : vector<16x32xf32>
    %300 = arith.addf %271, %299 : vector<16x32xf32>
    %301 = vector.extract_strided_slice %60 {offsets = [7, 0], sizes = [1, 32], strides = [1, 1]} : vector<9x32xf32> to vector<1x32xf32>
    %302 = vector.extract_strided_slice %60 {offsets = [8, 0], sizes = [1, 32], strides = [1, 1]} : vector<9x32xf32> to vector<1x32xf32>
    %cst_107 = arith.constant dense<0.000000e+00> : vector<16xf32>
    %303 = vector.multi_reduction <add>, %300, %cst_107 [1] : vector<16x32xf32> to vector<16xf32>
    %304 = vector.shape_cast %303 : vector<16xf32> to vector<16x1xf32>
    %cst_108 = arith.constant 3.200000e+01 : f32
    %305 = vector.broadcast %cst_108 : f32 to vector<16x1xf32>
    %306 = arith.divf %304, %305 : vector<16x1xf32>
    %307 = vector.broadcast %306 : vector<16x1xf32> to vector<16x32xf32>
    %308 = arith.subf %300, %307 : vector<16x32xf32>
    %309 = arith.mulf %308, %308 : vector<16x32xf32>
    %cst_109 = arith.constant dense<0.000000e+00> : vector<16xf32>
    %310 = vector.multi_reduction <add>, %309, %cst_109 [1] : vector<16x32xf32> to vector<16xf32>
    %311 = vector.shape_cast %310 : vector<16xf32> to vector<16x1xf32>
    %cst_110 = arith.constant 3.200000e+01 : f32
    %312 = vector.broadcast %cst_110 : f32 to vector<16x1xf32>
    %313 = arith.divf %311, %312 : vector<16x1xf32>
    %314 = vector.broadcast %306 : vector<16x1xf32> to vector<16x32xf32>
    %315 = arith.subf %300, %314 : vector<16x32xf32>
    %cst_111 = arith.constant 9.99999974E-6 : f32
    %316 = vector.broadcast %cst_111 : f32 to vector<16x1xf32>
    %317 = arith.addf %313, %316 : vector<16x1xf32>
    %318 = math.rsqrt %317 : vector<16x1xf32>
    %319 = vector.broadcast %318 : vector<16x1xf32> to vector<16x32xf32>
    %320 = arith.mulf %315, %319 : vector<16x32xf32>
    %321 = vector.broadcast %301 : vector<1x32xf32> to vector<16x32xf32>
    %322 = arith.mulf %320, %321 : vector<16x32xf32>
    %323 = vector.broadcast %302 : vector<1x32xf32> to vector<16x32xf32>
    %324 = arith.addf %322, %323 : vector<16x32xf32>
    %c1_112 = arith.constant 1 : index
    %c0_113 = arith.constant 0 : index
    %c0_114 = arith.constant 0 : index
    %325 = vector.load %arg11[%c1_112, %c0_113, %c0_114] : memref<2x9x32xf32, #tpu.memory_space<vmem>>, vector<1x9x32xf32>
    %326 = vector.shape_cast %325 : vector<1x9x32xf32> to vector<9x32xf32>
    %327 = arith.truncf %324 : vector<16x32xf32> to vector<16x32xbf16>
    %c1_115 = arith.constant 1 : index
    %c0_116 = arith.constant 0 : index
    %c0_117 = arith.constant 0 : index
    %328 = vector.load %arg7[%c1_115, %c0_116, %c0_117] : memref<2x32x96xbf16, #tpu.memory_space<vmem>>, vector<1x32x96xbf16>
    %329 = vector.shape_cast %328 : vector<1x32x96xbf16> to vector<32x96xbf16>
    %cst_118 = arith.constant dense<0.000000e+00> : vector<16x96xf32>
    %330 = tpu.matmul %327, %329, %cst_118 {dimension_numbers = #tpu.dot_dimension_numbers<[1], [0], [0], [1], [0, 0, 1, 1], [], []>} : vector<16x32xbf16>, vector<32x96xbf16>, vector<16x96xf32> -> vector<16x96xf32>
    %331 = vector.extract_strided_slice %330 {offsets = [0, 0], sizes = [16, 32], strides = [1, 1]} : vector<16x96xf32> to vector<16x32xf32>
    %332 = vector.extract_strided_slice %326 {offsets = [0, 0], sizes = [1, 32], strides = [1, 1]} : vector<9x32xf32> to vector<1x32xf32>
    %333 = vector.broadcast %332 : vector<1x32xf32> to vector<16x32xf32>
    %334 = arith.addf %331, %333 : vector<16x32xf32>
    %335 = vector.extract_strided_slice %330 {offsets = [0, 32], sizes = [16, 32], strides = [1, 1]} : vector<16x96xf32> to vector<16x32xf32>
    %336 = vector.extract_strided_slice %326 {offsets = [1, 0], sizes = [1, 32], strides = [1, 1]} : vector<9x32xf32> to vector<1x32xf32>
    %337 = vector.broadcast %336 : vector<1x32xf32> to vector<16x32xf32>
    %338 = arith.addf %335, %337 : vector<16x32xf32>
    %339 = vector.extract_strided_slice %330 {offsets = [0, 64], sizes = [16, 32], strides = [1, 1]} : vector<16x96xf32> to vector<16x32xf32>
    %340 = vector.extract_strided_slice %326 {offsets = [2, 0], sizes = [1, 32], strides = [1, 1]} : vector<9x32xf32> to vector<1x32xf32>
    %341 = vector.broadcast %340 : vector<1x32xf32> to vector<16x32xf32>
    %342 = arith.addf %339, %341 : vector<16x32xf32>
    %343 = vector.extract_strided_slice %58 {offsets = [0, 0], sizes = [1, 8], strides = [1, 1]} : vector<2x8xf32> to vector<1x8xf32>
    %344 = vector.extract_strided_slice %334 {offsets = [0, 0], sizes = [8, 8], strides = [1, 1]} : vector<16x32xf32> to vector<8x8xf32>
    %345 = vector.extract_strided_slice %338 {offsets = [0, 0], sizes = [8, 8], strides = [1, 1]} : vector<16x32xf32> to vector<8x8xf32>
    %346 = vector.extract_strided_slice %342 {offsets = [0, 0], sizes = [8, 8], strides = [1, 1]} : vector<16x32xf32> to vector<8x8xf32>
    %cst_119 = arith.constant dense<0.000000e+00> : vector<8x8xf32>
    %347 = tpu.matmul %344, %345, %cst_119 {dimension_numbers = #tpu.dot_dimension_numbers<[1], [1], [0], [0], [0, 0, 1, 0], [], []>} : vector<8x8xf32>, vector<8x8xf32>, vector<8x8xf32> -> vector<8x8xf32>
    %cst_120 = arith.constant 0.353553385 : f32
    %348 = vector.broadcast %cst_120 : f32 to vector<8x8xf32>
    %349 = arith.mulf %347, %348 : vector<8x8xf32>
    %350 = vector.broadcast %343 : vector<1x8xf32> to vector<8x8xf32>
    %351 = arith.addf %349, %350 : vector<8x8xf32>
    %cst_121 = arith.constant dense<0xFF800000> : vector<8xf32>
    %352 = vector.multi_reduction <maximumf>, %351, %cst_121 [1] : vector<8x8xf32> to vector<8xf32>
    %353 = vector.shape_cast %352 : vector<8xf32> to vector<8x1xf32>
    %354 = vector.broadcast %353 : vector<8x1xf32> to vector<8x8xf32>
    %355 = arith.subf %351, %354 : vector<8x8xf32>
    %356 = math.exp %355 : vector<8x8xf32>
    %cst_122 = arith.constant dense<0.000000e+00> : vector<8xf32>
    %357 = vector.multi_reduction <add>, %356, %cst_122 [1] : vector<8x8xf32> to vector<8xf32>
    %358 = vector.shape_cast %357 : vector<8xf32> to vector<8x1xf32>
    %359 = tpu.reciprocal %358 {approx = true} : vector<8x1xf32> -> vector<8x1xf32>
    %360 = vector.broadcast %359 : vector<8x1xf32> to vector<8x8xf32>
    %361 = arith.mulf %356, %360 : vector<8x8xf32>
    %cst_123 = arith.constant dense<0.000000e+00> : vector<8x8xf32>
    %362 = tpu.matmul %361, %346, %cst_123 {dimension_numbers = #tpu.dot_dimension_numbers<[1], [0], [0], [1], [0, 0, 1, 1], [], []>} : vector<8x8xf32>, vector<8x8xf32>, vector<8x8xf32> -> vector<8x8xf32>
    %c0_124 = arith.constant 0 : index
    %c0_125 = arith.constant 0 : index
    %363 = vector.load %arg19[%c0_124, %c0_125] : memref<16x32xf32, #tpu.memory_space<vmem>>, vector<8x8xf32>
    tpu.vector_store %arg19[%c0_124, %c0_125], %362 {strides = array<i32>} : memref<16x32xf32, #tpu.memory_space<vmem>>, vector<8x8xf32>,
    %364 = vector.extract_strided_slice %334 {offsets = [0, 8], sizes = [8, 8], strides = [1, 1]} : vector<16x32xf32> to vector<8x8xf32>
    %365 = vector.extract_strided_slice %338 {offsets = [0, 8], sizes = [8, 8], strides = [1, 1]} : vector<16x32xf32> to vector<8x8xf32>
    %366 = vector.extract_strided_slice %342 {offsets = [0, 8], sizes = [8, 8], strides = [1, 1]} : vector<16x32xf32> to vector<8x8xf32>
    %cst_126 = arith.constant dense<0.000000e+00> : vector<8x8xf32>
    %367 = tpu.matmul %364, %365, %cst_126 {dimension_numbers = #tpu.dot_dimension_numbers<[1], [1], [0], [0], [0, 0, 1, 0], [], []>} : vector<8x8xf32>, vector<8x8xf32>, vector<8x8xf32> -> vector<8x8xf32>
    %cst_127 = arith.constant 0.353553385 : f32
    %368 = vector.broadcast %cst_127 : f32 to vector<8x8xf32>
    %369 = arith.mulf %367, %368 : vector<8x8xf32>
    %370 = vector.broadcast %343 : vector<1x8xf32> to vector<8x8xf32>
    %371 = arith.addf %369, %370 : vector<8x8xf32>
    %cst_128 = arith.constant dense<0xFF800000> : vector<8xf32>
    %372 = vector.multi_reduction <maximumf>, %371, %cst_128 [1] : vector<8x8xf32> to vector<8xf32>
    %373 = vector.shape_cast %372 : vector<8xf32> to vector<8x1xf32>
    %374 = vector.broadcast %373 : vector<8x1xf32> to vector<8x8xf32>
    %375 = arith.subf %371, %374 : vector<8x8xf32>
    %376 = math.exp %375 : vector<8x8xf32>
    %cst_129 = arith.constant dense<0.000000e+00> : vector<8xf32>
    %377 = vector.multi_reduction <add>, %376, %cst_129 [1] : vector<8x8xf32> to vector<8xf32>
    %378 = vector.shape_cast %377 : vector<8xf32> to vector<8x1xf32>
    %379 = tpu.reciprocal %378 {approx = true} : vector<8x1xf32> -> vector<8x1xf32>
    %380 = vector.broadcast %379 : vector<8x1xf32> to vector<8x8xf32>
    %381 = arith.mulf %376, %380 : vector<8x8xf32>
    %cst_130 = arith.constant dense<0.000000e+00> : vector<8x8xf32>
    %382 = tpu.matmul %381, %366, %cst_130 {dimension_numbers = #tpu.dot_dimension_numbers<[1], [0], [0], [1], [0, 0, 1, 1], [], []>} : vector<8x8xf32>, vector<8x8xf32>, vector<8x8xf32> -> vector<8x8xf32>
    %c0_131 = arith.constant 0 : index
    %c8_132 = arith.constant 8 : index
    %383 = vector.load %arg19[%c0_131, %c8_132] : memref<16x32xf32, #tpu.memory_space<vmem>>, vector<8x8xf32>
    tpu.vector_store %arg19[%c0_131, %c8_132], %382 {strides = array<i32>} : memref<16x32xf32, #tpu.memory_space<vmem>>, vector<8x8xf32>,
    %384 = vector.extract_strided_slice %334 {offsets = [0, 16], sizes = [8, 8], strides = [1, 1]} : vector<16x32xf32> to vector<8x8xf32>
    %385 = vector.extract_strided_slice %338 {offsets = [0, 16], sizes = [8, 8], strides = [1, 1]} : vector<16x32xf32> to vector<8x8xf32>
    %386 = vector.extract_strided_slice %342 {offsets = [0, 16], sizes = [8, 8], strides = [1, 1]} : vector<16x32xf32> to vector<8x8xf32>
    %cst_133 = arith.constant dense<0.000000e+00> : vector<8x8xf32>
    %387 = tpu.matmul %384, %385, %cst_133 {dimension_numbers = #tpu.dot_dimension_numbers<[1], [1], [0], [0], [0, 0, 1, 0], [], []>} : vector<8x8xf32>, vector<8x8xf32>, vector<8x8xf32> -> vector<8x8xf32>
    %cst_134 = arith.constant 0.353553385 : f32
    %388 = vector.broadcast %cst_134 : f32 to vector<8x8xf32>
    %389 = arith.mulf %387, %388 : vector<8x8xf32>
    %390 = vector.broadcast %343 : vector<1x8xf32> to vector<8x8xf32>
    %391 = arith.addf %389, %390 : vector<8x8xf32>
    %cst_135 = arith.constant dense<0xFF800000> : vector<8xf32>
    %392 = vector.multi_reduction <maximumf>, %391, %cst_135 [1] : vector<8x8xf32> to vector<8xf32>
    %393 = vector.shape_cast %392 : vector<8xf32> to vector<8x1xf32>
    %394 = vector.broadcast %393 : vector<8x1xf32> to vector<8x8xf32>
    %395 = arith.subf %391, %394 : vector<8x8xf32>
    %396 = math.exp %395 : vector<8x8xf32>
    %cst_136 = arith.constant dense<0.000000e+00> : vector<8xf32>
    %397 = vector.multi_reduction <add>, %396, %cst_136 [1] : vector<8x8xf32> to vector<8xf32>
    %398 = vector.shape_cast %397 : vector<8xf32> to vector<8x1xf32>
    %399 = tpu.reciprocal %398 {approx = true} : vector<8x1xf32> -> vector<8x1xf32>
    %400 = vector.broadcast %399 : vector<8x1xf32> to vector<8x8xf32>
    %401 = arith.mulf %396, %400 : vector<8x8xf32>
    %cst_137 = arith.constant dense<0.000000e+00> : vector<8x8xf32>
    %402 = tpu.matmul %401, %386, %cst_137 {dimension_numbers = #tpu.dot_dimension_numbers<[1], [0], [0], [1], [0, 0, 1, 1], [], []>} : vector<8x8xf32>, vector<8x8xf32>, vector<8x8xf32> -> vector<8x8xf32>
    %c0_138 = arith.constant 0 : index
    %c16_139 = arith.constant 16 : index
    %403 = vector.load %arg19[%c0_138, %c16_139] : memref<16x32xf32, #tpu.memory_space<vmem>>, vector<8x8xf32>
    tpu.vector_store %arg19[%c0_138, %c16_139], %402 {strides = array<i32>} : memref<16x32xf32, #tpu.memory_space<vmem>>, vector<8x8xf32>,
    %404 = vector.extract_strided_slice %334 {offsets = [0, 24], sizes = [8, 8], strides = [1, 1]} : vector<16x32xf32> to vector<8x8xf32>
    %405 = vector.extract_strided_slice %338 {offsets = [0, 24], sizes = [8, 8], strides = [1, 1]} : vector<16x32xf32> to vector<8x8xf32>
    %406 = vector.extract_strided_slice %342 {offsets = [0, 24], sizes = [8, 8], strides = [1, 1]} : vector<16x32xf32> to vector<8x8xf32>
    %cst_140 = arith.constant dense<0.000000e+00> : vector<8x8xf32>
    %407 = tpu.matmul %404, %405, %cst_140 {dimension_numbers = #tpu.dot_dimension_numbers<[1], [1], [0], [0], [0, 0, 1, 0], [], []>} : vector<8x8xf32>, vector<8x8xf32>, vector<8x8xf32> -> vector<8x8xf32>
    %cst_141 = arith.constant 0.353553385 : f32
    %408 = vector.broadcast %cst_141 : f32 to vector<8x8xf32>
    %409 = arith.mulf %407, %408 : vector<8x8xf32>
    %410 = vector.broadcast %343 : vector<1x8xf32> to vector<8x8xf32>
    %411 = arith.addf %409, %410 : vector<8x8xf32>
    %cst_142 = arith.constant dense<0xFF800000> : vector<8xf32>
    %412 = vector.multi_reduction <maximumf>, %411, %cst_142 [1] : vector<8x8xf32> to vector<8xf32>
    %413 = vector.shape_cast %412 : vector<8xf32> to vector<8x1xf32>
    %414 = vector.broadcast %413 : vector<8x1xf32> to vector<8x8xf32>
    %415 = arith.subf %411, %414 : vector<8x8xf32>
    %416 = math.exp %415 : vector<8x8xf32>
    %cst_143 = arith.constant dense<0.000000e+00> : vector<8xf32>
    %417 = vector.multi_reduction <add>, %416, %cst_143 [1] : vector<8x8xf32> to vector<8xf32>
    %418 = vector.shape_cast %417 : vector<8xf32> to vector<8x1xf32>
    %419 = tpu.reciprocal %418 {approx = true} : vector<8x1xf32> -> vector<8x1xf32>
    %420 = vector.broadcast %419 : vector<8x1xf32> to vector<8x8xf32>
    %421 = arith.mulf %416, %420 : vector<8x8xf32>
    %cst_144 = arith.constant dense<0.000000e+00> : vector<8x8xf32>
    %422 = tpu.matmul %421, %406, %cst_144 {dimension_numbers = #tpu.dot_dimension_numbers<[1], [0], [0], [1], [0, 0, 1, 1], [], []>} : vector<8x8xf32>, vector<8x8xf32>, vector<8x8xf32> -> vector<8x8xf32>
    %c0_145 = arith.constant 0 : index
    %c24_146 = arith.constant 24 : index
    %423 = vector.load %arg19[%c0_145, %c24_146] : memref<16x32xf32, #tpu.memory_space<vmem>>, vector<8x8xf32>
    tpu.vector_store %arg19[%c0_145, %c24_146], %422 {strides = array<i32>} : memref<16x32xf32, #tpu.memory_space<vmem>>, vector<8x8xf32>,
    %424 = vector.extract_strided_slice %58 {offsets = [1, 0], sizes = [1, 8], strides = [1, 1]} : vector<2x8xf32> to vector<1x8xf32>
    %425 = vector.extract_strided_slice %334 {offsets = [8, 0], sizes = [8, 8], strides = [1, 1]} : vector<16x32xf32> to vector<8x8xf32>
    %426 = vector.extract_strided_slice %338 {offsets = [8, 0], sizes = [8, 8], strides = [1, 1]} : vector<16x32xf32> to vector<8x8xf32>
    %427 = vector.extract_strided_slice %342 {offsets = [8, 0], sizes = [8, 8], strides = [1, 1]} : vector<16x32xf32> to vector<8x8xf32>
    %cst_147 = arith.constant dense<0.000000e+00> : vector<8x8xf32>
    %428 = tpu.matmul %425, %426, %cst_147 {dimension_numbers = #tpu.dot_dimension_numbers<[1], [1], [0], [0], [0, 0, 1, 0], [], []>} : vector<8x8xf32>, vector<8x8xf32>, vector<8x8xf32> -> vector<8x8xf32>
    %cst_148 = arith.constant 0.353553385 : f32
    %429 = vector.broadcast %cst_148 : f32 to vector<8x8xf32>
    %430 = arith.mulf %428, %429 : vector<8x8xf32>
    %431 = vector.broadcast %424 : vector<1x8xf32> to vector<8x8xf32>
    %432 = arith.addf %430, %431 : vector<8x8xf32>
    %cst_149 = arith.constant dense<0xFF800000> : vector<8xf32>
    %433 = vector.multi_reduction <maximumf>, %432, %cst_149 [1] : vector<8x8xf32> to vector<8xf32>
    %434 = vector.shape_cast %433 : vector<8xf32> to vector<8x1xf32>
    %435 = vector.broadcast %434 : vector<8x1xf32> to vector<8x8xf32>
    %436 = arith.subf %432, %435 : vector<8x8xf32>
    %437 = math.exp %436 : vector<8x8xf32>
    %cst_150 = arith.constant dense<0.000000e+00> : vector<8xf32>
    %438 = vector.multi_reduction <add>, %437, %cst_150 [1] : vector<8x8xf32> to vector<8xf32>
    %439 = vector.shape_cast %438 : vector<8xf32> to vector<8x1xf32>
    %440 = tpu.reciprocal %439 {approx = true} : vector<8x1xf32> -> vector<8x1xf32>
    %441 = vector.broadcast %440 : vector<8x1xf32> to vector<8x8xf32>
    %442 = arith.mulf %437, %441 : vector<8x8xf32>
    %cst_151 = arith.constant dense<0.000000e+00> : vector<8x8xf32>
    %443 = tpu.matmul %442, %427, %cst_151 {dimension_numbers = #tpu.dot_dimension_numbers<[1], [0], [0], [1], [0, 0, 1, 1], [], []>} : vector<8x8xf32>, vector<8x8xf32>, vector<8x8xf32> -> vector<8x8xf32>
    %c8_152 = arith.constant 8 : index
    %c0_153 = arith.constant 0 : index
    %444 = vector.load %arg19[%c8_152, %c0_153] : memref<16x32xf32, #tpu.memory_space<vmem>>, vector<8x8xf32>
    tpu.vector_store %arg19[%c8_152, %c0_153], %443 {strides = array<i32>} : memref<16x32xf32, #tpu.memory_space<vmem>>, vector<8x8xf32>,
    %445 = vector.extract_strided_slice %334 {offsets = [8, 8], sizes = [8, 8], strides = [1, 1]} : vector<16x32xf32> to vector<8x8xf32>
    %446 = vector.extract_strided_slice %338 {offsets = [8, 8], sizes = [8, 8], strides = [1, 1]} : vector<16x32xf32> to vector<8x8xf32>
    %447 = vector.extract_strided_slice %342 {offsets = [8, 8], sizes = [8, 8], strides = [1, 1]} : vector<16x32xf32> to vector<8x8xf32>
    %cst_154 = arith.constant dense<0.000000e+00> : vector<8x8xf32>
    %448 = tpu.matmul %445, %446, %cst_154 {dimension_numbers = #tpu.dot_dimension_numbers<[1], [1], [0], [0], [0, 0, 1, 0], [], []>} : vector<8x8xf32>, vector<8x8xf32>, vector<8x8xf32> -> vector<8x8xf32>
    %cst_155 = arith.constant 0.353553385 : f32
    %449 = vector.broadcast %cst_155 : f32 to vector<8x8xf32>
    %450 = arith.mulf %448, %449 : vector<8x8xf32>
    %451 = vector.broadcast %424 : vector<1x8xf32> to vector<8x8xf32>
    %452 = arith.addf %450, %451 : vector<8x8xf32>
    %cst_156 = arith.constant dense<0xFF800000> : vector<8xf32>
    %453 = vector.multi_reduction <maximumf>, %452, %cst_156 [1] : vector<8x8xf32> to vector<8xf32>
    %454 = vector.shape_cast %453 : vector<8xf32> to vector<8x1xf32>
    %455 = vector.broadcast %454 : vector<8x1xf32> to vector<8x8xf32>
    %456 = arith.subf %452, %455 : vector<8x8xf32>
    %457 = math.exp %456 : vector<8x8xf32>
    %cst_157 = arith.constant dense<0.000000e+00> : vector<8xf32>
    %458 = vector.multi_reduction <add>, %457, %cst_157 [1] : vector<8x8xf32> to vector<8xf32>
    %459 = vector.shape_cast %458 : vector<8xf32> to vector<8x1xf32>
    %460 = tpu.reciprocal %459 {approx = true} : vector<8x1xf32> -> vector<8x1xf32>
    %461 = vector.broadcast %460 : vector<8x1xf32> to vector<8x8xf32>
    %462 = arith.mulf %457, %461 : vector<8x8xf32>
    %cst_158 = arith.constant dense<0.000000e+00> : vector<8x8xf32>
    %463 = tpu.matmul %462, %447, %cst_158 {dimension_numbers = #tpu.dot_dimension_numbers<[1], [0], [0], [1], [0, 0, 1, 1], [], []>} : vector<8x8xf32>, vector<8x8xf32>, vector<8x8xf32> -> vector<8x8xf32>
    %c8_159 = arith.constant 8 : index
    %c8_160 = arith.constant 8 : index
    %464 = vector.load %arg19[%c8_159, %c8_160] : memref<16x32xf32, #tpu.memory_space<vmem>>, vector<8x8xf32>
    tpu.vector_store %arg19[%c8_159, %c8_160], %463 {strides = array<i32>} : memref<16x32xf32, #tpu.memory_space<vmem>>, vector<8x8xf32>,
    %465 = vector.extract_strided_slice %334 {offsets = [8, 16], sizes = [8, 8], strides = [1, 1]} : vector<16x32xf32> to vector<8x8xf32>
    %466 = vector.extract_strided_slice %338 {offsets = [8, 16], sizes = [8, 8], strides = [1, 1]} : vector<16x32xf32> to vector<8x8xf32>
    %467 = vector.extract_strided_slice %342 {offsets = [8, 16], sizes = [8, 8], strides = [1, 1]} : vector<16x32xf32> to vector<8x8xf32>
    %cst_161 = arith.constant dense<0.000000e+00> : vector<8x8xf32>
    %468 = tpu.matmul %465, %466, %cst_161 {dimension_numbers = #tpu.dot_dimension_numbers<[1], [1], [0], [0], [0, 0, 1, 0], [], []>} : vector<8x8xf32>, vector<8x8xf32>, vector<8x8xf32> -> vector<8x8xf32>
    %cst_162 = arith.constant 0.353553385 : f32
    %469 = vector.broadcast %cst_162 : f32 to vector<8x8xf32>
    %470 = arith.mulf %468, %469 : vector<8x8xf32>
    %471 = vector.broadcast %424 : vector<1x8xf32> to vector<8x8xf32>
    %472 = arith.addf %470, %471 : vector<8x8xf32>
    %cst_163 = arith.constant dense<0xFF800000> : vector<8xf32>
    %473 = vector.multi_reduction <maximumf>, %472, %cst_163 [1] : vector<8x8xf32> to vector<8xf32>
    %474 = vector.shape_cast %473 : vector<8xf32> to vector<8x1xf32>
    %475 = vector.broadcast %474 : vector<8x1xf32> to vector<8x8xf32>
    %476 = arith.subf %472, %475 : vector<8x8xf32>
    %477 = math.exp %476 : vector<8x8xf32>
    %cst_164 = arith.constant dense<0.000000e+00> : vector<8xf32>
    %478 = vector.multi_reduction <add>, %477, %cst_164 [1] : vector<8x8xf32> to vector<8xf32>
    %479 = vector.shape_cast %478 : vector<8xf32> to vector<8x1xf32>
    %480 = tpu.reciprocal %479 {approx = true} : vector<8x1xf32> -> vector<8x1xf32>
    %481 = vector.broadcast %480 : vector<8x1xf32> to vector<8x8xf32>
    %482 = arith.mulf %477, %481 : vector<8x8xf32>
    %cst_165 = arith.constant dense<0.000000e+00> : vector<8x8xf32>
    %483 = tpu.matmul %482, %467, %cst_165 {dimension_numbers = #tpu.dot_dimension_numbers<[1], [0], [0], [1], [0, 0, 1, 1], [], []>} : vector<8x8xf32>, vector<8x8xf32>, vector<8x8xf32> -> vector<8x8xf32>
    %c8_166 = arith.constant 8 : index
    %c16_167 = arith.constant 16 : index
    %484 = vector.load %arg19[%c8_166, %c16_167] : memref<16x32xf32, #tpu.memory_space<vmem>>, vector<8x8xf32>
    tpu.vector_store %arg19[%c8_166, %c16_167], %483 {strides = array<i32>} : memref<16x32xf32, #tpu.memory_space<vmem>>, vector<8x8xf32>,
    %485 = vector.extract_strided_slice %334 {offsets = [8, 24], sizes = [8, 8], strides = [1, 1]} : vector<16x32xf32> to vector<8x8xf32>
    %486 = vector.extract_strided_slice %338 {offsets = [8, 24], sizes = [8, 8], strides = [1, 1]} : vector<16x32xf32> to vector<8x8xf32>
    %487 = vector.extract_strided_slice %342 {offsets = [8, 24], sizes = [8, 8], strides = [1, 1]} : vector<16x32xf32> to vector<8x8xf32>
    %cst_168 = arith.constant dense<0.000000e+00> : vector<8x8xf32>
    %488 = tpu.matmul %485, %486, %cst_168 {dimension_numbers = #tpu.dot_dimension_numbers<[1], [1], [0], [0], [0, 0, 1, 0], [], []>} : vector<8x8xf32>, vector<8x8xf32>, vector<8x8xf32> -> vector<8x8xf32>
    %cst_169 = arith.constant 0.353553385 : f32
    %489 = vector.broadcast %cst_169 : f32 to vector<8x8xf32>
    %490 = arith.mulf %488, %489 : vector<8x8xf32>
    %491 = vector.broadcast %424 : vector<1x8xf32> to vector<8x8xf32>
    %492 = arith.addf %490, %491 : vector<8x8xf32>
    %cst_170 = arith.constant dense<0xFF800000> : vector<8xf32>
    %493 = vector.multi_reduction <maximumf>, %492, %cst_170 [1] : vector<8x8xf32> to vector<8xf32>
    %494 = vector.shape_cast %493 : vector<8xf32> to vector<8x1xf32>
    %495 = vector.broadcast %494 : vector<8x1xf32> to vector<8x8xf32>
    %496 = arith.subf %492, %495 : vector<8x8xf32>
    %497 = math.exp %496 : vector<8x8xf32>
    %cst_171 = arith.constant dense<0.000000e+00> : vector<8xf32>
    %498 = vector.multi_reduction <add>, %497, %cst_171 [1] : vector<8x8xf32> to vector<8xf32>
    %499 = vector.shape_cast %498 : vector<8xf32> to vector<8x1xf32>
    %500 = tpu.reciprocal %499 {approx = true} : vector<8x1xf32> -> vector<8x1xf32>
    %501 = vector.broadcast %500 : vector<8x1xf32> to vector<8x8xf32>
    %502 = arith.mulf %497, %501 : vector<8x8xf32>
    %cst_172 = arith.constant dense<0.000000e+00> : vector<8x8xf32>
    %503 = tpu.matmul %502, %487, %cst_172 {dimension_numbers = #tpu.dot_dimension_numbers<[1], [0], [0], [1], [0, 0, 1, 1], [], []>} : vector<8x8xf32>, vector<8x8xf32>, vector<8x8xf32> -> vector<8x8xf32>
    %c8_173 = arith.constant 8 : index
    %c24_174 = arith.constant 24 : index
    %504 = vector.load %arg19[%c8_173, %c24_174] : memref<16x32xf32, #tpu.memory_space<vmem>>, vector<8x8xf32>
    tpu.vector_store %arg19[%c8_173, %c24_174], %503 {strides = array<i32>} : memref<16x32xf32, #tpu.memory_space<vmem>>, vector<8x8xf32>,
    %c0_175 = arith.constant 0 : index
    %c0_176 = arith.constant 0 : index
    %505 = vector.load %arg19[%c0_175, %c0_176] : memref<16x32xf32, #tpu.memory_space<vmem>>, vector<16x32xf32>
    %506 = arith.truncf %505 : vector<16x32xf32> to vector<16x32xbf16>
    %c1_177 = arith.constant 1 : index
    %c0_178 = arith.constant 0 : index
    %c0_179 = arith.constant 0 : index
    %507 = vector.load %arg8[%c1_177, %c0_178, %c0_179] : memref<2x32x32xbf16, #tpu.memory_space<vmem>>, vector<1x32x32xbf16>
    %508 = vector.shape_cast %507 : vector<1x32x32xbf16> to vector<32x32xbf16>
    %cst_180 = arith.constant dense<0.000000e+00> : vector<16x32xf32>
    %509 = tpu.matmul %506, %508, %cst_180 {dimension_numbers = #tpu.dot_dimension_numbers<[1], [0], [0], [1], [0, 0, 1, 1], [], []>} : vector<16x32xbf16>, vector<32x32xbf16>, vector<16x32xf32> -> vector<16x32xf32>
    %510 = vector.extract_strided_slice %326 {offsets = [3, 0], sizes = [1, 32], strides = [1, 1]} : vector<9x32xf32> to vector<1x32xf32>
    %511 = vector.broadcast %510 : vector<1x32xf32> to vector<16x32xf32>
    %512 = arith.addf %509, %511 : vector<16x32xf32>
    %513 = arith.addf %324, %512 : vector<16x32xf32>
    %514 = vector.extract_strided_slice %326 {offsets = [5, 0], sizes = [1, 32], strides = [1, 1]} : vector<9x32xf32> to vector<1x32xf32>
    %515 = vector.extract_strided_slice %326 {offsets = [6, 0], sizes = [1, 32], strides = [1, 1]} : vector<9x32xf32> to vector<1x32xf32>
    %cst_181 = arith.constant dense<0.000000e+00> : vector<16xf32>
    %516 = vector.multi_reduction <add>, %513, %cst_181 [1] : vector<16x32xf32> to vector<16xf32>
    %517 = vector.shape_cast %516 : vector<16xf32> to vector<16x1xf32>
    %cst_182 = arith.constant 3.200000e+01 : f32
    %518 = vector.broadcast %cst_182 : f32 to vector<16x1xf32>
    %519 = arith.divf %517, %518 : vector<16x1xf32>
    %520 = vector.broadcast %519 : vector<16x1xf32> to vector<16x32xf32>
    %521 = arith.subf %513, %520 : vector<16x32xf32>
    %522 = arith.mulf %521, %521 : vector<16x32xf32>
    %cst_183 = arith.constant dense<0.000000e+00> : vector<16xf32>
    %523 = vector.multi_reduction <add>, %522, %cst_183 [1] : vector<16x32xf32> to vector<16xf32>
    %524 = vector.shape_cast %523 : vector<16xf32> to vector<16x1xf32>
    %cst_184 = arith.constant 3.200000e+01 : f32
    %525 = vector.broadcast %cst_184 : f32 to vector<16x1xf32>
    %526 = arith.divf %524, %525 : vector<16x1xf32>
    %527 = vector.broadcast %519 : vector<16x1xf32> to vector<16x32xf32>
    %528 = arith.subf %513, %527 : vector<16x32xf32>
    %cst_185 = arith.constant 9.99999974E-6 : f32
    %529 = vector.broadcast %cst_185 : f32 to vector<16x1xf32>
    %530 = arith.addf %526, %529 : vector<16x1xf32>
    %531 = math.rsqrt %530 : vector<16x1xf32>
    %532 = vector.broadcast %531 : vector<16x1xf32> to vector<16x32xf32>
    %533 = arith.mulf %528, %532 : vector<16x32xf32>
    %534 = vector.broadcast %514 : vector<1x32xf32> to vector<16x32xf32>
    %535 = arith.mulf %533, %534 : vector<16x32xf32>
    %536 = vector.broadcast %515 : vector<1x32xf32> to vector<16x32xf32>
    %537 = arith.addf %535, %536 : vector<16x32xf32>
    %538 = arith.truncf %537 : vector<16x32xf32> to vector<16x32xbf16>
    %c1_186 = arith.constant 1 : index
    %c0_187 = arith.constant 0 : index
    %c0_188 = arith.constant 0 : index
    %539 = vector.load %arg9[%c1_186, %c0_187, %c0_188] : memref<2x32x64xbf16, #tpu.memory_space<vmem>>, vector<1x32x64xbf16>
    %540 = vector.shape_cast %539 : vector<1x32x64xbf16> to vector<32x64xbf16>
    %cst_189 = arith.constant dense<0.000000e+00> : vector<16x64xf32>
    %541 = tpu.matmul %538, %540, %cst_189 {dimension_numbers = #tpu.dot_dimension_numbers<[1], [0], [0], [1], [0, 0, 1, 1], [], []>} : vector<16x32xbf16>, vector<32x64xbf16>, vector<16x64xf32> -> vector<16x64xf32>
    %c1_190 = arith.constant 1 : index
    %c0_191 = arith.constant 0 : index
    %c0_192 = arith.constant 0 : index
    %542 = vector.load %arg12[%c1_190, %c0_191, %c0_192] : memref<2x1x64xf32, #tpu.memory_space<vmem>>, vector<1x1x64xf32>
    %543 = vector.shape_cast %542 : vector<1x1x64xf32> to vector<1x64xf32>
    %544 = vector.broadcast %543 : vector<1x64xf32> to vector<16x64xf32>
    %545 = arith.addf %541, %544 : vector<16x64xf32>
    %cst_193 = arith.constant 5.000000e-01 : f32
    %546 = vector.broadcast %cst_193 : f32 to vector<16x64xf32>
    %547 = arith.mulf %546, %545 : vector<16x64xf32>
    %cst_194 = arith.constant 4.471500e-02 : f32
    %548 = vector.broadcast %cst_194 : f32 to vector<16x64xf32>
    %549 = arith.mulf %548, %545 : vector<16x64xf32>
    %550 = arith.mulf %549, %545 : vector<16x64xf32>
    %551 = arith.mulf %550, %545 : vector<16x64xf32>
    %552 = arith.addf %545, %551 : vector<16x64xf32>
    %cst_195 = arith.constant 0.797884583 : f32
    %553 = vector.broadcast %cst_195 : f32 to vector<16x64xf32>
    %554 = arith.mulf %553, %552 : vector<16x64xf32>
    %555 = math.tanh %554 : vector<16x64xf32>
    %cst_196 = arith.constant 1.000000e+00 : f32
    %556 = vector.broadcast %cst_196 : f32 to vector<16x64xf32>
    %557 = arith.addf %556, %555 : vector<16x64xf32>
    %558 = arith.mulf %547, %557 : vector<16x64xf32>
    %559 = arith.truncf %558 : vector<16x64xf32> to vector<16x64xbf16>
    %c1_197 = arith.constant 1 : index
    %c0_198 = arith.constant 0 : index
    %c0_199 = arith.constant 0 : index
    %560 = vector.load %arg10[%c1_197, %c0_198, %c0_199] : memref<2x64x32xbf16, #tpu.memory_space<vmem>>, vector<1x64x32xbf16>
    %561 = vector.shape_cast %560 : vector<1x64x32xbf16> to vector<64x32xbf16>
    %cst_200 = arith.constant dense<0.000000e+00> : vector<16x32xf32>
    %562 = tpu.matmul %559, %561, %cst_200 {dimension_numbers = #tpu.dot_dimension_numbers<[1], [0], [0], [1], [0, 0, 1, 1], [], []>} : vector<16x64xbf16>, vector<64x32xbf16>, vector<16x32xf32> -> vector<16x32xf32>
    %563 = vector.extract_strided_slice %326 {offsets = [4, 0], sizes = [1, 32], strides = [1, 1]} : vector<9x32xf32> to vector<1x32xf32>
    %564 = vector.broadcast %563 : vector<1x32xf32> to vector<16x32xf32>
    %565 = arith.addf %562, %564 : vector<16x32xf32>
    %566 = arith.addf %537, %565 : vector<16x32xf32>
    %567 = vector.extract_strided_slice %326 {offsets = [7, 0], sizes = [1, 32], strides = [1, 1]} : vector<9x32xf32> to vector<1x32xf32>
    %568 = vector.extract_strided_slice %326 {offsets = [8, 0], sizes = [1, 32], strides = [1, 1]} : vector<9x32xf32> to vector<1x32xf32>
    %cst_201 = arith.constant dense<0.000000e+00> : vector<16xf32>
    %569 = vector.multi_reduction <add>, %566, %cst_201 [1] : vector<16x32xf32> to vector<16xf32>
    %570 = vector.shape_cast %569 : vector<16xf32> to vector<16x1xf32>
    %cst_202 = arith.constant 3.200000e+01 : f32
    %571 = vector.broadcast %cst_202 : f32 to vector<16x1xf32>
    %572 = arith.divf %570, %571 : vector<16x1xf32>
    %573 = vector.broadcast %572 : vector<16x1xf32> to vector<16x32xf32>
    %574 = arith.subf %566, %573 : vector<16x32xf32>
    %575 = arith.mulf %574, %574 : vector<16x32xf32>
    %cst_203 = arith.constant dense<0.000000e+00> : vector<16xf32>
    %576 = vector.multi_reduction <add>, %575, %cst_203 [1] : vector<16x32xf32> to vector<16xf32>
    %577 = vector.shape_cast %576 : vector<16xf32> to vector<16x1xf32>
    %cst_204 = arith.constant 3.200000e+01 : f32
    %578 = vector.broadcast %cst_204 : f32 to vector<16x1xf32>
    %579 = arith.divf %577, %578 : vector<16x1xf32>
    %580 = vector.broadcast %572 : vector<16x1xf32> to vector<16x32xf32>
    %581 = arith.subf %566, %580 : vector<16x32xf32>
    %cst_205 = arith.constant 9.99999974E-6 : f32
    %582 = vector.broadcast %cst_205 : f32 to vector<16x1xf32>
    %583 = arith.addf %579, %582 : vector<16x1xf32>
    %584 = math.rsqrt %583 : vector<16x1xf32>
    %585 = vector.broadcast %584 : vector<16x1xf32> to vector<16x32xf32>
    %586 = arith.mulf %581, %585 : vector<16x32xf32>
    %587 = vector.broadcast %567 : vector<1x32xf32> to vector<16x32xf32>
    %588 = arith.mulf %586, %587 : vector<16x32xf32>
    %589 = vector.broadcast %568 : vector<1x32xf32> to vector<16x32xf32>
    %590 = arith.addf %588, %589 : vector<16x32xf32>
    %591 = tpu.iota {dimensions = array<i32: 1>} : vector<2x16xi32>
    %592 = tpu.iota {dimensions = array<i32: 0>} : vector<2x16xi32>
    %c8_i32 = arith.constant 8 : i32
    %593 = vector.broadcast %c8_i32 : i32 to vector<2x16xi32>
    %594 = arith.muli %592, %593 : vector<2x16xi32>
    %595 = arith.cmpi eq, %591, %594 : vector<2x16xi32>
    %596 = arith.extui %595 : vector<2x16xi1> to vector<2x16xi32>
    %597 = arith.sitofp %596 : vector<2x16xi32> to vector<2x16xf32>
    %cst_206 = arith.constant dense<0.000000e+00> : vector<2x32xf32>
    %598 = tpu.matmul %597, %590, %cst_206 {dimension_numbers = #tpu.dot_dimension_numbers<[1], [0], [0], [1], [0, 0, 1, 1], [], []>} : vector<2x16xf32>, vector<16x32xf32>, vector<2x32xf32> -> vector<2x32xf32>
    %599 = arith.truncf %598 : vector<2x32xf32> to vector<2x32xbf16>
    %c0_207 = arith.constant 0 : index
    %c0_208 = arith.constant 0 : index
    %600 = vector.load %arg13[%c0_207, %c0_208] : memref<32x32xbf16, #tpu.memory_space<vmem>>, vector<32x32xbf16>
    %cst_209 = arith.constant dense<0.000000e+00> : vector<2x32xf32>
    %601 = tpu.matmul %599, %600, %cst_209 {dimension_numbers = #tpu.dot_dimension_numbers<[1], [0], [0], [1], [0, 0, 1, 1], [], []>} : vector<2x32xbf16>, vector<32x32xbf16>, vector<2x32xf32> -> vector<2x32xf32>
    %c0_210 = arith.constant 0 : index
    %c0_211 = arith.constant 0 : index
    %602 = vector.load %arg14[%c0_210, %c0_211] : memref<1x32xf32, #tpu.memory_space<vmem>>, vector<1x32xf32>
    %603 = vector.broadcast %602 : vector<1x32xf32> to vector<2x32xf32>
    %604 = arith.addf %601, %603 : vector<2x32xf32>
    %605 = math.tanh %604 : vector<2x32xf32>
    %606 = arith.truncf %605 : vector<2x32xf32> to vector<2x32xbf16>
    %c0_212 = arith.constant 0 : index
    %c0_213 = arith.constant 0 : index
    %607 = vector.load %arg15[%c0_212, %c0_213] : memref<32x128xbf16, #tpu.memory_space<vmem>>, vector<32x128xbf16>
    %cst_214 = arith.constant dense<0.000000e+00> : vector<2x128xf32>
    %608 = tpu.matmul %606, %607, %cst_214 {dimension_numbers = #tpu.dot_dimension_numbers<[1], [0], [0], [1], [0, 0, 1, 1], [], []>} : vector<2x32xbf16>, vector<32x128xbf16>, vector<2x128xf32> -> vector<2x128xf32>
    %c0_215 = arith.constant 0 : index
    %c0_216 = arith.constant 0 : index
    %609 = vector.load %arg16[%c0_215, %c0_216] : memref<1x128xf32, #tpu.memory_space<vmem>>, vector<1x128xf32>
    %610 = vector.broadcast %609 : vector<1x128xf32> to vector<2x128xf32>
    %611 = arith.addf %608, %610 : vector<2x128xf32>
    %c0_217 = arith.constant 0 : index
    %c0_218 = arith.constant 0 : index
    %612 = vector.load %arg17[%c0_217, %c0_218] : memref<2x128xf32, #tpu.memory_space<vmem>>, vector<2x128xf32>
    tpu.vector_store %arg17[%c0_217, %c0_218], %611 {strides = array<i32>} : memref<2x128xf32, #tpu.memory_space<vmem>>, vector<2x128xf32>,
    %613 = tpu.iota {dimensions = array<i32: 1>} : vector<2x128xi32>
    %c53_i32 = arith.constant 53 : i32
    %614 = vector.broadcast %c53_i32 : i32 to vector<2x128xi32>
    %615 = arith.cmpi slt, %613, %614 : vector<2x128xi32>
    %cst_219 = arith.constant -1.000000e+30 : f32
    %616 = vector.broadcast %cst_219 : f32 to vector<2x128xf32>
    %617 = arith.select %615, %611, %616 : vector<2x128xi1>, vector<2x128xf32>
    %cst_220 = arith.constant dense<0xFF800000> : vector<2xf32>
    %618 = vector.multi_reduction <maximumf>, %617, %cst_220 [1] : vector<2x128xf32> to vector<2xf32>
    %619 = vector.shape_cast %618 : vector<2xf32> to vector<2x1xf32>
    %620 = vector.broadcast %619 : vector<2x1xf32> to vector<2x128xf32>
    %621 = arith.subf %617, %620 : vector<2x128xf32>
    %622 = math.exp %621 : vector<2x128xf32>
    %cst_221 = arith.constant dense<0.000000e+00> : vector<2xf32>
    %623 = vector.multi_reduction <add>, %622, %cst_221 [1] : vector<2x128xf32> to vector<2xf32>
    %624 = vector.shape_cast %623 : vector<2xf32> to vector<2x1xf32>
    %625 = math.log %624 : vector<2x1xf32>
    %626 = arith.addf %619, %625 : vector<2x1xf32>
    %c0_222 = arith.constant 0 : index
    %c0_223 = arith.constant 0 : index
    %627 = vector.load %arg2[%c0_222, %c0_223] : memref<2x1xi32, #tpu.memory_space<vmem>>, vector<2x1xi32>
    %628 = vector.broadcast %627 : vector<2x1xi32> to vector<2x128xi32>
    %629 = arith.cmpi eq, %613, %628 : vector<2x128xi32>
    %630 = arith.extui %629 : vector<2x128xi1> to vector<2x128xi32>
    %631 = arith.sitofp %630 : vector<2x128xi32> to vector<2x128xf32>
    %632 = arith.mulf %611, %631 : vector<2x128xf32>
    %cst_224 = arith.constant dense<0.000000e+00> : vector<2xf32>
    %633 = vector.multi_reduction <add>, %632, %cst_224 [1] : vector<2x128xf32> to vector<2xf32>
    %634 = vector.shape_cast %633 : vector<2xf32> to vector<2x1xf32>
    %635 = arith.subf %626, %634 : vector<2x1xf32>
    %cst_225 = arith.constant dense<0.000000e+00> : vector<1xf32>
    %636 = vector.multi_reduction <add>, %635, %cst_225 [0] : vector<2x1xf32> to vector<1xf32>
    %637 = vector.shape_cast %636 : vector<1xf32> to vector<1x1xf32>
    %cst_226 = arith.constant 2.000000e+00 : f32
    %638 = vector.broadcast %cst_226 : f32 to vector<1x1xf32>
    %639 = arith.divf %637, %638 : vector<1x1xf32>
    %c0_227 = arith.constant 0 : index
    %c0_228 = arith.constant 0 : index
    %640 = vector.load %arg18[%c0_227, %c0_228] : memref<1x1xf32, #tpu.memory_space<vmem>>, vector<1x1xf32>
    tpu.vector_store %arg18[%c0_227, %c0_228], %639 {strides = array<i32>} : memref<1x1xf32, #tpu.memory_space<vmem>>, vector<1x1xf32>,
    return
  }
}

</mosaic_0001>

<llo_original>
// kernel: parser_model_forward.1
$region0: #{parser_model_forward.1}
  #allocation0 [shape = 'u32[]', space=smem, size = 0x4, offset = 0x4, fixed_abs, tag = 'smem constant byte address 0x4 - core index']
  #allocation1 [shape = 'u32[144,128]{1,0:T(1,128)}', space=vmem, size = 0x12000, scoped, tag = 'internal scratch']
  #allocation2 [shape = 'f32[16,32]{1,0:T(8,128)}', space=vmem, size = 0x2000, scoped, tag = 'scratch operand']
  %s0 = inlined_call_operand.vmem [shape: s32[16,3], index: 0, kind: input, shape index: {}]
  %s1 = inlined_call_operand.vmem [shape: f32[2,8], index: 1, kind: input, shape index: {}]
  %s2 = inlined_call_operand.vmem [shape: s32[2,1], index: 2, kind: input, shape index: {}]
  %s3 = inlined_call_operand.vmem [shape: bf16[100,32], index: 3, kind: input, shape index: {}]
  %s4 = inlined_call_operand.vmem [shape: bf16[16,32], index: 4, kind: input, shape index: {}]
  %s5 = inlined_call_operand.vmem [shape: bf16[2,32], index: 5, kind: input, shape index: {}]
  %s6 = inlined_call_operand.vmem [shape: f32[2,32], index: 6, kind: input, shape index: {}]
  %s7 = inlined_call_operand.vmem [shape: bf16[2,32,96], index: 7, kind: input, shape index: {}]
  %s8 = inlined_call_operand.vmem [shape: bf16[2,32,32], index: 8, kind: input, shape index: {}]
  %s9 = inlined_call_operand.vmem [shape: bf16[2,32,64], index: 9, kind: input, shape index: {}]
  %s10 = inlined_call_operand.vmem [shape: bf16[2,64,32], index: 10, kind: input, shape index: {}]
  %s11 = inlined_call_operand.vmem [shape: f32[2,9,32], index: 11, kind: input, shape index: {}]
  %s12 = inlined_call_operand.vmem [shape: f32[2,1,64], index: 12, kind: input, shape index: {}]
  %s13 = inlined_call_operand.vmem [shape: bf16[32,32], index: 13, kind: input, shape index: {}]
  %s14 = inlined_call_operand.vmem [shape: f32[1,32], index: 14, kind: input, shape index: {}]
  %s15 = inlined_call_operand.vmem [shape: bf16[32,128], index: 15, kind: input, shape index: {}]
  %s16 = inlined_call_operand.vmem [shape: f32[1,128], index: 16, kind: input, shape index: {}]
  %s17 = inlined_call_operand.hbm [shape: f32[2,128], index: 17, kind: output, shape index: {0}]
  %s18 = inlined_call_operand.hbm [shape: f32[1,1], index: 18, kind: output, shape index: {1}]
  %19 = xla_tuple %s17, %s18
  %s20 = sld [smem:[#allocation0]]
  $region86: #{parser_model_forward.1} parent=0
    _
  %s22 = ssub.s32 1, %s20
  %s23 = scalar_select 0, %s22, %s20
  $region1: #{parser_model_forward.1} parent=0
    #allocation3 [shape = 'u8[1024]{0}', space=vmem, size = 0x400, scoped, tag = 'output window, operand 0, single buffered']
    #allocation4 [shape = 's32[1]{0}', space=sflag, size = 0x4, scoped, tag = 'scoped memory for parser_model_forward.1']
    #allocation5 [shape = 'u8[512]{0}', space=vmem, size = 0x400, scoped, tag = 'output window, operand 1, single buffered']
    #allocation6 [shape = 's32[1]{0}', space=sflag, size = 0x4, scoped, tag = 'scoped memory for parser_model_forward.1']
    %24 = vsyncpa [#allocation4], 0
    %25 = vsyncpa [#allocation6], 0
    // Predicated region
    $region2: #{parser_model_forward.1} parent=1 // pred_check
      _
    $region3: #{parser_model_forward.1} parent=1 // pred_check_branch
      %27 = sbr.rel (0) target = $region5
    $region4: #{parser_model_forward.1} parent=1 // pred_region
      _
    $region5: #{parser_model_forward.1} parent=1 // pred_fallthru
      _
    // Predicated region
    $region6: #{parser_model_forward.1} parent=1 // pred_check
      _
    $region7: #{parser_model_forward.1} parent=1 // pred_check_branch
      %29 = sbr.rel (0) target = $region9
    $region8: #{parser_model_forward.1} parent=1 // pred_region
      _
    $region9: #{parser_model_forward.1} parent=1 // pred_fallthru
      _
    // Predicated region
    $region10: #{parser_model_forward.1} parent=1 // pred_check
      _
    $region11: #{parser_model_forward.1} parent=1 // pred_check_branch
      %31 = sbr.rel (0) target = $region13
    $region12: #{parser_model_forward.1} parent=1 // pred_region
      _
    $region13: #{parser_model_forward.1} parent=1 // pred_fallthru
      _
    // Predicated region
    $region14: #{parser_model_forward.1} parent=1 // pred_check
      _
    $region15: #{parser_model_forward.1} parent=1 // pred_check_branch
      %33 = sbr.rel (0) target = $region17
    $region16: #{parser_model_forward.1} parent=1 // pred_region
      _
    $region17: #{parser_model_forward.1} parent=1 // pred_fallthru
      _
    // Predicated region
    $region18: #{parser_model_forward.1} parent=1 // pred_check
      _
    $region19: #{parser_model_forward.1} parent=1 // pred_check_branch
      %35 = sbr.rel (0) target = $region21
    $region20: #{parser_model_forward.1} parent=1 // pred_region
      _
    $region21: #{parser_model_forward.1} parent=1 // pred_fallthru
      _
    // Predicated region
    $region22: #{parser_model_forward.1} parent=1 // pred_check
      _
    $region23: #{parser_model_forward.1} parent=1 // pred_check_branch
      %37 = sbr.rel (0) target = $region25
    $region24: #{parser_model_forward.1} parent=1 // pred_region
      _
    $region25: #{parser_model_forward.1} parent=1 // pred_fallthru
      _
    // Predicated region
    $region26: #{parser_model_forward.1} parent=1 // pred_check
      _
    $region27: #{parser_model_forward.1} parent=1 // pred_check_branch
      %39 = sbr.rel (0) target = $region29
    $region28: #{parser_model_forward.1} parent=1 // pred_region
      _
    $region29: #{parser_model_forward.1} parent=1 // pred_fallthru
      _
    // Predicated region
    $region30: #{parser_model_forward.1} parent=1 // pred_check
      _
    $region31: #{parser_model_forward.1} parent=1 // pred_check_branch
      %41 = sbr.rel (0) target = $region33
    $region32: #{parser_model_forward.1} parent=1 // pred_region
      _
    $region33: #{parser_model_forward.1} parent=1 // pred_fallthru
      _
    // Predicated region
    $region34: #{parser_model_forward.1} parent=1 // pred_check
      _
    $region35: #{parser_model_forward.1} parent=1 // pred_check_branch
      %43 = sbr.rel (0) target = $region37
    $region36: #{parser_model_forward.1} parent=1 // pred_region
      _
    $region37: #{parser_model_forward.1} parent=1 // pred_fallthru
      _
    // Predicated region
    $region38: #{parser_model_forward.1} parent=1 // pred_check
      _
    $region39: #{parser_model_forward.1} parent=1 // pred_check_branch
      %45 = sbr.rel (0) target = $region41
    $region40: #{parser_model_forward.1} parent=1 // pred_region
      _
    $region41: #{parser_model_forward.1} parent=1 // pred_fallthru
      _
    // Predicated region
    $region42: #{parser_model_forward.1} parent=1 // pred_check
      _
    $region43: #{parser_model_forward.1} parent=1 // pred_check_branch
      %47 = sbr.rel (0) target = $region45
    $region44: #{parser_model_forward.1} parent=1 // pred_region
      _
    $region45: #{parser_model_forward.1} parent=1 // pred_fallthru
      _
    // Predicated region
    $region46: #{parser_model_forward.1} parent=1 // pred_check
      _
    $region47: #{parser_model_forward.1} parent=1 // pred_check_branch
      %49 = sbr.rel (0) target = $region49
    $region48: #{parser_model_forward.1} parent=1 // pred_region
      _
    $region49: #{parser_model_forward.1} parent=1 // pred_fallthru
      _
    // Predicated region
    $region50: #{parser_model_forward.1} parent=1 // pred_check
      _
    $region51: #{parser_model_forward.1} parent=1 // pred_check_branch
      %51 = sbr.rel (0) target = $region53
    $region52: #{parser_model_forward.1} parent=1 // pred_region
      _
    $region53: #{parser_model_forward.1} parent=1 // pred_fallthru
      _
    // Predicated region
    $region54: #{parser_model_forward.1} parent=1 // pred_check
      _
    $region55: #{parser_model_forward.1} parent=1 // pred_check_branch
      %53 = sbr.rel (0) target = $region57
    $region56: #{parser_model_forward.1} parent=1 // pred_region
      _
    $region57: #{parser_model_forward.1} parent=1 // pred_fallthru
      _
    // Predicated region
    $region58: #{parser_model_forward.1} parent=1 // pred_check
      _
    $region59: #{parser_model_forward.1} parent=1 // pred_check_branch
      %55 = sbr.rel (0) target = $region61
    $region60: #{parser_model_forward.1} parent=1 // pred_region
      _
    $region61: #{parser_model_forward.1} parent=1 // pred_fallthru
      _
    // Predicated region
    $region62: #{parser_model_forward.1} parent=1 // pred_check
      _
    $region63: #{parser_model_forward.1} parent=1 // pred_check_branch
      %57 = sbr.rel (0) target = $region65
    $region64: #{parser_model_forward.1} parent=1 // pred_region
      _
    $region65: #{parser_model_forward.1} parent=1 // pred_fallthru
      _
    // Predicated region
    $region66: #{parser_model_forward.1} parent=1 // pred_check
      _
    $region67: #{parser_model_forward.1} parent=1 // pred_check_branch
      %59 = sbr.rel (0) target = $region69
    $region68: #{parser_model_forward.1} parent=1 // pred_region
      _
    $region69: #{parser_model_forward.1} parent=1 // pred_fallthru
      _
    %v61 = vld [vmem:[%s0] sm:$0xff]
    %v62 = vld [vmem:[%s0 + $0x8] sm:$0xff]
    %v63 = vlaneseq
    %v64 = vand.u32 %v63, 127
    %65 = vset.pattern.permute.xlu0 0
    %66 = vperm.xlu0 %65, %v61
    %v67 = vpop.permute.xlu0 %66
    %68 = vset.pattern.permute.xlu0 0
    %69 = vperm.xlu0 %68, %v62
    %v70 = vpop.permute.xlu0 %69
    %vm71 = vcmp.eq.s32.totalorder %v64, %v67
    %vm72 = vcmp.eq.s32.totalorder %v64, %v70
    %v73 = vsel %vm71, 1, 0
    %v74 = vsel %vm72, 1, 0
    %v75 = vcvt.s32.f32 %v73
    %v76 = vcvt.s32.f32 %v74
    %v77 = vpack.c.bf16 %v76, %v75
    %v78 = vld [vmem:[%s3] sm:$0xf]
    %v79 = vld [vmem:[%s3 + $0x4] sm:$0xf]
    %v80 = vld [vmem:[%s3 + $0x8] sm:$0xf]
    %v81 = vld [vmem:[%s3 + $0xc] sm:$0xf]
    %v82 = vld [vmem:[%s3 + $0x10] sm:$0xf]
    %v83 = vld [vmem:[%s3 + $0x14] sm:$0xf]
    %v84 = vld [vmem:[%s3 + $0x18] sm:$0xf]
    %v85 = vld [vmem:[%s3 + $0x1c] sm:$0xf]
    %v86 = vld [vmem:[%s3 + $0x20] sm:$0xf]
    %v87 = vld [vmem:[%s3 + $0x24] sm:$0xf]
    %v88 = vld [vmem:[%s3 + $0x28] sm:$0xf]
    %v89 = vld [vmem:[%s3 + $0x2c] sm:$0xf]
    %v90 = vld [vmem:[%s3 + $0x30] sm:$0x3]
    %91 = vset.pattern.permute.xlu0 1
    %92 = vperm.xlu0 %91, %v61
    %v93 = vpop.permute.xlu0 %92
    %94 = vset.pattern.permute.xlu0 1
    %95 = vperm.xlu0 %94, %v62
    %v96 = vpop.permute.xlu0 %95
    %vm97 = vcmp.eq.s32.totalorder %v64, %v93
    %vm98 = vcmp.eq.s32.totalorder %v64, %v96
    %v99 = vsel %vm97, 1, 0
    %v100 = vsel %vm98, 1, 0
    %v101 = vcvt.s32.f32 %v99
    %v102 = vcvt.s32.f32 %v100
    %v103 = vpack.c.bf16 %v102, %v101
    %v104 = vld [vmem:[%s4] sm:$0xf]
    %v105 = vld [vmem:[%s4 + $0x4] sm:$0xf]
    %v108 = vunpack.c.l.b16 %v104
    %v109 = vunpack.c.l.b16 %v105
    %v110 = vpack.c.b16 %v109, %v108
    %vm112 = vcmask 130048
    %v114 = vsel %vm112, %v103, 0
    %116 = vmatprep.subr.bf16.mxu0 0
    %117 = vmatpush1.bf16.msra.mxu0 %v110
    %118 = vmatprep.subr.bf16.mxu0 0
    %119 = vmatpush1.bf16.msra.mxu0 0
    %120 = vmatprep.subr.bf16.mxu0 0
    %121 = vmatpush1.bf16.msra.mxu0 0
    %122 = vmatprep.subr.bf16.mxu0 0
    %123 = vmatpush1.bf16.msra.mxu0 0
    %124 = vmatprep.subr.bf16.mxu0 0
    %125 = vmatpush1.bf16.msra.mxu0 0
    %126 = vmatprep.subr.bf16.mxu0 0
    %127 = vmatpush1.bf16.msra.mxu0 0
    %128 = vmatprep.subr.bf16.mxu0 0
    %129 = vmatpush1.bf16.msra.mxu0 0
    %130 = vmatprep.subr.bf16.mxu0 0
    %131 = vmatpush1.bf16.msra.mxu0 0
    %132 = vmatprep.subr.bf16.mxu0 0
    %133 = vmatpush1.bf16.msra.mxu0 0
    %134 = vmatprep.subr.bf16.mxu0 0
    %135 = vmatpush1.bf16.msra.mxu0 0
    %136 = vmatprep.subr.bf16.mxu0 0
    %137 = vmatpush1.bf16.msra.mxu0 0
    %138 = vmatprep.subr.bf16.mxu0 0
    %139 = vmatpush1.bf16.msra.mxu0 0
    %140 = vmatprep.subr.bf16.mxu0 0
    %141 = vmatpush1.bf16.msra.mxu0 0
    %142 = vmatprep.subr.bf16.mxu0 0
    %143 = vmatpush1.bf16.msra.mxu0 0
    %144 = vmatprep.subr.bf16.mxu0 0
    %145 = vmatpush1.bf16.msra.mxu0 0
    %146 = vmatprep.subr.bf16.mxu0 0
    %147 = vmatpush1.bf16.msra.mxu0 0
    %148 = vmatprep.mubr.bf16.mxu0 0
    %149 = vmatmul.mubr.bf16.gmra.mrb[0].mxu0 %v114
    %v150 = vpop.f32.mrb[0].mxu0
    %v151 = vadd.f32 0.0, %v150
    %v152 = vpop.f32.mrb[0].mxu0
    %v153 = vpop.f32.mrb[0].mxu0
    %v154 = vadd.f32 0.0, %v153
    %v155 = vpop.f32.mrb[0].mxu0
    %156 = vdwg.mxu0
    %v170 = vunpack.c.l.b16 %v78
    %v171 = vunpack.c.l.b16 %v79
    %v172 = vunpack.c.l.b16 %v80
    %v173 = vunpack.c.l.b16 %v81
    %v174 = vunpack.c.l.b16 %v82
    %v175 = vunpack.c.l.b16 %v83
    %v176 = vunpack.c.l.b16 %v84
    %v177 = vunpack.c.l.b16 %v85
    %v178 = vunpack.c.l.b16 %v86
    %v179 = vunpack.c.l.b16 %v87
    %v180 = vunpack.c.l.b16 %v88
    %v181 = vunpack.c.l.b16 %v89
    %v182 = vunpack.c.l.b16 %v90
    %v183 = vpack.c.b16 %v171, %v170
    %v184 = vpack.c.b16 %v173, %v172
    %v185 = vpack.c.b16 %v175, %v174
    %v186 = vpack.c.b16 %v177, %v176
    %v187 = vpack.c.b16 %v179, %v178
    %v188 = vpack.c.b16 %v181, %v180
    %v189 = vpack.c.b16 %v182, %v182
    %vm196 = vcmask 818176
    %v198 = vsel %vm196, %v77, 0
    %vm200 = vcmask 1041408
    %v202 = vsel %vm200, %v189, 0
    %204 = vmatprep.subr.bf16.mxu0 0
    %205 = vmatpush1.bf16.msra.mxu0 %v183
    %206 = vmatprep.subr.bf16.mxu0 0
    %207 = vmatpush1.bf16.msra.mxu0 %v184
    %208 = vmatprep.subr.bf16.mxu0 0
    %209 = vmatpush1.bf16.msra.mxu0 %v185
    %210 = vmatprep.subr.bf16.mxu0 0
    %211 = vmatpush1.bf16.msra.mxu0 %v186
    %212 = vmatprep.subr.bf16.mxu0 0
    %213 = vmatpush1.bf16.msra.mxu0 %v187
    %214 = vmatprep.subr.bf16.mxu0 0
    %215 = vmatpush1.bf16.msra.mxu0 %v188
    %216 = vmatprep.subr.bf16.mxu0 0
    %217 = vmatpush1.bf16.msra.mxu0 %v202
    %218 = vmatprep.subr.bf16.mxu0 0
    %219 = vmatpush1.bf16.msra.mxu0 0
    %220 = vmatprep.subr.bf16.mxu0 0
    %221 = vmatpush1.bf16.msra.mxu0 0
    %222 = vmatprep.subr.bf16.mxu0 0
    %223 = vmatpush1.bf16.msra.mxu0 0
    %224 = vmatprep.subr.bf16.mxu0 0
    %225 = vmatpush1.bf16.msra.mxu0 0
    %226 = vmatprep.subr.bf16.mxu0 0
    %227 = vmatpush1.bf16.msra.mxu0 0
    %228 = vmatprep.subr.bf16.mxu0 0
    %229 = vmatpush1.bf16.msra.mxu0 0
    %230 = vmatprep.subr.bf16.mxu0 0
    %231 = vmatpush1.bf16.msra.mxu0 0
    %232 = vmatprep.subr.bf16.mxu0 0
    %233 = vmatpush1.bf16.msra.mxu0 0
    %234 = vmatprep.subr.bf16.mxu0 0
    %235 = vmatpush1.bf16.msra.mxu0 0
    %236 = vmatprep.mubr.bf16.mxu0 0
    %237 = vmatmul.mubr.bf16.gmra.mrb[0].mxu0 %v198
    %v238 = vpop.f32.mrb[0].mxu0
    %v239 = vadd.f32 %v151, %v238
    %v240 = vpop.f32.mrb[0].mxu0
    %v241 = vpop.f32.mrb[0].mxu0
    %v242 = vadd.f32 %v154, %v241
    %v243 = vpop.f32.mrb[0].mxu0
    %244 = vdwg.mxu0
    %245 = vset.pattern.permute.xlu0 2
    %246 = vperm.xlu0 %245, %v61
    %v247 = vpop.permute.xlu0 %246
    %248 = vset.pattern.permute.xlu0 2
    %249 = vperm.xlu0 %248, %v62
    %v250 = vpop.permute.xlu0 %249
    %vm251 = vcmp.eq.s32.totalorder %v64, %v247
    %vm252 = vcmp.eq.s32.totalorder %v64, %v250
    %v253 = vsel %vm251, 1, 0
    %v254 = vsel %vm252, 1, 0
    %v255 = vcvt.s32.f32 %v253
    %v256 = vcvt.s32.f32 %v254
    %v257 = vpack.c.bf16 %v256, %v255
    %v258 = vld [vmem:[%s5] sm:$0x1]
    %vm259 = vcmask 15360
    %v261 = vsel %vm259, %v257, 0
    %vm263 = vcmask 1040384
    %v265 = vsel %vm263, %v258, 0
    %267 = vmatprep.subr.bf16.mxu0 0
    %268 = vmatpush1.bf16.msra.mxu0 %v265
    %269 = vmatprep.subr.bf16.mxu0 0
    %270 = vmatpush1.bf16.msra.mxu0 0
    %271 = vmatprep.subr.bf16.mxu0 0
    %272 = vmatpush1.bf16.msra.mxu0 0
    %273 = vmatprep.subr.bf16.mxu0 0
    %274 = vmatpush1.bf16.msra.mxu0 0
    %275 = vmatprep.subr.bf16.mxu0 0
    %276 = vmatpush1.bf16.msra.mxu0 0
    %277 = vmatprep.subr.bf16.mxu0 0
    %278 = vmatpush1.bf16.msra.mxu0 0
    %279 = vmatprep.subr.bf16.mxu0 0
    %280 = vmatpush1.bf16.msra.mxu0 0
    %281 = vmatprep.subr.bf16.mxu0 0
    %282 = vmatpush1.bf16.msra.mxu0 0
    %283 = vmatprep.subr.bf16.mxu0 0
    %284 = vmatpush1.bf16.msra.mxu0 0
    %285 = vmatprep.subr.bf16.mxu0 0
    %286 = vmatpush1.bf16.msra.mxu0 0
    %287 = vmatprep.subr.bf16.mxu0 0
    %288 = vmatpush1.bf16.msra.mxu0 0
    %289 = vmatprep.subr.bf16.mxu0 0
    %290 = vmatpush1.bf16.msra.mxu0 0
    %291 = vmatprep.subr.bf16.mxu0 0
    %292 = vmatpush1.bf16.msra.mxu0 0
    %293 = vmatprep.subr.bf16.mxu0 0
    %294 = vmatpush1.bf16.msra.mxu0 0
    %295 = vmatprep.subr.bf16.mxu0 0
    %296 = vmatpush1.bf16.msra.mxu0 0
    %297 = vmatprep.subr.bf16.mxu0 0
    %298 = vmatpush1.bf16.msra.mxu0 0
    %299 = vmatprep.mubr.bf16.mxu0 0
    %300 = vmatmul.mubr.bf16.gmra.mrb[0].mxu0 %v261
    %v301 = vpop.f32.mrb[0].mxu0
    %v302 = vadd.f32 0.0, %v301
    %v303 = vpop.f32.mrb[0].mxu0
    %v304 = vpop.f32.mrb[0].mxu0
    %v305 = vadd.f32 0.0, %v304
    %v306 = vpop.f32.mrb[0].mxu0
    %307 = vdwg.mxu0
    %v308 = vadd.f32 %v239, %v302
    %v309 = vadd.f32 %v242, %v305
    %v310 = vld [vmem:[%s6] sm:$0x1]
    %v311 = vld [vmem:[%s6 + $0x1] sm:$0x1]
    %vm312 = vcmask 261120
    %v313 = vsel %vm312, %v308, 0.0
    %314 = vadd.xlane.f32.xlu0 %v313
    %v315 = vpop.xlane.xlu0 %314
    %v316 = vsel %vm312, %v309, 0.0
    %317 = vadd.xlane.f32.xlu0 %v316
    %v318 = vpop.xlane.xlu0 %317
    %v319 = vrcp.pop 32.0
    %v320 = vmul.f32 %v315, %v319
    %v321 = vmul.f32 %v318, %v319
    %v322 = vsub.f32 %v308, %v320
    %v323 = vsub.f32 %v309, %v321
    %v324 = vmul.f32 %v322, %v322
    %v325 = vmul.f32 %v323, %v323
    %v326 = vsel %vm312, %v324, 0.0
    %327 = vadd.xlane.f32.xlu0 %v326
    %v328 = vpop.xlane.xlu0 %327
    %v329 = vsel %vm312, %v325, 0.0
    %330 = vadd.xlane.f32.xlu0 %v329
    %v331 = vpop.xlane.xlu0 %330
    %v332 = vmul.f32 %v328, %v319
    %v333 = vmul.f32 %v331, %v319
    %v334 = vadd.f32 %v332, 1e-05
    %v335 = vadd.f32 %v333, 1e-05
    %v336 = vrsqrt.pop %v334
    %v337 = vrsqrt.pop %v335
    %v338 = vmul.f32 %v322, %v336
    %v339 = vmul.f32 %v323, %v337
    %v340 = vlaneseq
    %v341 = vshrl.u32 %v340, 7
    %v342 = vsub.s32 0, %v341
    %v343 = vrot.slane %v310, %v342
    %v344 = vmul.f32 %v338, %v343
    %v345 = vmul.f32 %v339, %v343
    %v346 = vlaneseq
    %v347 = vshrl.u32 %v346, 7
    %v348 = vsub.s32 0, %v347
    %v349 = vrot.slane %v311, %v348
    %v350 = vadd.f32 %v344, %v349
    %v351 = vadd.f32 %v345, %v349
    %v352 = vld [vmem:[%s1] sm:$0x3]
    %v353 = vsub.f32 1.0, %v352
    %v354 = vmul.f32 %v353, -1e+09
    %v355 = vld [vmem:[%s11] sm:$0xff]
    %v356 = vld [vmem:[%s11 + $0x8] sm:$0x1]
    %v357 = vpack.c.bf16 %v351, %v350
    %v358 = vld [vmem:[%s7] sm:$0xf]
    %v359 = vld [vmem:[%s7 + $0x4] sm:$0xf]
    %v360 = vld [vmem:[%s7 + $0x8] sm:$0xf]
    %v361 = vld [vmem:[%s7 + $0xc] sm:$0xf]
    %v366 = vunpack.c.l.b16 %v358
    %v367 = vunpack.c.l.b16 %v359
    %v368 = vunpack.c.l.b16 %v360
    %v369 = vunpack.c.l.b16 %v361
    %v370 = vpack.c.b16 %v367, %v366
    %v371 = vpack.c.b16 %v369, %v368
    %v375 = vsel %vm312, %v357, 0
    %377 = vmatprep.subr.bf16.mxu0 0
    %378 = vmatpush1.bf16.msra.mxu0 %v370
    %379 = vmatprep.subr.bf16.mxu0 0
    %380 = vmatpush1.bf16.msra.mxu0 %v371
    %381 = vmatprep.subr.bf16.mxu0 0
    %382 = vmatpush1.bf16.msra.mxu0 0
    %383 = vmatprep.subr.bf16.mxu0 0
    %384 = vmatpush1.bf16.msra.mxu0 0
    %385 = vmatprep.subr.bf16.mxu0 0
    %386 = vmatpush1.bf16.msra.mxu0 0
    %387 = vmatprep.subr.bf16.mxu0 0
    %388 = vmatpush1.bf16.msra.mxu0 0
    %389 = vmatprep.subr.bf16.mxu0 0
    %390 = vmatpush1.bf16.msra.mxu0 0
    %391 = vmatprep.subr.bf16.mxu0 0
    %392 = vmatpush1.bf16.msra.mxu0 0
    %393 = vmatprep.subr.bf16.mxu0 0
    %394 = vmatpush1.bf16.msra.mxu0 0
    %395 = vmatprep.subr.bf16.mxu0 0
    %396 = vmatpush1.bf16.msra.mxu0 0
    %397 = vmatprep.subr.bf16.mxu0 0
    %398 = vmatpush1.bf16.msra.mxu0 0
    %399 = vmatprep.subr.bf16.mxu0 0
    %400 = vmatpush1.bf16.msra.mxu0 0
    %401 = vmatprep.subr.bf16.mxu0 0
    %402 = vmatpush1.bf16.msra.mxu0 0
    %403 = vmatprep.subr.bf16.mxu0 0
    %404 = vmatpush1.bf16.msra.mxu0 0
    %405 = vmatprep.subr.bf16.mxu0 0
    %406 = vmatpush1.bf16.msra.mxu0 0
    %407 = vmatprep.subr.bf16.mxu0 0
    %408 = vmatpush1.bf16.msra.mxu0 0
    %409 = vmatprep.mubr.bf16.mxu0 0
    %410 = vmatmul.mubr.bf16.gmra.mrb[0].mxu0 %v375
    %v411 = vpop.f32.mrb[0].mxu0
    %v412 = vadd.f32 0.0, %v411
    %v413 = vpop.f32.mrb[0].mxu0
    %v414 = vpop.f32.mrb[0].mxu0
    %v415 = vadd.f32 0.0, %v414
    %v416 = vpop.f32.mrb[0].mxu0
    %417 = vdwg.mxu0
    %v418 = vlaneseq
    %v419 = vshrl.u32 %v418, 7
    %v420 = vsub.s32 0, %v419
    %v421 = vrot.slane %v355, %v420
    %v422 = vadd.f32 %v412, %v421
    %v423 = vadd.f32 %v415, %v421
    %v424 = vlaneseq
    %v425 = vshrl.u32 %v424, 7
    %v426 = vsub.s32 1, %v425
    %v427 = vrot.slane %v355, %v426
    %429 = vrot.lane.b32.xlu0 %v427, 32
    %v430 = vpop.permute.xlu0 %429
    %v432 = vadd.f32 %v412, %v430
    %v433 = vadd.f32 %v415, %v430
    %v434 = vlaneseq
    %v435 = vshrl.u32 %v434, 7
    %v436 = vsub.s32 2, %v435
    %v437 = vrot.slane %v355, %v436
    %439 = vrot.lane.b32.xlu0 %v437, 64
    %v440 = vpop.permute.xlu0 %439
    %v442 = vadd.f32 %v412, %v440
    %v443 = vadd.f32 %v415, %v440
    %445 = vrot.lane.b32.xlu0 %v432, 96
    %v446 = vpop.permute.xlu0 %445
    %vm447 = vcmask 64512
    %v449 = vsel %vm447, %v422, 0
    %v451 = vsel %vm447, %v446, 0
    %453 = vmatprep.subr.mxu0 0.0
    %454 = vmatpush1.xpose.msra.mxu0 %v451
    %455 = vmatprep.subr.mxu0 0.0
    %456 = vmatpush1.xpose.msra.mxu0 0.0
    %457 = vmatprep.subr.mxu0 0.0
    %458 = vmatpush1.xpose.msra.mxu0 0.0
    %459 = vmatprep.subr.mxu0 0.0
    %460 = vmatpush1.xpose.msra.mxu0 0.0
    %461 = vmatprep.subr.mxu0 0.0
    %462 = vmatpush1.xpose.msra.mxu0 0.0
    %463 = vmatprep.subr.mxu0 0.0
    %464 = vmatpush1.xpose.msra.mxu0 0.0
    %465 = vmatprep.subr.mxu0 0.0
    %466 = vmatpush1.xpose.msra.mxu0 0.0
    %467 = vmatprep.subr.mxu0 0.0
    %468 = vmatpush1.xpose.msra.mxu0 0.0
    %469 = vmatprep.subr.mxu0 0.0
    %470 = vmatpush1.xpose.msra.mxu0 0.0
    %471 = vmatprep.subr.mxu0 0.0
    %472 = vmatpush1.xpose.msra.mxu0 0.0
    %473 = vmatprep.subr.mxu0 0.0
    %474 = vmatpush1.xpose.msra.mxu0 0.0
    %475 = vmatprep.subr.mxu0 0.0
    %476 = vmatpush1.xpose.msra.mxu0 0.0
    %477 = vmatprep.subr.mxu0 0.0
    %478 = vmatpush1.xpose.msra.mxu0 0.0
    %479 = vmatprep.subr.mxu0 0.0
    %480 = vmatpush1.xpose.msra.mxu0 0.0
    %481 = vmatprep.subr.mxu0 0.0
    %482 = vmatpush1.xpose.msra.mxu0 0.0
    %483 = vmatprep.subr.mxu0 0.0
    %484 = vmatpush1.xpose.msra.mxu0 0.0
    %485 = vmatprep.subr.mxu0 0.0
    %486 = vmatpush1.xpose.msra.mxu0 0.0
    %487 = vmatprep.subr.mxu0 0.0
    %488 = vmatpush1.xpose.msra.mxu0 0.0
    %489 = vmatprep.subr.mxu0 0.0
    %490 = vmatpush1.xpose.msra.mxu0 0.0
    %491 = vmatprep.subr.mxu0 0.0
    %492 = vmatpush1.xpose.msra.mxu0 0.0
    %493 = vmatprep.subr.mxu0 0.0
    %494 = vmatpush1.xpose.msra.mxu0 0.0
    %495 = vmatprep.subr.mxu0 0.0
    %496 = vmatpush1.xpose.msra.mxu0 0.0
    %497 = vmatprep.subr.mxu0 0.0
    %498 = vmatpush1.xpose.msra.mxu0 0.0
    %499 = vmatprep.subr.mxu0 0.0
    %500 = vmatpush1.xpose.msra.mxu0 0.0
    %501 = vmatprep.subr.mxu0 0.0
    %502 = vmatpush1.xpose.msra.mxu0 0.0
    %503 = vmatprep.subr.mxu0 0.0
    %504 = vmatpush1.xpose.msra.mxu0 0.0
    %505 = vmatprep.subr.mxu0 0.0
    %506 = vmatpush1.xpose.msra.mxu0 0.0
    %507 = vmatprep.subr.mxu0 0.0
    %508 = vmatpush1.xpose.msra.mxu0 0.0
    %509 = vmatprep.subr.mxu0 0.0
    %510 = vmatpush1.xpose.msra.mxu0 0.0
    %511 = vmatprep.subr.mxu0 0.0
    %512 = vmatpush1.xpose.msra.mxu0 0.0
    %513 = vmatprep.subr.mxu0 0.0
    %514 = vmatpush1.xpose.msra.mxu0 0.0
    %515 = vmatprep.subr.mxu0 0.0
    %516 = vmatpush1.xpose.msra.mxu0 0.0
    %517 = vmatprep.mubr.f32.mxu0 0.0
    %518 = vmatmul.mubr.f32.gmra.mrb[0].mxu0 %v449
    %v519 = vpop.f32.mrb[0].mxu0
    %v520 = vadd.f32 0.0, %v519
    %v521 = vpop.f32.mrb[0].mxu0
    %522 = vdwg.mxu0
    %v523 = vmul.f32 %v520, 0.35355338
    %v524 = vlaneseq
    %v525 = vshrl.u32 %v524, 7
    %v526 = vsub.s32 0, %v525
    %v527 = vrot.slane %v354, %v526
    %v528 = vadd.f32 %v523, %v527
    %v529 = vsel %vm447, %v528, -inf
    %530 = vmax.xlane.f32.xlu0 %v529
    %v531 = vpop.xlane.xlu0 %530
    %v532 = vsub.f32 %v528, %v531
    %v533 = vmul.f32 %v532, 1.442695
    %v534 = vpow.pop %v533
    %v535 = vsel %vm447, %v534, 0.0
    %536 = vadd.xlane.f32.xlu0 %v535
    %v537 = vpop.xlane.xlu0 %536
    %v538 = vrcp.pop %v537
    %v539 = vmul.f32 %v534, %v538
    %541 = vrot.lane.b32.xlu0 %v442, 64
    %v542 = vpop.permute.xlu0 %541
    %v545 = vsel %vm447, %v539, 0
    %547 = vmatprep.subr.mxu0 0.0
    %548 = vmatpush1.msra.mxu0 %v542
    %549 = vmatprep.subr.mxu0 0.0
    %550 = vmatpush1.msra.mxu0 0.0
    %551 = vmatprep.subr.mxu0 0.0
    %552 = vmatpush1.msra.mxu0 0.0
    %553 = vmatprep.subr.mxu0 0.0
    %554 = vmatpush1.msra.mxu0 0.0
    %555 = vmatprep.subr.mxu0 0.0
    %556 = vmatpush1.msra.mxu0 0.0
    %557 = vmatprep.subr.mxu0 0.0
    %558 = vmatpush1.msra.mxu0 0.0
    %559 = vmatprep.subr.mxu0 0.0
    %560 = vmatpush1.msra.mxu0 0.0
    %561 = vmatprep.subr.mxu0 0.0
    %562 = vmatpush1.msra.mxu0 0.0
    %563 = vmatprep.subr.mxu0 0.0
    %564 = vmatpush1.msra.mxu0 0.0
    %565 = vmatprep.subr.mxu0 0.0
    %566 = vmatpush1.msra.mxu0 0.0
    %567 = vmatprep.subr.mxu0 0.0
    %568 = vmatpush1.msra.mxu0 0.0
    %569 = vmatprep.subr.mxu0 0.0
    %570 = vmatpush1.msra.mxu0 0.0
    %571 = vmatprep.subr.mxu0 0.0
    %572 = vmatpush1.msra.mxu0 0.0
    %573 = vmatprep.subr.mxu0 0.0
    %574 = vmatpush1.msra.mxu0 0.0
    %575 = vmatprep.subr.mxu0 0.0
    %576 = vmatpush1.msra.mxu0 0.0
    %577 = vmatprep.subr.mxu0 0.0
    %578 = vmatpush1.msra.mxu0 0.0
    %579 = vmatprep.subr.mxu0 0.0
    %580 = vmatpush1.msra.mxu0 0.0
    %581 = vmatprep.subr.mxu0 0.0
    %582 = vmatpush1.msra.mxu0 0.0
    %583 = vmatprep.subr.mxu0 0.0
    %584 = vmatpush1.msra.mxu0 0.0
    %585 = vmatprep.subr.mxu0 0.0
    %586 = vmatpush1.msra.mxu0 0.0
    %587 = vmatprep.subr.mxu0 0.0
    %588 = vmatpush1.msra.mxu0 0.0
    %589 = vmatprep.subr.mxu0 0.0
    %590 = vmatpush1.msra.mxu0 0.0
    %591 = vmatprep.subr.mxu0 0.0
    %592 = vmatpush1.msra.mxu0 0.0
    %593 = vmatprep.subr.mxu0 0.0
    %594 = vmatpush1.msra.mxu0 0.0
    %595 = vmatprep.subr.mxu0 0.0
    %596 = vmatpush1.msra.mxu0 0.0
    %597 = vmatprep.subr.mxu0 0.0
    %598 = vmatpush1.msra.mxu0 0.0
    %599 = vmatprep.subr.mxu0 0.0
    %600 = vmatpush1.msra.mxu0 0.0
    %601 = vmatprep.subr.mxu0 0.0
    %602 = vmatpush1.msra.mxu0 0.0
    %603 = vmatprep.subr.mxu0 0.0
    %604 = vmatpush1.msra.mxu0 0.0
    %605 = vmatprep.subr.mxu0 0.0
    %606 = vmatpush1.msra.mxu0 0.0
    %607 = vmatprep.subr.mxu0 0.0
    %608 = vmatpush1.msra.mxu0 0.0
    %609 = vmatprep.subr.mxu0 0.0
    %610 = vmatpush1.msra.mxu0 0.0
    %611 = vmatprep.mubr.f32.mxu0 0.0
    %612 = vmatmul.mubr.f32.gmra.mrb[0].mxu0 %v545
    %v613 = vpop.f32.mrb[0].mxu0
    %v614 = vadd.f32 0.0, %v613
    %v615 = vpop.f32.mrb[0].mxu0
    %616 = vdwg.mxu0
    %617 = vst.msk [vmem:[#allocation2] sm:$0xff] %vm447, %v614
    %618 = vrot.lane.b32.xlu0 %v422, 120
    %v619 = vpop.permute.xlu0 %618
    %620 = vrot.lane.b32.xlu0 %v432, 88
    %v621 = vpop.permute.xlu0 %620
    %v622 = vsel %vm447, %v619, 0
    %v624 = vsel %vm447, %v621, 0
    %626 = vmatprep.subr.mxu0 0.0
    %627 = vmatpush1.xpose.msra.mxu0 %v624
    %628 = vmatprep.subr.mxu0 0.0
    %629 = vmatpush1.xpose.msra.mxu0 0.0
    %630 = vmatprep.subr.mxu0 0.0
    %631 = vmatpush1.xpose.msra.mxu0 0.0
    %632 = vmatprep.subr.mxu0 0.0
    %633 = vmatpush1.xpose.msra.mxu0 0.0
    %634 = vmatprep.subr.mxu0 0.0
    %635 = vmatpush1.xpose.msra.mxu0 0.0
    %636 = vmatprep.subr.mxu0 0.0
    %637 = vmatpush1.xpose.msra.mxu0 0.0
    %638 = vmatprep.subr.mxu0 0.0
    %639 = vmatpush1.xpose.msra.mxu0 0.0
    %640 = vmatprep.subr.mxu0 0.0
    %641 = vmatpush1.xpose.msra.mxu0 0.0
    %642 = vmatprep.subr.mxu0 0.0
    %643 = vmatpush1.xpose.msra.mxu0 0.0
    %644 = vmatprep.subr.mxu0 0.0
    %645 = vmatpush1.xpose.msra.mxu0 0.0
    %646 = vmatprep.subr.mxu0 0.0
    %647 = vmatpush1.xpose.msra.mxu0 0.0
    %648 = vmatprep.subr.mxu0 0.0
    %649 = vmatpush1.xpose.msra.mxu0 0.0
    %650 = vmatprep.subr.mxu0 0.0
    %651 = vmatpush1.xpose.msra.mxu0 0.0
    %652 = vmatprep.subr.mxu0 0.0
    %653 = vmatpush1.xpose.msra.mxu0 0.0
    %654 = vmatprep.subr.mxu0 0.0
    %655 = vmatpush1.xpose.msra.mxu0 0.0
    %656 = vmatprep.subr.mxu0 0.0
    %657 = vmatpush1.xpose.msra.mxu0 0.0
    %658 = vmatprep.subr.mxu0 0.0
    %659 = vmatpush1.xpose.msra.mxu0 0.0
    %660 = vmatprep.subr.mxu0 0.0
    %661 = vmatpush1.xpose.msra.mxu0 0.0
    %662 = vmatprep.subr.mxu0 0.0
    %663 = vmatpush1.xpose.msra.mxu0 0.0
    %664 = vmatprep.subr.mxu0 0.0
    %665 = vmatpush1.xpose.msra.mxu0 0.0
    %666 = vmatprep.subr.mxu0 0.0
    %667 = vmatpush1.xpose.msra.mxu0 0.0
    %668 = vmatprep.subr.mxu0 0.0
    %669 = vmatpush1.xpose.msra.mxu0 0.0
    %670 = vmatprep.subr.mxu0 0.0
    %671 = vmatpush1.xpose.msra.mxu0 0.0
    %672 = vmatprep.subr.mxu0 0.0
    %673 = vmatpush1.xpose.msra.mxu0 0.0
    %674 = vmatprep.subr.mxu0 0.0
    %675 = vmatpush1.xpose.msra.mxu0 0.0
    %676 = vmatprep.subr.mxu0 0.0
    %677 = vmatpush1.xpose.msra.mxu0 0.0
    %678 = vmatprep.subr.mxu0 0.0
    %679 = vmatpush1.xpose.msra.mxu0 0.0
    %680 = vmatprep.subr.mxu0 0.0
    %681 = vmatpush1.xpose.msra.mxu0 0.0
    %682 = vmatprep.subr.mxu0 0.0
    %683 = vmatpush1.xpose.msra.mxu0 0.0
    %684 = vmatprep.subr.mxu0 0.0
    %685 = vmatpush1.xpose.msra.mxu0 0.0
    %686 = vmatprep.subr.mxu0 0.0
    %687 = vmatpush1.xpose.msra.mxu0 0.0
    %688 = vmatprep.subr.mxu0 0.0
    %689 = vmatpush1.xpose.msra.mxu0 0.0
    %690 = vmatprep.mubr.f32.mxu0 0.0
    %691 = vmatmul.mubr.f32.gmra.mrb[0].mxu0 %v622
    %v692 = vpop.f32.mrb[0].mxu0
    %v693 = vadd.f32 0.0, %v692
    %v694 = vpop.f32.mrb[0].mxu0
    %695 = vdwg.mxu0
    %v696 = vmul.f32 %v693, 0.35355338
    %v697 = vadd.f32 %v696, %v527
    %v698 = vsel %vm447, %v697, -inf
    %699 = vmax.xlane.f32.xlu0 %v698
    %v700 = vpop.xlane.xlu0 %699
    %v701 = vsub.f32 %v697, %v700
    %v702 = vmul.f32 %v701, 1.442695
    %v703 = vpow.pop %v702
    %v704 = vsel %vm447, %v703, 0.0
    %705 = vadd.xlane.f32.xlu0 %v704
    %v706 = vpop.xlane.xlu0 %705
    %v707 = vrcp.pop %v706
    %v708 = vmul.f32 %v703, %v707
    %709 = vrot.lane.b32.xlu0 %v442, 56
    %v710 = vpop.permute.xlu0 %709
    %v713 = vsel %vm447, %v708, 0
    %715 = vmatprep.subr.mxu0 0.0
    %716 = vmatpush1.msra.mxu0 %v710
    %717 = vmatprep.subr.mxu0 0.0
    %718 = vmatpush1.msra.mxu0 0.0
    %719 = vmatprep.subr.mxu0 0.0
    %720 = vmatpush1.msra.mxu0 0.0
    %721 = vmatprep.subr.mxu0 0.0
    %722 = vmatpush1.msra.mxu0 0.0
    %723 = vmatprep.subr.mxu0 0.0
    %724 = vmatpush1.msra.mxu0 0.0
    %725 = vmatprep.subr.mxu0 0.0
    %726 = vmatpush1.msra.mxu0 0.0
    %727 = vmatprep.subr.mxu0 0.0
    %728 = vmatpush1.msra.mxu0 0.0
    %729 = vmatprep.subr.mxu0 0.0
    %730 = vmatpush1.msra.mxu0 0.0
    %731 = vmatprep.subr.mxu0 0.0
    %732 = vmatpush1.msra.mxu0 0.0
    %733 = vmatprep.subr.mxu0 0.0
    %734 = vmatpush1.msra.mxu0 0.0
    %735 = vmatprep.subr.mxu0 0.0
    %736 = vmatpush1.msra.mxu0 0.0
    %737 = vmatprep.subr.mxu0 0.0
    %738 = vmatpush1.msra.mxu0 0.0
    %739 = vmatprep.subr.mxu0 0.0
    %740 = vmatpush1.msra.mxu0 0.0
    %741 = vmatprep.subr.mxu0 0.0
    %742 = vmatpush1.msra.mxu0 0.0
    %743 = vmatprep.subr.mxu0 0.0
    %744 = vmatpush1.msra.mxu0 0.0
    %745 = vmatprep.subr.mxu0 0.0
    %746 = vmatpush1.msra.mxu0 0.0
    %747 = vmatprep.subr.mxu0 0.0
    %748 = vmatpush1.msra.mxu0 0.0
    %749 = vmatprep.subr.mxu0 0.0
    %750 = vmatpush1.msra.mxu0 0.0
    %751 = vmatprep.subr.mxu0 0.0
    %752 = vmatpush1.msra.mxu0 0.0
    %753 = vmatprep.subr.mxu0 0.0
    %754 = vmatpush1.msra.mxu0 0.0
    %755 = vmatprep.subr.mxu0 0.0
    %756 = vmatpush1.msra.mxu0 0.0
    %757 = vmatprep.subr.mxu0 0.0
    %758 = vmatpush1.msra.mxu0 0.0
    %759 = vmatprep.subr.mxu0 0.0
    %760 = vmatpush1.msra.mxu0 0.0
    %761 = vmatprep.subr.mxu0 0.0
    %762 = vmatpush1.msra.mxu0 0.0
    %763 = vmatprep.subr.mxu0 0.0
    %764 = vmatpush1.msra.mxu0 0.0
    %765 = vmatprep.subr.mxu0 0.0
    %766 = vmatpush1.msra.mxu0 0.0
    %767 = vmatprep.subr.mxu0 0.0
    %768 = vmatpush1.msra.mxu0 0.0
    %769 = vmatprep.subr.mxu0 0.0
    %770 = vmatpush1.msra.mxu0 0.0
    %771 = vmatprep.subr.mxu0 0.0
    %772 = vmatpush1.msra.mxu0 0.0
    %773 = vmatprep.subr.mxu0 0.0
    %774 = vmatpush1.msra.mxu0 0.0
    %775 = vmatprep.subr.mxu0 0.0
    %776 = vmatpush1.msra.mxu0 0.0
    %777 = vmatprep.subr.mxu0 0.0
    %778 = vmatpush1.msra.mxu0 0.0
    %779 = vmatprep.mubr.f32.mxu0 0.0
    %780 = vmatmul.mubr.f32.gmra.mrb[0].mxu0 %v713
    %v781 = vpop.f32.mrb[0].mxu0
    %v782 = vadd.f32 0.0, %v781
    %v783 = vpop.f32.mrb[0].mxu0
    %784 = vdwg.mxu0
    %786 = vrot.lane.b32.xlu0 %v782, 8
    %v787 = vpop.permute.xlu0 %786
    %vm789 = vcmask 130112
    %790 = vst.msk [vmem:[#allocation2] sm:$0xff] %vm789, %v787
    %791 = vrot.lane.b32.xlu0 %v422, 112
    %v792 = vpop.permute.xlu0 %791
    %793 = vrot.lane.b32.xlu0 %v432, 80
    %v794 = vpop.permute.xlu0 %793
    %v795 = vsel %vm447, %v792, 0
    %v797 = vsel %vm447, %v794, 0
    %799 = vmatprep.subr.mxu0 0.0
    %800 = vmatpush1.xpose.msra.mxu0 %v797
    %801 = vmatprep.subr.mxu0 0.0
    %802 = vmatpush1.xpose.msra.mxu0 0.0
    %803 = vmatprep.subr.mxu0 0.0
    %804 = vmatpush1.xpose.msra.mxu0 0.0
    %805 = vmatprep.subr.mxu0 0.0
    %806 = vmatpush1.xpose.msra.mxu0 0.0
    %807 = vmatprep.subr.mxu0 0.0
    %808 = vmatpush1.xpose.msra.mxu0 0.0
    %809 = vmatprep.subr.mxu0 0.0
    %810 = vmatpush1.xpose.msra.mxu0 0.0
    %811 = vmatprep.subr.mxu0 0.0
    %812 = vmatpush1.xpose.msra.mxu0 0.0
    %813 = vmatprep.subr.mxu0 0.0
    %814 = vmatpush1.xpose.msra.mxu0 0.0
    %815 = vmatprep.subr.mxu0 0.0
    %816 = vmatpush1.xpose.msra.mxu0 0.0
    %817 = vmatprep.subr.mxu0 0.0
    %818 = vmatpush1.xpose.msra.mxu0 0.0
    %819 = vmatprep.subr.mxu0 0.0
    %820 = vmatpush1.xpose.msra.mxu0 0.0
    %821 = vmatprep.subr.mxu0 0.0
    %822 = vmatpush1.xpose.msra.mxu0 0.0
    %823 = vmatprep.subr.mxu0 0.0
    %824 = vmatpush1.xpose.msra.mxu0 0.0
    %825 = vmatprep.subr.mxu0 0.0
    %826 = vmatpush1.xpose.msra.mxu0 0.0
    %827 = vmatprep.subr.mxu0 0.0
    %828 = vmatpush1.xpose.msra.mxu0 0.0
    %829 = vmatprep.subr.mxu0 0.0
    %830 = vmatpush1.xpose.msra.mxu0 0.0
    %831 = vmatprep.subr.mxu0 0.0
    %832 = vmatpush1.xpose.msra.mxu0 0.0
    %833 = vmatprep.subr.mxu0 0.0
    %834 = vmatpush1.xpose.msra.mxu0 0.0
    %835 = vmatprep.subr.mxu0 0.0
    %836 = vmatpush1.xpose.msra.mxu0 0.0
    %837 = vmatprep.subr.mxu0 0.0
    %838 = vmatpush1.xpose.msra.mxu0 0.0
    %839 = vmatprep.subr.mxu0 0.0
    %840 = vmatpush1.xpose.msra.mxu0 0.0
    %841 = vmatprep.subr.mxu0 0.0
    %842 = vmatpush1.xpose.msra.mxu0 0.0
    %843 = vmatprep.subr.mxu0 0.0
    %844 = vmatpush1.xpose.msra.mxu0 0.0
    %845 = vmatprep.subr.mxu0 0.0
    %846 = vmatpush1.xpose.msra.mxu0 0.0
    %847 = vmatprep.subr.mxu0 0.0
    %848 = vmatpush1.xpose.msra.mxu0 0.0
    %849 = vmatprep.subr.mxu0 0.0
    %850 = vmatpush1.xpose.msra.mxu0 0.0
    %851 = vmatprep.subr.mxu0 0.0
    %852 = vmatpush1.xpose.msra.mxu0 0.0
    %853 = vmatprep.subr.mxu0 0.0
    %854 = vmatpush1.xpose.msra.mxu0 0.0
    %855 = vmatprep.subr.mxu0 0.0
    %856 = vmatpush1.xpose.msra.mxu0 0.0
    %857 = vmatprep.subr.mxu0 0.0
    %858 = vmatpush1.xpose.msra.mxu0 0.0
    %859 = vmatprep.subr.mxu0 0.0
    %860 = vmatpush1.xpose.msra.mxu0 0.0
    %861 = vmatprep.subr.mxu0 0.0
    %862 = vmatpush1.xpose.msra.mxu0 0.0
    %863 = vmatprep.mubr.f32.mxu0 0.0
    %864 = vmatmul.mubr.f32.gmra.mrb[0].mxu0 %v795
    %v865 = vpop.f32.mrb[0].mxu0
    %v866 = vadd.f32 0.0, %v865
    %v867 = vpop.f32.mrb[0].mxu0
    %868 = vdwg.mxu0
    %v869 = vmul.f32 %v866, 0.35355338
    %v870 = vadd.f32 %v869, %v527
    %v871 = vsel %vm447, %v870, -inf
    %872 = vmax.xlane.f32.xlu0 %v871
    %v873 = vpop.xlane.xlu0 %872
    %v874 = vsub.f32 %v870, %v873
    %v875 = vmul.f32 %v874, 1.442695
    %v876 = vpow.pop %v875
    %v877 = vsel %vm447, %v876, 0.0
    %878 = vadd.xlane.f32.xlu0 %v877
    %v879 = vpop.xlane.xlu0 %878
    %v880 = vrcp.pop %v879
    %v881 = vmul.f32 %v876, %v880
    %882 = vrot.lane.b32.xlu0 %v442, 48
    %v883 = vpop.permute.xlu0 %882
    %v886 = vsel %vm447, %v881, 0
    %888 = vmatprep.subr.mxu0 0.0
    %889 = vmatpush1.msra.mxu0 %v883
    %890 = vmatprep.subr.mxu0 0.0
    %891 = vmatpush1.msra.mxu0 0.0
    %892 = vmatprep.subr.mxu0 0.0
    %893 = vmatpush1.msra.mxu0 0.0
    %894 = vmatprep.subr.mxu0 0.0
    %895 = vmatpush1.msra.mxu0 0.0
    %896 = vmatprep.subr.mxu0 0.0
    %897 = vmatpush1.msra.mxu0 0.0
    %898 = vmatprep.subr.mxu0 0.0
    %899 = vmatpush1.msra.mxu0 0.0
    %900 = vmatprep.subr.mxu0 0.0
    %901 = vmatpush1.msra.mxu0 0.0
    %902 = vmatprep.subr.mxu0 0.0
    %903 = vmatpush1.msra.mxu0 0.0
    %904 = vmatprep.subr.mxu0 0.0
    %905 = vmatpush1.msra.mxu0 0.0
    %906 = vmatprep.subr.mxu0 0.0
    %907 = vmatpush1.msra.mxu0 0.0
    %908 = vmatprep.subr.mxu0 0.0
    %909 = vmatpush1.msra.mxu0 0.0
    %910 = vmatprep.subr.mxu0 0.0
    %911 = vmatpush1.msra.mxu0 0.0
    %912 = vmatprep.subr.mxu0 0.0
    %913 = vmatpush1.msra.mxu0 0.0
    %914 = vmatprep.subr.mxu0 0.0
    %915 = vmatpush1.msra.mxu0 0.0
    %916 = vmatprep.subr.mxu0 0.0
    %917 = vmatpush1.msra.mxu0 0.0
    %918 = vmatprep.subr.mxu0 0.0
    %919 = vmatpush1.msra.mxu0 0.0
    %920 = vmatprep.subr.mxu0 0.0
    %921 = vmatpush1.msra.mxu0 0.0
    %922 = vmatprep.subr.mxu0 0.0
    %923 = vmatpush1.msra.mxu0 0.0
    %924 = vmatprep.subr.mxu0 0.0
    %925 = vmatpush1.msra.mxu0 0.0
    %926 = vmatprep.subr.mxu0 0.0
    %927 = vmatpush1.msra.mxu0 0.0
    %928 = vmatprep.subr.mxu0 0.0
    %929 = vmatpush1.msra.mxu0 0.0
    %930 = vmatprep.subr.mxu0 0.0
    %931 = vmatpush1.msra.mxu0 0.0
    %932 = vmatprep.subr.mxu0 0.0
    %933 = vmatpush1.msra.mxu0 0.0
    %934 = vmatprep.subr.mxu0 0.0
    %935 = vmatpush1.msra.mxu0 0.0
    %936 = vmatprep.subr.mxu0 0.0
    %937 = vmatpush1.msra.mxu0 0.0
    %938 = vmatprep.subr.mxu0 0.0
    %939 = vmatpush1.msra.mxu0 0.0
    %940 = vmatprep.subr.mxu0 0.0
    %941 = vmatpush1.msra.mxu0 0.0
    %942 = vmatprep.subr.mxu0 0.0
    %943 = vmatpush1.msra.mxu0 0.0
    %944 = vmatprep.subr.mxu0 0.0
    %945 = vmatpush1.msra.mxu0 0.0
    %946 = vmatprep.subr.mxu0 0.0
    %947 = vmatpush1.msra.mxu0 0.0
    %948 = vmatprep.subr.mxu0 0.0
    %949 = vmatpush1.msra.mxu0 0.0
    %950 = vmatprep.subr.mxu0 0.0
    %951 = vmatpush1.msra.mxu0 0.0
    %952 = vmatprep.mubr.f32.mxu0 0.0
    %953 = vmatmul.mubr.f32.gmra.mrb[0].mxu0 %v886
    %v954 = vpop.f32.mrb[0].mxu0
    %v955 = vadd.f32 0.0, %v954
    %v956 = vpop.f32.mrb[0].mxu0
    %957 = vdwg.mxu0
    %959 = vrot.lane.b32.xlu0 %v955, 16
    %v960 = vpop.permute.xlu0 %959
    %vm962 = vcmask 195712
    %963 = vst.msk [vmem:[#allocation2] sm:$0xff] %vm962, %v960
    %964 = vrot.lane.b32.xlu0 %v422, 104
    %v965 = vpop.permute.xlu0 %964
    %966 = vrot.lane.b32.xlu0 %v432, 72
    %v967 = vpop.permute.xlu0 %966
    %v968 = vsel %vm447, %v965, 0
    %v970 = vsel %vm447, %v967, 0
    %972 = vmatprep.subr.mxu0 0.0
    %973 = vmatpush1.xpose.msra.mxu0 %v970
    %974 = vmatprep.subr.mxu0 0.0
    %975 = vmatpush1.xpose.msra.mxu0 0.0
    %976 = vmatprep.subr.mxu0 0.0
    %977 = vmatpush1.xpose.msra.mxu0 0.0
    %978 = vmatprep.subr.mxu0 0.0
    %979 = vmatpush1.xpose.msra.mxu0 0.0
    %980 = vmatprep.subr.mxu0 0.0
    %981 = vmatpush1.xpose.msra.mxu0 0.0
    %982 = vmatprep.subr.mxu0 0.0
    %983 = vmatpush1.xpose.msra.mxu0 0.0
    %984 = vmatprep.subr.mxu0 0.0
    %985 = vmatpush1.xpose.msra.mxu0 0.0
    %986 = vmatprep.subr.mxu0 0.0
    %987 = vmatpush1.xpose.msra.mxu0 0.0
    %988 = vmatprep.subr.mxu0 0.0
    %989 = vmatpush1.xpose.msra.mxu0 0.0
    %990 = vmatprep.subr.mxu0 0.0
    %991 = vmatpush1.xpose.msra.mxu0 0.0
    %992 = vmatprep.subr.mxu0 0.0
    %993 = vmatpush1.xpose.msra.mxu0 0.0
    %994 = vmatprep.subr.mxu0 0.0
    %995 = vmatpush1.xpose.msra.mxu0 0.0
    %996 = vmatprep.subr.mxu0 0.0
    %997 = vmatpush1.xpose.msra.mxu0 0.0
    %998 = vmatprep.subr.mxu0 0.0
    %999 = vmatpush1.xpose.msra.mxu0 0.0
    %1000 = vmatprep.subr.mxu0 0.0
    %1001 = vmatpush1.xpose.msra.mxu0 0.0
    %1002 = vmatprep.subr.mxu0 0.0
    %1003 = vmatpush1.xpose.msra.mxu0 0.0
    %1004 = vmatprep.subr.mxu0 0.0
    %1005 = vmatpush1.xpose.msra.mxu0 0.0
    %1006 = vmatprep.subr.mxu0 0.0
    %1007 = vmatpush1.xpose.msra.mxu0 0.0
    %1008 = vmatprep.subr.mxu0 0.0
    %1009 = vmatpush1.xpose.msra.mxu0 0.0
    %1010 = vmatprep.subr.mxu0 0.0
    %1011 = vmatpush1.xpose.msra.mxu0 0.0
    %1012 = vmatprep.subr.mxu0 0.0
    %1013 = vmatpush1.xpose.msra.mxu0 0.0
    %1014 = vmatprep.subr.mxu0 0.0
    %1015 = vmatpush1.xpose.msra.mxu0 0.0
    %1016 = vmatprep.subr.mxu0 0.0
    %1017 = vmatpush1.xpose.msra.mxu0 0.0
    %1018 = vmatprep.subr.mxu0 0.0
    %1019 = vmatpush1.xpose.msra.mxu0 0.0
    %1020 = vmatprep.subr.mxu0 0.0
    %1021 = vmatpush1.xpose.msra.mxu0 0.0
    %1022 = vmatprep.subr.mxu0 0.0
    %1023 = vmatpush1.xpose.msra.mxu0 0.0
    %1024 = vmatprep.subr.mxu0 0.0
    %1025 = vmatpush1.xpose.msra.mxu0 0.0
    %1026 = vmatprep.subr.mxu0 0.0
    %1027 = vmatpush1.xpose.msra.mxu0 0.0
    %1028 = vmatprep.subr.mxu0 0.0
    %1029 = vmatpush1.xpose.msra.mxu0 0.0
    %1030 = vmatprep.subr.mxu0 0.0
    %1031 = vmatpush1.xpose.msra.mxu0 0.0
    %1032 = vmatprep.subr.mxu0 0.0
    %1033 = vmatpush1.xpose.msra.mxu0 0.0
    %1034 = vmatprep.subr.mxu0 0.0
    %1035 = vmatpush1.xpose.msra.mxu0 0.0
    %1036 = vmatprep.mubr.f32.mxu0 0.0
    %1037 = vmatmul.mubr.f32.gmra.mrb[0].mxu0 %v968
    %v1038 = vpop.f32.mrb[0].mxu0
    %v1039 = vadd.f32 0.0, %v1038
    %v1040 = vpop.f32.mrb[0].mxu0
    %1041 = vdwg.mxu0
    %v1042 = vmul.f32 %v1039, 0.35355338
    %v1043 = vadd.f32 %v1042, %v527
    %v1044 = vsel %vm447, %v1043, -inf
    %1045 = vmax.xlane.f32.xlu0 %v1044
    %v1046 = vpop.xlane.xlu0 %1045
    %v1047 = vsub.f32 %v1043, %v1046
    %v1048 = vmul.f32 %v1047, 1.442695
    %v1049 = vpow.pop %v1048
    %v1050 = vsel %vm447, %v1049, 0.0
    %1051 = vadd.xlane.f32.xlu0 %v1050
    %v1052 = vpop.xlane.xlu0 %1051
    %v1053 = vrcp.pop %v1052
    %v1054 = vmul.f32 %v1049, %v1053
    %1055 = vrot.lane.b32.xlu0 %v442, 40
    %v1056 = vpop.permute.xlu0 %1055
    %v1059 = vsel %vm447, %v1054, 0
    %1061 = vmatprep.subr.mxu0 0.0
    %1062 = vmatpush1.msra.mxu0 %v1056
    %1063 = vmatprep.subr.mxu0 0.0
    %1064 = vmatpush1.msra.mxu0 0.0
    %1065 = vmatprep.subr.mxu0 0.0
    %1066 = vmatpush1.msra.mxu0 0.0
    %1067 = vmatprep.subr.mxu0 0.0
    %1068 = vmatpush1.msra.mxu0 0.0
    %1069 = vmatprep.subr.mxu0 0.0
    %1070 = vmatpush1.msra.mxu0 0.0
    %1071 = vmatprep.subr.mxu0 0.0
    %1072 = vmatpush1.msra.mxu0 0.0
    %1073 = vmatprep.subr.mxu0 0.0
    %1074 = vmatpush1.msra.mxu0 0.0
    %1075 = vmatprep.subr.mxu0 0.0
    %1076 = vmatpush1.msra.mxu0 0.0
    %1077 = vmatprep.subr.mxu0 0.0
    %1078 = vmatpush1.msra.mxu0 0.0
    %1079 = vmatprep.subr.mxu0 0.0
    %1080 = vmatpush1.msra.mxu0 0.0
    %1081 = vmatprep.subr.mxu0 0.0
    %1082 = vmatpush1.msra.mxu0 0.0
    %1083 = vmatprep.subr.mxu0 0.0
    %1084 = vmatpush1.msra.mxu0 0.0
    %1085 = vmatprep.subr.mxu0 0.0
    %1086 = vmatpush1.msra.mxu0 0.0
    %1087 = vmatprep.subr.mxu0 0.0
    %1088 = vmatpush1.msra.mxu0 0.0
    %1089 = vmatprep.subr.mxu0 0.0
    %1090 = vmatpush1.msra.mxu0 0.0
    %1091 = vmatprep.subr.mxu0 0.0
    %1092 = vmatpush1.msra.mxu0 0.0
    %1093 = vmatprep.subr.mxu0 0.0
    %1094 = vmatpush1.msra.mxu0 0.0
    %1095 = vmatprep.subr.mxu0 0.0
    %1096 = vmatpush1.msra.mxu0 0.0
    %1097 = vmatprep.subr.mxu0 0.0
    %1098 = vmatpush1.msra.mxu0 0.0
    %1099 = vmatprep.subr.mxu0 0.0
    %1100 = vmatpush1.msra.mxu0 0.0
    %1101 = vmatprep.subr.mxu0 0.0
    %1102 = vmatpush1.msra.mxu0 0.0
    %1103 = vmatprep.subr.mxu0 0.0
    %1104 = vmatpush1.msra.mxu0 0.0
    %1105 = vmatprep.subr.mxu0 0.0
    %1106 = vmatpush1.msra.mxu0 0.0
    %1107 = vmatprep.subr.mxu0 0.0
    %1108 = vmatpush1.msra.mxu0 0.0
    %1109 = vmatprep.subr.mxu0 0.0
    %1110 = vmatpush1.msra.mxu0 0.0
    %1111 = vmatprep.subr.mxu0 0.0
    %1112 = vmatpush1.msra.mxu0 0.0
    %1113 = vmatprep.subr.mxu0 0.0
    %1114 = vmatpush1.msra.mxu0 0.0
    %1115 = vmatprep.subr.mxu0 0.0
    %1116 = vmatpush1.msra.mxu0 0.0
    %1117 = vmatprep.subr.mxu0 0.0
    %1118 = vmatpush1.msra.mxu0 0.0
    %1119 = vmatprep.subr.mxu0 0.0
    %1120 = vmatpush1.msra.mxu0 0.0
    %1121 = vmatprep.subr.mxu0 0.0
    %1122 = vmatpush1.msra.mxu0 0.0
    %1123 = vmatprep.subr.mxu0 0.0
    %1124 = vmatpush1.msra.mxu0 0.0
    %1125 = vmatprep.mubr.f32.mxu0 0.0
    %1126 = vmatmul.mubr.f32.gmra.mrb[0].mxu0 %v1059
    %v1127 = vpop.f32.mrb[0].mxu0
    %v1128 = vadd.f32 0.0, %v1127
    %v1129 = vpop.f32.mrb[0].mxu0
    %1130 = vdwg.mxu0
    %1132 = vrot.lane.b32.xlu0 %v1128, 24
    %v1133 = vpop.permute.xlu0 %1132
    %vm1135 = vcmask 261312
    %1136 = vst.msk [vmem:[#allocation2] sm:$0xff] %vm1135, %v1133
    %1138 = vrot.lane.b32.xlu0 %v433, 96
    %v1139 = vpop.permute.xlu0 %1138
    %v1141 = vsel %vm447, %v423, 0
    %v1143 = vsel %vm447, %v1139, 0
    %1145 = vmatprep.subr.mxu0 0.0
    %1146 = vmatpush1.xpose.msra.mxu0 %v1143
    %1147 = vmatprep.subr.mxu0 0.0
    %1148 = vmatpush1.xpose.msra.mxu0 0.0
    %1149 = vmatprep.subr.mxu0 0.0
    %1150 = vmatpush1.xpose.msra.mxu0 0.0
    %1151 = vmatprep.subr.mxu0 0.0
    %1152 = vmatpush1.xpose.msra.mxu0 0.0
    %1153 = vmatprep.subr.mxu0 0.0
    %1154 = vmatpush1.xpose.msra.mxu0 0.0
    %1155 = vmatprep.subr.mxu0 0.0
    %1156 = vmatpush1.xpose.msra.mxu0 0.0
    %1157 = vmatprep.subr.mxu0 0.0
    %1158 = vmatpush1.xpose.msra.mxu0 0.0
    %1159 = vmatprep.subr.mxu0 0.0
    %1160 = vmatpush1.xpose.msra.mxu0 0.0
    %1161 = vmatprep.subr.mxu0 0.0
    %1162 = vmatpush1.xpose.msra.mxu0 0.0
    %1163 = vmatprep.subr.mxu0 0.0
    %1164 = vmatpush1.xpose.msra.mxu0 0.0
    %1165 = vmatprep.subr.mxu0 0.0
    %1166 = vmatpush1.xpose.msra.mxu0 0.0
    %1167 = vmatprep.subr.mxu0 0.0
    %1168 = vmatpush1.xpose.msra.mxu0 0.0
    %1169 = vmatprep.subr.mxu0 0.0
    %1170 = vmatpush1.xpose.msra.mxu0 0.0
    %1171 = vmatprep.subr.mxu0 0.0
    %1172 = vmatpush1.xpose.msra.mxu0 0.0
    %1173 = vmatprep.subr.mxu0 0.0
    %1174 = vmatpush1.xpose.msra.mxu0 0.0
    %1175 = vmatprep.subr.mxu0 0.0
    %1176 = vmatpush1.xpose.msra.mxu0 0.0
    %1177 = vmatprep.subr.mxu0 0.0
    %1178 = vmatpush1.xpose.msra.mxu0 0.0
    %1179 = vmatprep.subr.mxu0 0.0
    %1180 = vmatpush1.xpose.msra.mxu0 0.0
    %1181 = vmatprep.subr.mxu0 0.0
    %1182 = vmatpush1.xpose.msra.mxu0 0.0
    %1183 = vmatprep.subr.mxu0 0.0
    %1184 = vmatpush1.xpose.msra.mxu0 0.0
    %1185 = vmatprep.subr.mxu0 0.0
    %1186 = vmatpush1.xpose.msra.mxu0 0.0
    %1187 = vmatprep.subr.mxu0 0.0
    %1188 = vmatpush1.xpose.msra.mxu0 0.0
    %1189 = vmatprep.subr.mxu0 0.0
    %1190 = vmatpush1.xpose.msra.mxu0 0.0
    %1191 = vmatprep.subr.mxu0 0.0
    %1192 = vmatpush1.xpose.msra.mxu0 0.0
    %1193 = vmatprep.subr.mxu0 0.0
    %1194 = vmatpush1.xpose.msra.mxu0 0.0
    %1195 = vmatprep.subr.mxu0 0.0
    %1196 = vmatpush1.xpose.msra.mxu0 0.0
    %1197 = vmatprep.subr.mxu0 0.0
    %1198 = vmatpush1.xpose.msra.mxu0 0.0
    %1199 = vmatprep.subr.mxu0 0.0
    %1200 = vmatpush1.xpose.msra.mxu0 0.0
    %1201 = vmatprep.subr.mxu0 0.0
    %1202 = vmatpush1.xpose.msra.mxu0 0.0
    %1203 = vmatprep.subr.mxu0 0.0
    %1204 = vmatpush1.xpose.msra.mxu0 0.0
    %1205 = vmatprep.subr.mxu0 0.0
    %1206 = vmatpush1.xpose.msra.mxu0 0.0
    %1207 = vmatprep.subr.mxu0 0.0
    %1208 = vmatpush1.xpose.msra.mxu0 0.0
    %1209 = vmatprep.mubr.f32.mxu0 0.0
    %1210 = vmatmul.mubr.f32.gmra.mrb[0].mxu0 %v1141
    %v1211 = vpop.f32.mrb[0].mxu0
    %v1212 = vadd.f32 0.0, %v1211
    %v1213 = vpop.f32.mrb[0].mxu0
    %1214 = vdwg.mxu0
    %v1215 = vmul.f32 %v1212, 0.35355338
    %v1216 = vlaneseq
    %v1217 = vshrl.u32 %v1216, 7
    %v1218 = vsub.s32 1, %v1217
    %v1219 = vrot.slane %v354, %v1218
    %v1220 = vadd.f32 %v1215, %v1219
    %v1221 = vsel %vm447, %v1220, -inf
    %1222 = vmax.xlane.f32.xlu0 %v1221
    %v1223 = vpop.xlane.xlu0 %1222
    %v1224 = vsub.f32 %v1220, %v1223
    %v1225 = vmul.f32 %v1224, 1.442695
    %v1226 = vpow.pop %v1225
    %v1227 = vsel %vm447, %v1226, 0.0
    %1228 = vadd.xlane.f32.xlu0 %v1227
    %v1229 = vpop.xlane.xlu0 %1228
    %v1230 = vrcp.pop %v1229
    %v1231 = vmul.f32 %v1226, %v1230
    %1233 = vrot.lane.b32.xlu0 %v443, 64
    %v1234 = vpop.permute.xlu0 %1233
    %v1237 = vsel %vm447, %v1231, 0
    %1239 = vmatprep.subr.mxu0 0.0
    %1240 = vmatpush1.msra.mxu0 %v1234
    %1241 = vmatprep.subr.mxu0 0.0
    %1242 = vmatpush1.msra.mxu0 0.0
    %1243 = vmatprep.subr.mxu0 0.0
    %1244 = vmatpush1.msra.mxu0 0.0
    %1245 = vmatprep.subr.mxu0 0.0
    %1246 = vmatpush1.msra.mxu0 0.0
    %1247 = vmatprep.subr.mxu0 0.0
    %1248 = vmatpush1.msra.mxu0 0.0
    %1249 = vmatprep.subr.mxu0 0.0
    %1250 = vmatpush1.msra.mxu0 0.0
    %1251 = vmatprep.subr.mxu0 0.0
    %1252 = vmatpush1.msra.mxu0 0.0
    %1253 = vmatprep.subr.mxu0 0.0
    %1254 = vmatpush1.msra.mxu0 0.0
    %1255 = vmatprep.subr.mxu0 0.0
    %1256 = vmatpush1.msra.mxu0 0.0
    %1257 = vmatprep.subr.mxu0 0.0
    %1258 = vmatpush1.msra.mxu0 0.0
    %1259 = vmatprep.subr.mxu0 0.0
    %1260 = vmatpush1.msra.mxu0 0.0
    %1261 = vmatprep.subr.mxu0 0.0
    %1262 = vmatpush1.msra.mxu0 0.0
    %1263 = vmatprep.subr.mxu0 0.0
    %1264 = vmatpush1.msra.mxu0 0.0
    %1265 = vmatprep.subr.mxu0 0.0
    %1266 = vmatpush1.msra.mxu0 0.0
    %1267 = vmatprep.subr.mxu0 0.0
    %1268 = vmatpush1.msra.mxu0 0.0
    %1269 = vmatprep.subr.mxu0 0.0
    %1270 = vmatpush1.msra.mxu0 0.0
    %1271 = vmatprep.subr.mxu0 0.0
    %1272 = vmatpush1.msra.mxu0 0.0
    %1273 = vmatprep.subr.mxu0 0.0
    %1274 = vmatpush1.msra.mxu0 0.0
    %1275 = vmatprep.subr.mxu0 0.0
    %1276 = vmatpush1.msra.mxu0 0.0
    %1277 = vmatprep.subr.mxu0 0.0
    %1278 = vmatpush1.msra.mxu0 0.0
    %1279 = vmatprep.subr.mxu0 0.0
    %1280 = vmatpush1.msra.mxu0 0.0
    %1281 = vmatprep.subr.mxu0 0.0
    %1282 = vmatpush1.msra.mxu0 0.0
    %1283 = vmatprep.subr.mxu0 0.0
    %1284 = vmatpush1.msra.mxu0 0.0
    %1285 = vmatprep.subr.mxu0 0.0
    %1286 = vmatpush1.msra.mxu0 0.0
    %1287 = vmatprep.subr.mxu0 0.0
    %1288 = vmatpush1.msra.mxu0 0.0
    %1289 = vmatprep.subr.mxu0 0.0
    %1290 = vmatpush1.msra.mxu0 0.0
    %1291 = vmatprep.subr.mxu0 0.0
    %1292 = vmatpush1.msra.mxu0 0.0
    %1293 = vmatprep.subr.mxu0 0.0
    %1294 = vmatpush1.msra.mxu0 0.0
    %1295 = vmatprep.subr.mxu0 0.0
    %1296 = vmatpush1.msra.mxu0 0.0
    %1297 = vmatprep.subr.mxu0 0.0
    %1298 = vmatpush1.msra.mxu0 0.0
    %1299 = vmatprep.subr.mxu0 0.0
    %1300 = vmatpush1.msra.mxu0 0.0
    %1301 = vmatprep.subr.mxu0 0.0
    %1302 = vmatpush1.msra.mxu0 0.0
    %1303 = vmatprep.mubr.f32.mxu0 0.0
    %1304 = vmatmul.mubr.f32.gmra.mrb[0].mxu0 %v1237
    %v1305 = vpop.f32.mrb[0].mxu0
    %v1306 = vadd.f32 0.0, %v1305
    %v1307 = vpop.f32.mrb[0].mxu0
    %1308 = vdwg.mxu0
    %1309 = vst.msk [vmem:[#allocation2 + $0x8] sm:$0xff] %vm447, %v1306
    %1310 = vrot.lane.b32.xlu0 %v423, 120
    %v1311 = vpop.permute.xlu0 %1310
    %1312 = vrot.lane.b32.xlu0 %v433, 88
    %v1313 = vpop.permute.xlu0 %1312
    %v1314 = vsel %vm447, %v1311, 0
    %v1316 = vsel %vm447, %v1313, 0
    %1318 = vmatprep.subr.mxu0 0.0
    %1319 = vmatpush1.xpose.msra.mxu0 %v1316
    %1320 = vmatprep.subr.mxu0 0.0
    %1321 = vmatpush1.xpose.msra.mxu0 0.0
    %1322 = vmatprep.subr.mxu0 0.0
    %1323 = vmatpush1.xpose.msra.mxu0 0.0
    %1324 = vmatprep.subr.mxu0 0.0
    %1325 = vmatpush1.xpose.msra.mxu0 0.0
    %1326 = vmatprep.subr.mxu0 0.0
    %1327 = vmatpush1.xpose.msra.mxu0 0.0
    %1328 = vmatprep.subr.mxu0 0.0
    %1329 = vmatpush1.xpose.msra.mxu0 0.0
    %1330 = vmatprep.subr.mxu0 0.0
    %1331 = vmatpush1.xpose.msra.mxu0 0.0
    %1332 = vmatprep.subr.mxu0 0.0
    %1333 = vmatpush1.xpose.msra.mxu0 0.0
    %1334 = vmatprep.subr.mxu0 0.0
    %1335 = vmatpush1.xpose.msra.mxu0 0.0
    %1336 = vmatprep.subr.mxu0 0.0
    %1337 = vmatpush1.xpose.msra.mxu0 0.0
    %1338 = vmatprep.subr.mxu0 0.0
    %1339 = vmatpush1.xpose.msra.mxu0 0.0
    %1340 = vmatprep.subr.mxu0 0.0
    %1341 = vmatpush1.xpose.msra.mxu0 0.0
    %1342 = vmatprep.subr.mxu0 0.0
    %1343 = vmatpush1.xpose.msra.mxu0 0.0
    %1344 = vmatprep.subr.mxu0 0.0
    %1345 = vmatpush1.xpose.msra.mxu0 0.0
    %1346 = vmatprep.subr.mxu0 0.0
    %1347 = vmatpush1.xpose.msra.mxu0 0.0
    %1348 = vmatprep.subr.mxu0 0.0
    %1349 = vmatpush1.xpose.msra.mxu0 0.0
    %1350 = vmatprep.subr.mxu0 0.0
    %1351 = vmatpush1.xpose.msra.mxu0 0.0
    %1352 = vmatprep.subr.mxu0 0.0
    %1353 = vmatpush1.xpose.msra.mxu0 0.0
    %1354 = vmatprep.subr.mxu0 0.0
    %1355 = vmatpush1.xpose.msra.mxu0 0.0
    %1356 = vmatprep.subr.mxu0 0.0
    %1357 = vmatpush1.xpose.msra.mxu0 0.0
    %1358 = vmatprep.subr.mxu0 0.0
    %1359 = vmatpush1.xpose.msra.mxu0 0.0
    %1360 = vmatprep.subr.mxu0 0.0
    %1361 = vmatpush1.xpose.msra.mxu0 0.0
    %1362 = vmatprep.subr.mxu0 0.0
    %1363 = vmatpush1.xpose.msra.mxu0 0.0
    %1364 = vmatprep.subr.mxu0 0.0
    %1365 = vmatpush1.xpose.msra.mxu0 0.0
    %1366 = vmatprep.subr.mxu0 0.0
    %1367 = vmatpush1.xpose.msra.mxu0 0.0
    %1368 = vmatprep.subr.mxu0 0.0
    %1369 = vmatpush1.xpose.msra.mxu0 0.0
    %1370 = vmatprep.subr.mxu0 0.0
    %1371 = vmatpush1.xpose.msra.mxu0 0.0
    %1372 = vmatprep.subr.mxu0 0.0
    %1373 = vmatpush1.xpose.msra.mxu0 0.0
    %1374 = vmatprep.subr.mxu0 0.0
    %1375 = vmatpush1.xpose.msra.mxu0 0.0
    %1376 = vmatprep.subr.mxu0 0.0
    %1377 = vmatpush1.xpose.msra.mxu0 0.0
    %1378 = vmatprep.subr.mxu0 0.0
    %1379 = vmatpush1.xpose.msra.mxu0 0.0
    %1380 = vmatprep.subr.mxu0 0.0
    %1381 = vmatpush1.xpose.msra.mxu0 0.0
    %1382 = vmatprep.mubr.f32.mxu0 0.0
    %1383 = vmatmul.mubr.f32.gmra.mrb[0].mxu0 %v1314
    %v1384 = vpop.f32.mrb[0].mxu0
    %v1385 = vadd.f32 0.0, %v1384
    %v1386 = vpop.f32.mrb[0].mxu0
    %1387 = vdwg.mxu0
    %v1388 = vmul.f32 %v1385, 0.35355338
    %v1389 = vadd.f32 %v1388, %v1219
    %v1390 = vsel %vm447, %v1389, -inf
    %1391 = vmax.xlane.f32.xlu0 %v1390
    %v1392 = vpop.xlane.xlu0 %1391
    %v1393 = vsub.f32 %v1389, %v1392
    %v1394 = vmul.f32 %v1393, 1.442695
    %v1395 = vpow.pop %v1394
    %v1396 = vsel %vm447, %v1395, 0.0
    %1397 = vadd.xlane.f32.xlu0 %v1396
    %v1398 = vpop.xlane.xlu0 %1397
    %v1399 = vrcp.pop %v1398
    %v1400 = vmul.f32 %v1395, %v1399
    %1401 = vrot.lane.b32.xlu0 %v443, 56
    %v1402 = vpop.permute.xlu0 %1401
    %v1405 = vsel %vm447, %v1400, 0
    %1407 = vmatprep.subr.mxu0 0.0
    %1408 = vmatpush1.msra.mxu0 %v1402
    %1409 = vmatprep.subr.mxu0 0.0
    %1410 = vmatpush1.msra.mxu0 0.0
    %1411 = vmatprep.subr.mxu0 0.0
    %1412 = vmatpush1.msra.mxu0 0.0
    %1413 = vmatprep.subr.mxu0 0.0
    %1414 = vmatpush1.msra.mxu0 0.0
    %1415 = vmatprep.subr.mxu0 0.0
    %1416 = vmatpush1.msra.mxu0 0.0
    %1417 = vmatprep.subr.mxu0 0.0
    %1418 = vmatpush1.msra.mxu0 0.0
    %1419 = vmatprep.subr.mxu0 0.0
    %1420 = vmatpush1.msra.mxu0 0.0
    %1421 = vmatprep.subr.mxu0 0.0
    %1422 = vmatpush1.msra.mxu0 0.0
    %1423 = vmatprep.subr.mxu0 0.0
    %1424 = vmatpush1.msra.mxu0 0.0
    %1425 = vmatprep.subr.mxu0 0.0
    %1426 = vmatpush1.msra.mxu0 0.0
    %1427 = vmatprep.subr.mxu0 0.0
    %1428 = vmatpush1.msra.mxu0 0.0
    %1429 = vmatprep.subr.mxu0 0.0
    %1430 = vmatpush1.msra.mxu0 0.0
    %1431 = vmatprep.subr.mxu0 0.0
    %1432 = vmatpush1.msra.mxu0 0.0
    %1433 = vmatprep.subr.mxu0 0.0
    %1434 = vmatpush1.msra.mxu0 0.0
    %1435 = vmatprep.subr.mxu0 0.0
    %1436 = vmatpush1.msra.mxu0 0.0
    %1437 = vmatprep.subr.mxu0 0.0
    %1438 = vmatpush1.msra.mxu0 0.0
    %1439 = vmatprep.subr.mxu0 0.0
    %1440 = vmatpush1.msra.mxu0 0.0
    %1441 = vmatprep.subr.mxu0 0.0
    %1442 = vmatpush1.msra.mxu0 0.0
    %1443 = vmatprep.subr.mxu0 0.0
    %1444 = vmatpush1.msra.mxu0 0.0
    %1445 = vmatprep.subr.mxu0 0.0
    %1446 = vmatpush1.msra.mxu0 0.0
    %1447 = vmatprep.subr.mxu0 0.0
    %1448 = vmatpush1.msra.mxu0 0.0
    %1449 = vmatprep.subr.mxu0 0.0
    %1450 = vmatpush1.msra.mxu0 0.0
    %1451 = vmatprep.subr.mxu0 0.0
    %1452 = vmatpush1.msra.mxu0 0.0
    %1453 = vmatprep.subr.mxu0 0.0
    %1454 = vmatpush1.msra.mxu0 0.0
    %1455 = vmatprep.subr.mxu0 0.0
    %1456 = vmatpush1.msra.mxu0 0.0
    %1457 = vmatprep.subr.mxu0 0.0
    %1458 = vmatpush1.msra.mxu0 0.0
    %1459 = vmatprep.subr.mxu0 0.0
    %1460 = vmatpush1.msra.mxu0 0.0
    %1461 = vmatprep.subr.mxu0 0.0
    %1462 = vmatpush1.msra.mxu0 0.0
    %1463 = vmatprep.subr.mxu0 0.0
    %1464 = vmatpush1.msra.mxu0 0.0
    %1465 = vmatprep.subr.mxu0 0.0
    %1466 = vmatpush1.msra.mxu0 0.0
    %1467 = vmatprep.subr.mxu0 0.0
    %1468 = vmatpush1.msra.mxu0 0.0
    %1469 = vmatprep.subr.mxu0 0.0
    %1470 = vmatpush1.msra.mxu0 0.0
    %1471 = vmatprep.mubr.f32.mxu0 0.0
    %1472 = vmatmul.mubr.f32.gmra.mrb[0].mxu0 %v1405
    %v1473 = vpop.f32.mrb[0].mxu0
    %v1474 = vadd.f32 0.0, %v1473
    %v1475 = vpop.f32.mrb[0].mxu0
    %1476 = vdwg.mxu0
    %1478 = vrot.lane.b32.xlu0 %v1474, 8
    %v1479 = vpop.permute.xlu0 %1478
    %1481 = vst.msk [vmem:[#allocation2 + $0x8] sm:$0xff] %vm789, %v1479
    %1482 = vrot.lane.b32.xlu0 %v423, 112
    %v1483 = vpop.permute.xlu0 %1482
    %1484 = vrot.lane.b32.xlu0 %v433, 80
    %v1485 = vpop.permute.xlu0 %1484
    %v1486 = vsel %vm447, %v1483, 0
    %v1488 = vsel %vm447, %v1485, 0
    %1490 = vmatprep.subr.mxu0 0.0
    %1491 = vmatpush1.xpose.msra.mxu0 %v1488
    %1492 = vmatprep.subr.mxu0 0.0
    %1493 = vmatpush1.xpose.msra.mxu0 0.0
    %1494 = vmatprep.subr.mxu0 0.0
    %1495 = vmatpush1.xpose.msra.mxu0 0.0
    %1496 = vmatprep.subr.mxu0 0.0
    %1497 = vmatpush1.xpose.msra.mxu0 0.0
    %1498 = vmatprep.subr.mxu0 0.0
    %1499 = vmatpush1.xpose.msra.mxu0 0.0
    %1500 = vmatprep.subr.mxu0 0.0
    %1501 = vmatpush1.xpose.msra.mxu0 0.0
    %1502 = vmatprep.subr.mxu0 0.0
    %1503 = vmatpush1.xpose.msra.mxu0 0.0
    %1504 = vmatprep.subr.mxu0 0.0
    %1505 = vmatpush1.xpose.msra.mxu0 0.0
    %1506 = vmatprep.subr.mxu0 0.0
    %1507 = vmatpush1.xpose.msra.mxu0 0.0
    %1508 = vmatprep.subr.mxu0 0.0
    %1509 = vmatpush1.xpose.msra.mxu0 0.0
    %1510 = vmatprep.subr.mxu0 0.0
    %1511 = vmatpush1.xpose.msra.mxu0 0.0
    %1512 = vmatprep.subr.mxu0 0.0
    %1513 = vmatpush1.xpose.msra.mxu0 0.0
    %1514 = vmatprep.subr.mxu0 0.0
    %1515 = vmatpush1.xpose.msra.mxu0 0.0
    %1516 = vmatprep.subr.mxu0 0.0
    %1517 = vmatpush1.xpose.msra.mxu0 0.0
    %1518 = vmatprep.subr.mxu0 0.0
    %1519 = vmatpush1.xpose.msra.mxu0 0.0
    %1520 = vmatprep.subr.mxu0 0.0
    %1521 = vmatpush1.xpose.msra.mxu0 0.0
    %1522 = vmatprep.subr.mxu0 0.0
    %1523 = vmatpush1.xpose.msra.mxu0 0.0
    %1524 = vmatprep.subr.mxu0 0.0
    %1525 = vmatpush1.xpose.msra.mxu0 0.0
    %1526 = vmatprep.subr.mxu0 0.0
    %1527 = vmatpush1.xpose.msra.mxu0 0.0
    %1528 = vmatprep.subr.mxu0 0.0
    %1529 = vmatpush1.xpose.msra.mxu0 0.0
    %1530 = vmatprep.subr.mxu0 0.0
    %1531 = vmatpush1.xpose.msra.mxu0 0.0
    %1532 = vmatprep.subr.mxu0 0.0
    %1533 = vmatpush1.xpose.msra.mxu0 0.0
    %1534 = vmatprep.subr.mxu0 0.0
    %1535 = vmatpush1.xpose.msra.mxu0 0.0
    %1536 = vmatprep.subr.mxu0 0.0
    %1537 = vmatpush1.xpose.msra.mxu0 0.0
    %1538 = vmatprep.subr.mxu0 0.0
    %1539 = vmatpush1.xpose.msra.mxu0 0.0
    %1540 = vmatprep.subr.mxu0 0.0
    %1541 = vmatpush1.xpose.msra.mxu0 0.0
    %1542 = vmatprep.subr.mxu0 0.0
    %1543 = vmatpush1.xpose.msra.mxu0 0.0
    %1544 = vmatprep.subr.mxu0 0.0
    %1545 = vmatpush1.xpose.msra.mxu0 0.0
    %1546 = vmatprep.subr.mxu0 0.0
    %1547 = vmatpush1.xpose.msra.mxu0 0.0
    %1548 = vmatprep.subr.mxu0 0.0
    %1549 = vmatpush1.xpose.msra.mxu0 0.0
    %1550 = vmatprep.subr.mxu0 0.0
    %1551 = vmatpush1.xpose.msra.mxu0 0.0
    %1552 = vmatprep.subr.mxu0 0.0
    %1553 = vmatpush1.xpose.msra.mxu0 0.0
    %1554 = vmatprep.mubr.f32.mxu0 0.0
    %1555 = vmatmul.mubr.f32.gmra.mrb[0].mxu0 %v1486
    %v1556 = vpop.f32.mrb[0].mxu0
    %v1557 = vadd.f32 0.0, %v1556
    %v1558 = vpop.f32.mrb[0].mxu0
    %1559 = vdwg.mxu0
    %v1560 = vmul.f32 %v1557, 0.35355338
    %v1561 = vadd.f32 %v1560, %v1219
    %v1562 = vsel %vm447, %v1561, -inf
    %1563 = vmax.xlane.f32.xlu0 %v1562
    %v1564 = vpop.xlane.xlu0 %1563
    %v1565 = vsub.f32 %v1561, %v1564
    %v1566 = vmul.f32 %v1565, 1.442695
    %v1567 = vpow.pop %v1566
    %v1568 = vsel %vm447, %v1567, 0.0
    %1569 = vadd.xlane.f32.xlu0 %v1568
    %v1570 = vpop.xlane.xlu0 %1569
    %v1571 = vrcp.pop %v1570
    %v1572 = vmul.f32 %v1567, %v1571
    %1573 = vrot.lane.b32.xlu0 %v443, 48
    %v1574 = vpop.permute.xlu0 %1573
    %v1577 = vsel %vm447, %v1572, 0
    %1579 = vmatprep.subr.mxu0 0.0
    %1580 = vmatpush1.msra.mxu0 %v1574
    %1581 = vmatprep.subr.mxu0 0.0
    %1582 = vmatpush1.msra.mxu0 0.0
    %1583 = vmatprep.subr.mxu0 0.0
    %1584 = vmatpush1.msra.mxu0 0.0
    %1585 = vmatprep.subr.mxu0 0.0
    %1586 = vmatpush1.msra.mxu0 0.0
    %1587 = vmatprep.subr.mxu0 0.0
    %1588 = vmatpush1.msra.mxu0 0.0
    %1589 = vmatprep.subr.mxu0 0.0
    %1590 = vmatpush1.msra.mxu0 0.0
    %1591 = vmatprep.subr.mxu0 0.0
    %1592 = vmatpush1.msra.mxu0 0.0
    %1593 = vmatprep.subr.mxu0 0.0
    %1594 = vmatpush1.msra.mxu0 0.0
    %1595 = vmatprep.subr.mxu0 0.0
    %1596 = vmatpush1.msra.mxu0 0.0
    %1597 = vmatprep.subr.mxu0 0.0
    %1598 = vmatpush1.msra.mxu0 0.0
    %1599 = vmatprep.subr.mxu0 0.0
    %1600 = vmatpush1.msra.mxu0 0.0
    %1601 = vmatprep.subr.mxu0 0.0
    %1602 = vmatpush1.msra.mxu0 0.0
    %1603 = vmatprep.subr.mxu0 0.0
    %1604 = vmatpush1.msra.mxu0 0.0
    %1605 = vmatprep.subr.mxu0 0.0
    %1606 = vmatpush1.msra.mxu0 0.0
    %1607 = vmatprep.subr.mxu0 0.0
    %1608 = vmatpush1.msra.mxu0 0.0
    %1609 = vmatprep.subr.mxu0 0.0
    %1610 = vmatpush1.msra.mxu0 0.0
    %1611 = vmatprep.subr.mxu0 0.0
    %1612 = vmatpush1.msra.mxu0 0.0
    %1613 = vmatprep.subr.mxu0 0.0
    %1614 = vmatpush1.msra.mxu0 0.0
    %1615 = vmatprep.subr.mxu0 0.0
    %1616 = vmatpush1.msra.mxu0 0.0
    %1617 = vmatprep.subr.mxu0 0.0
    %1618 = vmatpush1.msra.mxu0 0.0
    %1619 = vmatprep.subr.mxu0 0.0
    %1620 = vmatpush1.msra.mxu0 0.0
    %1621 = vmatprep.subr.mxu0 0.0
    %1622 = vmatpush1.msra.mxu0 0.0
    %1623 = vmatprep.subr.mxu0 0.0
    %1624 = vmatpush1.msra.mxu0 0.0
    %1625 = vmatprep.subr.mxu0 0.0
    %1626 = vmatpush1.msra.mxu0 0.0
    %1627 = vmatprep.subr.mxu0 0.0
    %1628 = vmatpush1.msra.mxu0 0.0
    %1629 = vmatprep.subr.mxu0 0.0
    %1630 = vmatpush1.msra.mxu0 0.0
    %1631 = vmatprep.subr.mxu0 0.0
    %1632 = vmatpush1.msra.mxu0 0.0
    %1633 = vmatprep.subr.mxu0 0.0
    %1634 = vmatpush1.msra.mxu0 0.0
    %1635 = vmatprep.subr.mxu0 0.0
    %1636 = vmatpush1.msra.mxu0 0.0
    %1637 = vmatprep.subr.mxu0 0.0
    %1638 = vmatpush1.msra.mxu0 0.0
    %1639 = vmatprep.subr.mxu0 0.0
    %1640 = vmatpush1.msra.mxu0 0.0
    %1641 = vmatprep.subr.mxu0 0.0
    %1642 = vmatpush1.msra.mxu0 0.0
    %1643 = vmatprep.mubr.f32.mxu0 0.0
    %1644 = vmatmul.mubr.f32.gmra.mrb[0].mxu0 %v1577
    %v1645 = vpop.f32.mrb[0].mxu0
    %v1646 = vadd.f32 0.0, %v1645
    %v1647 = vpop.f32.mrb[0].mxu0
    %1648 = vdwg.mxu0
    %1650 = vrot.lane.b32.xlu0 %v1646, 16
    %v1651 = vpop.permute.xlu0 %1650
    %1653 = vst.msk [vmem:[#allocation2 + $0x8] sm:$0xff] %vm962, %v1651
    %1654 = vrot.lane.b32.xlu0 %v423, 104
    %v1655 = vpop.permute.xlu0 %1654
    %1656 = vrot.lane.b32.xlu0 %v433, 72
    %v1657 = vpop.permute.xlu0 %1656
    %v1658 = vsel %vm447, %v1655, 0
    %v1660 = vsel %vm447, %v1657, 0
    %1662 = vmatprep.subr.mxu0 0.0
    %1663 = vmatpush1.xpose.msra.mxu0 %v1660
    %1664 = vmatprep.subr.mxu0 0.0
    %1665 = vmatpush1.xpose.msra.mxu0 0.0
    %1666 = vmatprep.subr.mxu0 0.0
    %1667 = vmatpush1.xpose.msra.mxu0 0.0
    %1668 = vmatprep.subr.mxu0 0.0
    %1669 = vmatpush1.xpose.msra.mxu0 0.0
    %1670 = vmatprep.subr.mxu0 0.0
    %1671 = vmatpush1.xpose.msra.mxu0 0.0
    %1672 = vmatprep.subr.mxu0 0.0
    %1673 = vmatpush1.xpose.msra.mxu0 0.0
    %1674 = vmatprep.subr.mxu0 0.0
    %1675 = vmatpush1.xpose.msra.mxu0 0.0
    %1676 = vmatprep.subr.mxu0 0.0
    %1677 = vmatpush1.xpose.msra.mxu0 0.0
    %1678 = vmatprep.subr.mxu0 0.0
    %1679 = vmatpush1.xpose.msra.mxu0 0.0
    %1680 = vmatprep.subr.mxu0 0.0
    %1681 = vmatpush1.xpose.msra.mxu0 0.0
    %1682 = vmatprep.subr.mxu0 0.0
    %1683 = vmatpush1.xpose.msra.mxu0 0.0
    %1684 = vmatprep.subr.mxu0 0.0
    %1685 = vmatpush1.xpose.msra.mxu0 0.0
    %1686 = vmatprep.subr.mxu0 0.0
    %1687 = vmatpush1.xpose.msra.mxu0 0.0
    %1688 = vmatprep.subr.mxu0 0.0
    %1689 = vmatpush1.xpose.msra.mxu0 0.0
    %1690 = vmatprep.subr.mxu0 0.0
    %1691 = vmatpush1.xpose.msra.mxu0 0.0
    %1692 = vmatprep.subr.mxu0 0.0
    %1693 = vmatpush1.xpose.msra.mxu0 0.0
    %1694 = vmatprep.subr.mxu0 0.0
    %1695 = vmatpush1.xpose.msra.mxu0 0.0
    %1696 = vmatprep.subr.mxu0 0.0
    %1697 = vmatpush1.xpose.msra.mxu0 0.0
    %1698 = vmatprep.subr.mxu0 0.0
    %1699 = vmatpush1.xpose.msra.mxu0 0.0
    %1700 = vmatprep.subr.mxu0 0.0
    %1701 = vmatpush1.xpose.msra.mxu0 0.0
    %1702 = vmatprep.subr.mxu0 0.0
    %1703 = vmatpush1.xpose.msra.mxu0 0.0
    %1704 = vmatprep.subr.mxu0 0.0
    %1705 = vmatpush1.xpose.msra.mxu0 0.0
    %1706 = vmatprep.subr.mxu0 0.0
    %1707 = vmatpush1.xpose.msra.mxu0 0.0
    %1708 = vmatprep.subr.mxu0 0.0
    %1709 = vmatpush1.xpose.msra.mxu0 0.0
    %1710 = vmatprep.subr.mxu0 0.0
    %1711 = vmatpush1.xpose.msra.mxu0 0.0
    %1712 = vmatprep.subr.mxu0 0.0
    %1713 = vmatpush1.xpose.msra.mxu0 0.0
    %1714 = vmatprep.subr.mxu0 0.0
    %1715 = vmatpush1.xpose.msra.mxu0 0.0
    %1716 = vmatprep.subr.mxu0 0.0
    %1717 = vmatpush1.xpose.msra.mxu0 0.0
    %1718 = vmatprep.subr.mxu0 0.0
    %1719 = vmatpush1.xpose.msra.mxu0 0.0
    %1720 = vmatprep.subr.mxu0 0.0
    %1721 = vmatpush1.xpose.msra.mxu0 0.0
    %1722 = vmatprep.subr.mxu0 0.0
    %1723 = vmatpush1.xpose.msra.mxu0 0.0
    %1724 = vmatprep.subr.mxu0 0.0
    %1725 = vmatpush1.xpose.msra.mxu0 0.0
    %1726 = vmatprep.mubr.f32.mxu0 0.0
    %1727 = vmatmul.mubr.f32.gmra.mrb[0].mxu0 %v1658
    %v1728 = vpop.f32.mrb[0].mxu0
    %v1729 = vadd.f32 0.0, %v1728
    %v1730 = vpop.f32.mrb[0].mxu0
    %1731 = vdwg.mxu0
    %v1732 = vmul.f32 %v1729, 0.35355338
    %v1733 = vadd.f32 %v1732, %v1219
    %v1734 = vsel %vm447, %v1733, -inf
    %1735 = vmax.xlane.f32.xlu0 %v1734
    %v1736 = vpop.xlane.xlu0 %1735
    %v1737 = vsub.f32 %v1733, %v1736
    %v1738 = vmul.f32 %v1737, 1.442695
    %v1739 = vpow.pop %v1738
    %v1740 = vsel %vm447, %v1739, 0.0
    %1741 = vadd.xlane.f32.xlu0 %v1740
    %v1742 = vpop.xlane.xlu0 %1741
    %v1743 = vrcp.pop %v1742
    %v1744 = vmul.f32 %v1739, %v1743
    %1745 = vrot.lane.b32.xlu0 %v443, 40
    %v1746 = vpop.permute.xlu0 %1745
    %v1749 = vsel %vm447, %v1744, 0
    %1751 = vmatprep.subr.mxu0 0.0
    %1752 = vmatpush1.msra.mxu0 %v1746
    %1753 = vmatprep.subr.mxu0 0.0
    %1754 = vmatpush1.msra.mxu0 0.0
    %1755 = vmatprep.subr.mxu0 0.0
    %1756 = vmatpush1.msra.mxu0 0.0
    %1757 = vmatprep.subr.mxu0 0.0
    %1758 = vmatpush1.msra.mxu0 0.0
    %1759 = vmatprep.subr.mxu0 0.0
    %1760 = vmatpush1.msra.mxu0 0.0
    %1761 = vmatprep.subr.mxu0 0.0
    %1762 = vmatpush1.msra.mxu0 0.0
    %1763 = vmatprep.subr.mxu0 0.0
    %1764 = vmatpush1.msra.mxu0 0.0
    %1765 = vmatprep.subr.mxu0 0.0
    %1766 = vmatpush1.msra.mxu0 0.0
    %1767 = vmatprep.subr.mxu0 0.0
    %1768 = vmatpush1.msra.mxu0 0.0
    %1769 = vmatprep.subr.mxu0 0.0
    %1770 = vmatpush1.msra.mxu0 0.0
    %1771 = vmatprep.subr.mxu0 0.0
    %1772 = vmatpush1.msra.mxu0 0.0
    %1773 = vmatprep.subr.mxu0 0.0
    %1774 = vmatpush1.msra.mxu0 0.0
    %1775 = vmatprep.subr.mxu0 0.0
    %1776 = vmatpush1.msra.mxu0 0.0
    %1777 = vmatprep.subr.mxu0 0.0
    %1778 = vmatpush1.msra.mxu0 0.0
    %1779 = vmatprep.subr.mxu0 0.0
    %1780 = vmatpush1.msra.mxu0 0.0
    %1781 = vmatprep.subr.mxu0 0.0
    %1782 = vmatpush1.msra.mxu0 0.0
    %1783 = vmatprep.subr.mxu0 0.0
    %1784 = vmatpush1.msra.mxu0 0.0
    %1785 = vmatprep.subr.mxu0 0.0
    %1786 = vmatpush1.msra.mxu0 0.0
    %1787 = vmatprep.subr.mxu0 0.0
    %1788 = vmatpush1.msra.mxu0 0.0
    %1789 = vmatprep.subr.mxu0 0.0
    %1790 = vmatpush1.msra.mxu0 0.0
    %1791 = vmatprep.subr.mxu0 0.0
    %1792 = vmatpush1.msra.mxu0 0.0
    %1793 = vmatprep.subr.mxu0 0.0
    %1794 = vmatpush1.msra.mxu0 0.0
    %1795 = vmatprep.subr.mxu0 0.0
    %1796 = vmatpush1.msra.mxu0 0.0
    %1797 = vmatprep.subr.mxu0 0.0
    %1798 = vmatpush1.msra.mxu0 0.0
    %1799 = vmatprep.subr.mxu0 0.0
    %1800 = vmatpush1.msra.mxu0 0.0
    %1801 = vmatprep.subr.mxu0 0.0
    %1802 = vmatpush1.msra.mxu0 0.0
    %1803 = vmatprep.subr.mxu0 0.0
    %1804 = vmatpush1.msra.mxu0 0.0
    %1805 = vmatprep.subr.mxu0 0.0
    %1806 = vmatpush1.msra.mxu0 0.0
    %1807 = vmatprep.subr.mxu0 0.0
    %1808 = vmatpush1.msra.mxu0 0.0
    %1809 = vmatprep.subr.mxu0 0.0
    %1810 = vmatpush1.msra.mxu0 0.0
    %1811 = vmatprep.subr.mxu0 0.0
    %1812 = vmatpush1.msra.mxu0 0.0
    %1813 = vmatprep.subr.mxu0 0.0
    %1814 = vmatpush1.msra.mxu0 0.0
    %1815 = vmatprep.mubr.f32.mxu0 0.0
    %1816 = vmatmul.mubr.f32.gmra.mrb[0].mxu0 %v1749
    %v1817 = vpop.f32.mrb[0].mxu0
    %v1818 = vadd.f32 0.0, %v1817
    %v1819 = vpop.f32.mrb[0].mxu0
    %1820 = vdwg.mxu0
    %1822 = vrot.lane.b32.xlu0 %v1818, 24
    %v1823 = vpop.permute.xlu0 %1822
    %1825 = vst.msk [vmem:[#allocation2 + $0x8] sm:$0xff] %vm1135, %v1823
    %v1826 = vld [vmem:[#allocation2] sm:$0xff]
    %v1827 = vld [vmem:[#allocation2 + $0x8] sm:$0xff]
    %v1828 = vpack.c.bf16 %v1827, %v1826
    %v1829 = vld [vmem:[%s8] sm:$0xf]
    %v1830 = vld [vmem:[%s8 + $0x4] sm:$0xf]
    %v1831 = vld [vmem:[%s8 + $0x8] sm:$0xf]
    %v1832 = vld [vmem:[%s8 + $0xc] sm:$0xf]
    %v1833 = vlaneseq
    %v1834 = vshrl.u32 %v1833, 7
    %v1835 = vsub.s32 3, %v1834
    %v1836 = vrot.slane %v355, %v1835
    %v1841 = vunpack.c.l.b16 %v1829
    %v1842 = vunpack.c.l.b16 %v1830
    %v1843 = vunpack.c.l.b16 %v1831
    %v1844 = vunpack.c.l.b16 %v1832
    %v1845 = vpack.c.b16 %v1842, %v1841
    %v1846 = vpack.c.b16 %v1844, %v1843
    %v1850 = vsel %vm312, %v1828, 0
    %1852 = vmatprep.subr.bf16.mxu0 0
    %1853 = vmatpush1.bf16.msra.mxu0 %v1845
    %1854 = vmatprep.subr.bf16.mxu0 0
    %1855 = vmatpush1.bf16.msra.mxu0 %v1846
    %1856 = vmatprep.subr.bf16.mxu0 0
    %1857 = vmatpush1.bf16.msra.mxu0 0
    %1858 = vmatprep.subr.bf16.mxu0 0
    %1859 = vmatpush1.bf16.msra.mxu0 0
    %1860 = vmatprep.subr.bf16.mxu0 0
    %1861 = vmatpush1.bf16.msra.mxu0 0
    %1862 = vmatprep.subr.bf16.mxu0 0
    %1863 = vmatpush1.bf16.msra.mxu0 0
    %1864 = vmatprep.subr.bf16.mxu0 0
    %1865 = vmatpush1.bf16.msra.mxu0 0
    %1866 = vmatprep.subr.bf16.mxu0 0
    %1867 = vmatpush1.bf16.msra.mxu0 0
    %1868 = vmatprep.subr.bf16.mxu0 0
    %1869 = vmatpush1.bf16.msra.mxu0 0
    %1870 = vmatprep.subr.bf16.mxu0 0
    %1871 = vmatpush1.bf16.msra.mxu0 0
    %1872 = vmatprep.subr.bf16.mxu0 0
    %1873 = vmatpush1.bf16.msra.mxu0 0
    %1874 = vmatprep.subr.bf16.mxu0 0
    %1875 = vmatpush1.bf16.msra.mxu0 0
    %1876 = vmatprep.subr.bf16.mxu0 0
    %1877 = vmatpush1.bf16.msra.mxu0 0
    %1878 = vmatprep.subr.bf16.mxu0 0
    %1879 = vmatpush1.bf16.msra.mxu0 0
    %1880 = vmatprep.subr.bf16.mxu0 0
    %1881 = vmatpush1.bf16.msra.mxu0 0
    %1882 = vmatprep.subr.bf16.mxu0 0
    %1883 = vmatpush1.bf16.msra.mxu0 0
    %1884 = vmatprep.mubr.bf16.mxu0 0
    %1885 = vmatmul.mubr.bf16.gmra.mrb[0].mxu0 %v1850
    %v1886 = vpop.f32.mrb[0].mxu0
    %v1887 = vadd.f32 %v1836, %v1886
    %v1888 = vpop.f32.mrb[0].mxu0
    %v1889 = vpop.f32.mrb[0].mxu0
    %v1890 = vadd.f32 %v1836, %v1889
    %v1891 = vpop.f32.mrb[0].mxu0
    %1892 = vdwg.mxu0
    %v1893 = vadd.f32 %v350, %v1887
    %v1894 = vadd.f32 %v351, %v1890
    %v1895 = vsel %vm312, %v1893, 0.0
    %1896 = vadd.xlane.f32.xlu0 %v1895
    %v1897 = vpop.xlane.xlu0 %1896
    %v1898 = vsel %vm312, %v1894, 0.0
    %1899 = vadd.xlane.f32.xlu0 %v1898
    %v1900 = vpop.xlane.xlu0 %1899
    %v1901 = vmul.f32 %v1897, %v319
    %v1902 = vmul.f32 %v1900, %v319
    %v1903 = vsub.f32 %v1893, %v1901
    %v1904 = vsub.f32 %v1894, %v1902
    %v1905 = vmul.f32 %v1903, %v1903
    %v1906 = vmul.f32 %v1904, %v1904
    %v1907 = vsel %vm312, %v1905, 0.0
    %1908 = vadd.xlane.f32.xlu0 %v1907
    %v1909 = vpop.xlane.xlu0 %1908
    %v1910 = vsel %vm312, %v1906, 0.0
    %1911 = vadd.xlane.f32.xlu0 %v1910
    %v1912 = vpop.xlane.xlu0 %1911
    %v1913 = vmul.f32 %v1909, %v319
    %v1914 = vmul.f32 %v1912, %v319
    %v1915 = vadd.f32 %v1913, 1e-05
    %v1916 = vadd.f32 %v1914, 1e-05
    %v1917 = vrsqrt.pop %v1915
    %v1918 = vrsqrt.pop %v1916
    %v1919 = vmul.f32 %v1903, %v1917
    %v1920 = vmul.f32 %v1904, %v1918
    %v1921 = vlaneseq
    %v1922 = vshrl.u32 %v1921, 7
    %v1923 = vsub.s32 5, %v1922
    %v1924 = vrot.slane %v355, %v1923
    %v1925 = vmul.f32 %v1919, %v1924
    %v1926 = vmul.f32 %v1920, %v1924
    %v1927 = vlaneseq
    %v1928 = vshrl.u32 %v1927, 7
    %v1929 = vsub.s32 6, %v1928
    %v1930 = vrot.slane %v355, %v1929
    %v1931 = vadd.f32 %v1925, %v1930
    %v1932 = vadd.f32 %v1926, %v1930
    %v1933 = vpack.c.bf16 %v1932, %v1931
    %v1934 = vld [vmem:[%s9] sm:$0xf]
    %v1935 = vld [vmem:[%s9 + $0x4] sm:$0xf]
    %v1936 = vld [vmem:[%s9 + $0x8] sm:$0xf]
    %v1937 = vld [vmem:[%s9 + $0xc] sm:$0xf]
    %v1938 = vld [vmem:[%s12] sm:$0x1]
    %v1940 = vlaneseq
    %v1941 = vshrl.u32 %v1940, 7
    %v1942 = vsub.s32 0, %v1941
    %v1943 = vrot.slane %v1938, %v1942
    %v1949 = vunpack.c.l.b16 %v1934
    %v1950 = vunpack.c.l.b16 %v1935
    %v1951 = vunpack.c.l.b16 %v1936
    %v1952 = vunpack.c.l.b16 %v1937
    %v1953 = vpack.c.b16 %v1950, %v1949
    %v1954 = vpack.c.b16 %v1952, %v1951
    %v1958 = vsel %vm312, %v1933, 0
    %1960 = vmatprep.subr.bf16.mxu0 0
    %1961 = vmatpush1.bf16.msra.mxu0 %v1953
    %1962 = vmatprep.subr.bf16.mxu0 0
    %1963 = vmatpush1.bf16.msra.mxu0 %v1954
    %1964 = vmatprep.subr.bf16.mxu0 0
    %1965 = vmatpush1.bf16.msra.mxu0 0
    %1966 = vmatprep.subr.bf16.mxu0 0
    %1967 = vmatpush1.bf16.msra.mxu0 0
    %1968 = vmatprep.subr.bf16.mxu0 0
    %1969 = vmatpush1.bf16.msra.mxu0 0
    %1970 = vmatprep.subr.bf16.mxu0 0
    %1971 = vmatpush1.bf16.msra.mxu0 0
    %1972 = vmatprep.subr.bf16.mxu0 0
    %1973 = vmatpush1.bf16.msra.mxu0 0
    %1974 = vmatprep.subr.bf16.mxu0 0
    %1975 = vmatpush1.bf16.msra.mxu0 0
    %1976 = vmatprep.subr.bf16.mxu0 0
    %1977 = vmatpush1.bf16.msra.mxu0 0
    %1978 = vmatprep.subr.bf16.mxu0 0
    %1979 = vmatpush1.bf16.msra.mxu0 0
    %1980 = vmatprep.subr.bf16.mxu0 0
    %1981 = vmatpush1.bf16.msra.mxu0 0
    %1982 = vmatprep.subr.bf16.mxu0 0
    %1983 = vmatpush1.bf16.msra.mxu0 0
    %1984 = vmatprep.subr.bf16.mxu0 0
    %1985 = vmatpush1.bf16.msra.mxu0 0
    %1986 = vmatprep.subr.bf16.mxu0 0
    %1987 = vmatpush1.bf16.msra.mxu0 0
    %1988 = vmatprep.subr.bf16.mxu0 0
    %1989 = vmatpush1.bf16.msra.mxu0 0
    %1990 = vmatprep.subr.bf16.mxu0 0
    %1991 = vmatpush1.bf16.msra.mxu0 0
    %1992 = vmatprep.mubr.bf16.mxu0 0
    %1993 = vmatmul.mubr.bf16.gmra.mrb[0].mxu0 %v1958
    %v1994 = vpop.f32.mrb[0].mxu0
    %v1995 = vadd.f32 %v1943, %v1994
    %v1996 = vpop.f32.mrb[0].mxu0
    %v1997 = vpop.f32.mrb[0].mxu0
    %v1998 = vadd.f32 %v1943, %v1997
    %v1999 = vpop.f32.mrb[0].mxu0
    %2000 = vdwg.mxu0
    %v2001 = vmul.f32 %v1995, 0.5
    %v2002 = vmul.f32 %v1998, 0.5
    %v2003 = vmul.f32 %v1995, 0.044715
    %v2004 = vmul.f32 %v1998, 0.044715
    %v2005 = vmul.f32 %v2003, %v1995
    %v2006 = vmul.f32 %v2004, %v1998
    %v2007 = vmul.f32 %v2005, %v1995
    %v2008 = vmul.f32 %v2006, %v1998
    %v2009 = vadd.f32 %v1995, %v2007
    %v2010 = vadd.f32 %v1998, %v2008
    %v2011 = vmul.f32 %v2009, 0.7978846
    %v2012 = vmul.f32 %v2010, 0.7978846
    %v2013 = vtanh.pop %v2011
    %v2014 = vtanh.pop %v2012
    %v2015 = vadd.f32 %v2013, 1.0
    %v2016 = vadd.f32 %v2014, 1.0
    %v2017 = vmul.f32 %v2001, %v2015
    %v2018 = vmul.f32 %v2002, %v2016
    %v2019 = vpack.c.bf16 %v2018, %v2017
    %v2020 = vld [vmem:[%s10] sm:$0xf]
    %v2021 = vld [vmem:[%s10 + $0x4] sm:$0xf]
    %v2022 = vld [vmem:[%s10 + $0x8] sm:$0xf]
    %v2023 = vld [vmem:[%s10 + $0xc] sm:$0xf]
    %v2024 = vld [vmem:[%s10 + $0x10] sm:$0xf]
    %v2025 = vld [vmem:[%s10 + $0x14] sm:$0xf]
    %v2026 = vld [vmem:[%s10 + $0x18] sm:$0xf]
    %v2027 = vld [vmem:[%s10 + $0x1c] sm:$0xf]
    %v2028 = vlaneseq
    %v2029 = vshrl.u32 %v2028, 7
    %v2030 = vsub.s32 4, %v2029
    %v2031 = vrot.slane %v355, %v2030
    %v2040 = vunpack.c.l.b16 %v2020
    %v2041 = vunpack.c.l.b16 %v2021
    %v2042 = vunpack.c.l.b16 %v2022
    %v2043 = vunpack.c.l.b16 %v2023
    %v2044 = vunpack.c.l.b16 %v2024
    %v2045 = vunpack.c.l.b16 %v2025
    %v2046 = vunpack.c.l.b16 %v2026
    %v2047 = vunpack.c.l.b16 %v2027
    %v2048 = vpack.c.b16 %v2041, %v2040
    %v2049 = vpack.c.b16 %v2043, %v2042
    %v2050 = vpack.c.b16 %v2045, %v2044
    %v2051 = vpack.c.b16 %v2047, %v2046
    %vm2056 = vcmask 523264
    %v2058 = vsel %vm2056, %v2019, 0
    %2060 = vmatprep.subr.bf16.mxu0 0
    %2061 = vmatpush1.bf16.msra.mxu0 %v2048
    %2062 = vmatprep.subr.bf16.mxu0 0
    %2063 = vmatpush1.bf16.msra.mxu0 %v2049
    %2064 = vmatprep.subr.bf16.mxu0 0
    %2065 = vmatpush1.bf16.msra.mxu0 %v2050
    %2066 = vmatprep.subr.bf16.mxu0 0
    %2067 = vmatpush1.bf16.msra.mxu0 %v2051
    %2068 = vmatprep.subr.bf16.mxu0 0
    %2069 = vmatpush1.bf16.msra.mxu0 0
    %2070 = vmatprep.subr.bf16.mxu0 0
    %2071 = vmatpush1.bf16.msra.mxu0 0
    %2072 = vmatprep.subr.bf16.mxu0 0
    %2073 = vmatpush1.bf16.msra.mxu0 0
    %2074 = vmatprep.subr.bf16.mxu0 0
    %2075 = vmatpush1.bf16.msra.mxu0 0
    %2076 = vmatprep.subr.bf16.mxu0 0
    %2077 = vmatpush1.bf16.msra.mxu0 0
    %2078 = vmatprep.subr.bf16.mxu0 0
    %2079 = vmatpush1.bf16.msra.mxu0 0
    %2080 = vmatprep.subr.bf16.mxu0 0
    %2081 = vmatpush1.bf16.msra.mxu0 0
    %2082 = vmatprep.subr.bf16.mxu0 0
    %2083 = vmatpush1.bf16.msra.mxu0 0
    %2084 = vmatprep.subr.bf16.mxu0 0
    %2085 = vmatpush1.bf16.msra.mxu0 0
    %2086 = vmatprep.subr.bf16.mxu0 0
    %2087 = vmatpush1.bf16.msra.mxu0 0
    %2088 = vmatprep.subr.bf16.mxu0 0
    %2089 = vmatpush1.bf16.msra.mxu0 0
    %2090 = vmatprep.subr.bf16.mxu0 0
    %2091 = vmatpush1.bf16.msra.mxu0 0
    %2092 = vmatprep.mubr.bf16.mxu0 0
    %2093 = vmatmul.mubr.bf16.gmra.mrb[0].mxu0 %v2058
    %v2094 = vpop.f32.mrb[0].mxu0
    %v2095 = vadd.f32 %v2031, %v2094
    %v2096 = vpop.f32.mrb[0].mxu0
    %v2097 = vpop.f32.mrb[0].mxu0
    %v2098 = vadd.f32 %v2031, %v2097
    %v2099 = vpop.f32.mrb[0].mxu0
    %2100 = vdwg.mxu0
    %v2101 = vadd.f32 %v1931, %v2095
    %v2102 = vadd.f32 %v1932, %v2098
    %v2103 = vsel %vm312, %v2101, 0.0
    %2104 = vadd.xlane.f32.xlu0 %v2103
    %v2105 = vpop.xlane.xlu0 %2104
    %v2106 = vsel %vm312, %v2102, 0.0
    %2107 = vadd.xlane.f32.xlu0 %v2106
    %v2108 = vpop.xlane.xlu0 %2107
    %v2109 = vmul.f32 %v2105, %v319
    %v2110 = vmul.f32 %v2108, %v319
    %v2111 = vsub.f32 %v2101, %v2109
    %v2112 = vsub.f32 %v2102, %v2110
    %v2113 = vmul.f32 %v2111, %v2111
    %v2114 = vmul.f32 %v2112, %v2112
    %v2115 = vsel %vm312, %v2113, 0.0
    %2116 = vadd.xlane.f32.xlu0 %v2115
    %v2117 = vpop.xlane.xlu0 %2116
    %v2118 = vsel %vm312, %v2114, 0.0
    %2119 = vadd.xlane.f32.xlu0 %v2118
    %v2120 = vpop.xlane.xlu0 %2119
    %v2121 = vmul.f32 %v2117, %v319
    %v2122 = vmul.f32 %v2120, %v319
    %v2123 = vadd.f32 %v2121, 1e-05
    %v2124 = vadd.f32 %v2122, 1e-05
    %v2125 = vrsqrt.pop %v2123
    %v2126 = vrsqrt.pop %v2124
    %v2127 = vmul.f32 %v2111, %v2125
    %v2128 = vmul.f32 %v2112, %v2126
    %v2129 = vlaneseq
    %v2130 = vshrl.u32 %v2129, 7
    %v2131 = vsub.s32 7, %v2130
    %v2132 = vrot.slane %v355, %v2131
    %v2133 = vmul.f32 %v2127, %v2132
    %v2134 = vmul.f32 %v2128, %v2132
    %v2135 = vlaneseq
    %v2136 = vshrl.u32 %v2135, 7
    %v2137 = vsub.s32 0, %v2136
    %v2138 = vrot.slane %v356, %v2137
    %v2139 = vadd.f32 %v2133, %v2138
    %v2140 = vadd.f32 %v2134, %v2138
    %s2141 = scalar_lea.vmem %s11, 16
    %v2142 = vld [vmem:[%s2141] sm:$0xff]
    %v2143 = vld [vmem:[%s2141 + $0x8] sm:$0x1]
    %v2144 = vpack.c.bf16 %v2140, %v2139
    %s2145 = scalar_lea.vmem %s7, 16
    %v2146 = vld [vmem:[%s2145] sm:$0xf]
    %v2147 = vld [vmem:[%s2145 + $0x4] sm:$0xf]
    %v2148 = vld [vmem:[%s2145 + $0x8] sm:$0xf]
    %v2149 = vld [vmem:[%s2145 + $0xc] sm:$0xf]
    %v2154 = vunpack.c.l.b16 %v2146
    %v2155 = vunpack.c.l.b16 %v2147
    %v2156 = vunpack.c.l.b16 %v2148
    %v2157 = vunpack.c.l.b16 %v2149
    %v2158 = vpack.c.b16 %v2155, %v2154
    %v2159 = vpack.c.b16 %v2157, %v2156
    %v2163 = vsel %vm312, %v2144, 0
    %2165 = vmatprep.subr.bf16.mxu0 0
    %2166 = vmatpush1.bf16.msra.mxu0 %v2158
    %2167 = vmatprep.subr.bf16.mxu0 0
    %2168 = vmatpush1.bf16.msra.mxu0 %v2159
    %2169 = vmatprep.subr.bf16.mxu0 0
    %2170 = vmatpush1.bf16.msra.mxu0 0
    %2171 = vmatprep.subr.bf16.mxu0 0
    %2172 = vmatpush1.bf16.msra.mxu0 0
    %2173 = vmatprep.subr.bf16.mxu0 0
    %2174 = vmatpush1.bf16.msra.mxu0 0
    %2175 = vmatprep.subr.bf16.mxu0 0
    %2176 = vmatpush1.bf16.msra.mxu0 0
    %2177 = vmatprep.subr.bf16.mxu0 0
    %2178 = vmatpush1.bf16.msra.mxu0 0
    %2179 = vmatprep.subr.bf16.mxu0 0
    %2180 = vmatpush1.bf16.msra.mxu0 0
    %2181 = vmatprep.subr.bf16.mxu0 0
    %2182 = vmatpush1.bf16.msra.mxu0 0
    %2183 = vmatprep.subr.bf16.mxu0 0
    %2184 = vmatpush1.bf16.msra.mxu0 0
    %2185 = vmatprep.subr.bf16.mxu0 0
    %2186 = vmatpush1.bf16.msra.mxu0 0
    %2187 = vmatprep.subr.bf16.mxu0 0
    %2188 = vmatpush1.bf16.msra.mxu0 0
    %2189 = vmatprep.subr.bf16.mxu0 0
    %2190 = vmatpush1.bf16.msra.mxu0 0
    %2191 = vmatprep.subr.bf16.mxu0 0
    %2192 = vmatpush1.bf16.msra.mxu0 0
    %2193 = vmatprep.subr.bf16.mxu0 0
    %2194 = vmatpush1.bf16.msra.mxu0 0
    %2195 = vmatprep.subr.bf16.mxu0 0
    %2196 = vmatpush1.bf16.msra.mxu0 0
    %2197 = vmatprep.mubr.bf16.mxu0 0
    %2198 = vmatmul.mubr.bf16.gmra.mrb[0].mxu0 %v2163
    %v2199 = vpop.f32.mrb[0].mxu0
    %v2200 = vadd.f32 0.0, %v2199
    %v2201 = vpop.f32.mrb[0].mxu0
    %v2202 = vpop.f32.mrb[0].mxu0
    %v2203 = vadd.f32 0.0, %v2202
    %v2204 = vpop.f32.mrb[0].mxu0
    %2205 = vdwg.mxu0
    %v2206 = vlaneseq
    %v2207 = vshrl.u32 %v2206, 7
    %v2208 = vsub.s32 0, %v2207
    %v2209 = vrot.slane %v2142, %v2208
    %v2210 = vadd.f32 %v2200, %v2209
    %v2211 = vadd.f32 %v2203, %v2209
    %v2212 = vlaneseq
    %v2213 = vshrl.u32 %v2212, 7
    %v2214 = vsub.s32 1, %v2213
    %v2215 = vrot.slane %v2142, %v2214
    %2217 = vrot.lane.b32.xlu0 %v2215, 32
    %v2218 = vpop.permute.xlu0 %2217
    %v2220 = vadd.f32 %v2200, %v2218
    %v2221 = vadd.f32 %v2203, %v2218
    %v2222 = vlaneseq
    %v2223 = vshrl.u32 %v2222, 7
    %v2224 = vsub.s32 2, %v2223
    %v2225 = vrot.slane %v2142, %v2224
    %2227 = vrot.lane.b32.xlu0 %v2225, 64
    %v2228 = vpop.permute.xlu0 %2227
    %v2230 = vadd.f32 %v2200, %v2228
    %v2231 = vadd.f32 %v2203, %v2228
    %2233 = vrot.lane.b32.xlu0 %v2220, 96
    %v2234 = vpop.permute.xlu0 %2233
    %v2236 = vsel %vm447, %v2210, 0
    %v2238 = vsel %vm447, %v2234, 0
    %2240 = vmatprep.subr.mxu0 0.0
    %2241 = vmatpush1.xpose.msra.mxu0 %v2238
    %2242 = vmatprep.subr.mxu0 0.0
    %2243 = vmatpush1.xpose.msra.mxu0 0.0
    %2244 = vmatprep.subr.mxu0 0.0
    %2245 = vmatpush1.xpose.msra.mxu0 0.0
    %2246 = vmatprep.subr.mxu0 0.0
    %2247 = vmatpush1.xpose.msra.mxu0 0.0
    %2248 = vmatprep.subr.mxu0 0.0
    %2249 = vmatpush1.xpose.msra.mxu0 0.0
    %2250 = vmatprep.subr.mxu0 0.0
    %2251 = vmatpush1.xpose.msra.mxu0 0.0
    %2252 = vmatprep.subr.mxu0 0.0
    %2253 = vmatpush1.xpose.msra.mxu0 0.0
    %2254 = vmatprep.subr.mxu0 0.0
    %2255 = vmatpush1.xpose.msra.mxu0 0.0
    %2256 = vmatprep.subr.mxu0 0.0
    %2257 = vmatpush1.xpose.msra.mxu0 0.0
    %2258 = vmatprep.subr.mxu0 0.0
    %2259 = vmatpush1.xpose.msra.mxu0 0.0
    %2260 = vmatprep.subr.mxu0 0.0
    %2261 = vmatpush1.xpose.msra.mxu0 0.0
    %2262 = vmatprep.subr.mxu0 0.0
    %2263 = vmatpush1.xpose.msra.mxu0 0.0
    %2264 = vmatprep.subr.mxu0 0.0
    %2265 = vmatpush1.xpose.msra.mxu0 0.0
    %2266 = vmatprep.subr.mxu0 0.0
    %2267 = vmatpush1.xpose.msra.mxu0 0.0
    %2268 = vmatprep.subr.mxu0 0.0
    %2269 = vmatpush1.xpose.msra.mxu0 0.0
    %2270 = vmatprep.subr.mxu0 0.0
    %2271 = vmatpush1.xpose.msra.mxu0 0.0
    %2272 = vmatprep.subr.mxu0 0.0
    %2273 = vmatpush1.xpose.msra.mxu0 0.0
    %2274 = vmatprep.subr.mxu0 0.0
    %2275 = vmatpush1.xpose.msra.mxu0 0.0
    %2276 = vmatprep.subr.mxu0 0.0
    %2277 = vmatpush1.xpose.msra.mxu0 0.0
    %2278 = vmatprep.subr.mxu0 0.0
    %2279 = vmatpush1.xpose.msra.mxu0 0.0
    %2280 = vmatprep.subr.mxu0 0.0
    %2281 = vmatpush1.xpose.msra.mxu0 0.0
    %2282 = vmatprep.subr.mxu0 0.0
    %2283 = vmatpush1.xpose.msra.mxu0 0.0
    %2284 = vmatprep.subr.mxu0 0.0
    %2285 = vmatpush1.xpose.msra.mxu0 0.0
    %2286 = vmatprep.subr.mxu0 0.0
    %2287 = vmatpush1.xpose.msra.mxu0 0.0
    %2288 = vmatprep.subr.mxu0 0.0
    %2289 = vmatpush1.xpose.msra.mxu0 0.0
    %2290 = vmatprep.subr.mxu0 0.0
    %2291 = vmatpush1.xpose.msra.mxu0 0.0
    %2292 = vmatprep.subr.mxu0 0.0
    %2293 = vmatpush1.xpose.msra.mxu0 0.0
    %2294 = vmatprep.subr.mxu0 0.0
    %2295 = vmatpush1.xpose.msra.mxu0 0.0
    %2296 = vmatprep.subr.mxu0 0.0
    %2297 = vmatpush1.xpose.msra.mxu0 0.0
    %2298 = vmatprep.subr.mxu0 0.0
    %2299 = vmatpush1.xpose.msra.mxu0 0.0
    %2300 = vmatprep.subr.mxu0 0.0
    %2301 = vmatpush1.xpose.msra.mxu0 0.0
    %2302 = vmatprep.subr.mxu0 0.0
    %2303 = vmatpush1.xpose.msra.mxu0 0.0
    %2304 = vmatprep.mubr.f32.mxu0 0.0
    %2305 = vmatmul.mubr.f32.gmra.mrb[0].mxu0 %v2236
    %v2306 = vpop.f32.mrb[0].mxu0
    %v2307 = vadd.f32 0.0, %v2306
    %v2308 = vpop.f32.mrb[0].mxu0
    %2309 = vdwg.mxu0
    %v2310 = vmul.f32 %v2307, 0.35355338
    %v2311 = vadd.f32 %v2310, %v527
    %v2312 = vsel %vm447, %v2311, -inf
    %2313 = vmax.xlane.f32.xlu0 %v2312
    %v2314 = vpop.xlane.xlu0 %2313
    %v2315 = vsub.f32 %v2311, %v2314
    %v2316 = vmul.f32 %v2315, 1.442695
    %v2317 = vpow.pop %v2316
    %v2318 = vsel %vm447, %v2317, 0.0
    %2319 = vadd.xlane.f32.xlu0 %v2318
    %v2320 = vpop.xlane.xlu0 %2319
    %v2321 = vrcp.pop %v2320
    %v2322 = vmul.f32 %v2317, %v2321
    %2324 = vrot.lane.b32.xlu0 %v2230, 64
    %v2325 = vpop.permute.xlu0 %2324
    %v2328 = vsel %vm447, %v2322, 0
    %2330 = vmatprep.subr.mxu0 0.0
    %2331 = vmatpush1.msra.mxu0 %v2325
    %2332 = vmatprep.subr.mxu0 0.0
    %2333 = vmatpush1.msra.mxu0 0.0
    %2334 = vmatprep.subr.mxu0 0.0
    %2335 = vmatpush1.msra.mxu0 0.0
    %2336 = vmatprep.subr.mxu0 0.0
    %2337 = vmatpush1.msra.mxu0 0.0
    %2338 = vmatprep.subr.mxu0 0.0
    %2339 = vmatpush1.msra.mxu0 0.0
    %2340 = vmatprep.subr.mxu0 0.0
    %2341 = vmatpush1.msra.mxu0 0.0
    %2342 = vmatprep.subr.mxu0 0.0
    %2343 = vmatpush1.msra.mxu0 0.0
    %2344 = vmatprep.subr.mxu0 0.0
    %2345 = vmatpush1.msra.mxu0 0.0
    %2346 = vmatprep.subr.mxu0 0.0
    %2347 = vmatpush1.msra.mxu0 0.0
    %2348 = vmatprep.subr.mxu0 0.0
    %2349 = vmatpush1.msra.mxu0 0.0
    %2350 = vmatprep.subr.mxu0 0.0
    %2351 = vmatpush1.msra.mxu0 0.0
    %2352 = vmatprep.subr.mxu0 0.0
    %2353 = vmatpush1.msra.mxu0 0.0
    %2354 = vmatprep.subr.mxu0 0.0
    %2355 = vmatpush1.msra.mxu0 0.0
    %2356 = vmatprep.subr.mxu0 0.0
    %2357 = vmatpush1.msra.mxu0 0.0
    %2358 = vmatprep.subr.mxu0 0.0
    %2359 = vmatpush1.msra.mxu0 0.0
    %2360 = vmatprep.subr.mxu0 0.0
    %2361 = vmatpush1.msra.mxu0 0.0
    %2362 = vmatprep.subr.mxu0 0.0
    %2363 = vmatpush1.msra.mxu0 0.0
    %2364 = vmatprep.subr.mxu0 0.0
    %2365 = vmatpush1.msra.mxu0 0.0
    %2366 = vmatprep.subr.mxu0 0.0
    %2367 = vmatpush1.msra.mxu0 0.0
    %2368 = vmatprep.subr.mxu0 0.0
    %2369 = vmatpush1.msra.mxu0 0.0
    %2370 = vmatprep.subr.mxu0 0.0
    %2371 = vmatpush1.msra.mxu0 0.0
    %2372 = vmatprep.subr.mxu0 0.0
    %2373 = vmatpush1.msra.mxu0 0.0
    %2374 = vmatprep.subr.mxu0 0.0
    %2375 = vmatpush1.msra.mxu0 0.0
    %2376 = vmatprep.subr.mxu0 0.0
    %2377 = vmatpush1.msra.mxu0 0.0
    %2378 = vmatprep.subr.mxu0 0.0
    %2379 = vmatpush1.msra.mxu0 0.0
    %2380 = vmatprep.subr.mxu0 0.0
    %2381 = vmatpush1.msra.mxu0 0.0
    %2382 = vmatprep.subr.mxu0 0.0
    %2383 = vmatpush1.msra.mxu0 0.0
    %2384 = vmatprep.subr.mxu0 0.0
    %2385 = vmatpush1.msra.mxu0 0.0
    %2386 = vmatprep.subr.mxu0 0.0
    %2387 = vmatpush1.msra.mxu0 0.0
    %2388 = vmatprep.subr.mxu0 0.0
    %2389 = vmatpush1.msra.mxu0 0.0
    %2390 = vmatprep.subr.mxu0 0.0
    %2391 = vmatpush1.msra.mxu0 0.0
    %2392 = vmatprep.subr.mxu0 0.0
    %2393 = vmatpush1.msra.mxu0 0.0
    %2394 = vmatprep.mubr.f32.mxu0 0.0
    %2395 = vmatmul.mubr.f32.gmra.mrb[0].mxu0 %v2328
    %v2396 = vpop.f32.mrb[0].mxu0
    %v2397 = vadd.f32 0.0, %v2396
    %v2398 = vpop.f32.mrb[0].mxu0
    %2399 = vdwg.mxu0
    %2400 = vst.msk [vmem:[#allocation2] sm:$0xff] %vm447, %v2397
    %2401 = vrot.lane.b32.xlu0 %v2210, 120
    %v2402 = vpop.permute.xlu0 %2401
    %2403 = vrot.lane.b32.xlu0 %v2220, 88
    %v2404 = vpop.permute.xlu0 %2403
    %v2405 = vsel %vm447, %v2402, 0
    %v2407 = vsel %vm447, %v2404, 0
    %2409 = vmatprep.subr.mxu0 0.0
    %2410 = vmatpush1.xpose.msra.mxu0 %v2407
    %2411 = vmatprep.subr.mxu0 0.0
    %2412 = vmatpush1.xpose.msra.mxu0 0.0
    %2413 = vmatprep.subr.mxu0 0.0
    %2414 = vmatpush1.xpose.msra.mxu0 0.0
    %2415 = vmatprep.subr.mxu0 0.0
    %2416 = vmatpush1.xpose.msra.mxu0 0.0
    %2417 = vmatprep.subr.mxu0 0.0
    %2418 = vmatpush1.xpose.msra.mxu0 0.0
    %2419 = vmatprep.subr.mxu0 0.0
    %2420 = vmatpush1.xpose.msra.mxu0 0.0
    %2421 = vmatprep.subr.mxu0 0.0
    %2422 = vmatpush1.xpose.msra.mxu0 0.0
    %2423 = vmatprep.subr.mxu0 0.0
    %2424 = vmatpush1.xpose.msra.mxu0 0.0
    %2425 = vmatprep.subr.mxu0 0.0
    %2426 = vmatpush1.xpose.msra.mxu0 0.0
    %2427 = vmatprep.subr.mxu0 0.0
    %2428 = vmatpush1.xpose.msra.mxu0 0.0
    %2429 = vmatprep.subr.mxu0 0.0
    %2430 = vmatpush1.xpose.msra.mxu0 0.0
    %2431 = vmatprep.subr.mxu0 0.0
    %2432 = vmatpush1.xpose.msra.mxu0 0.0
    %2433 = vmatprep.subr.mxu0 0.0
    %2434 = vmatpush1.xpose.msra.mxu0 0.0
    %2435 = vmatprep.subr.mxu0 0.0
    %2436 = vmatpush1.xpose.msra.mxu0 0.0
    %2437 = vmatprep.subr.mxu0 0.0
    %2438 = vmatpush1.xpose.msra.mxu0 0.0
    %2439 = vmatprep.subr.mxu0 0.0
    %2440 = vmatpush1.xpose.msra.mxu0 0.0
    %2441 = vmatprep.subr.mxu0 0.0
    %2442 = vmatpush1.xpose.msra.mxu0 0.0
    %2443 = vmatprep.subr.mxu0 0.0
    %2444 = vmatpush1.xpose.msra.mxu0 0.0
    %2445 = vmatprep.subr.mxu0 0.0
    %2446 = vmatpush1.xpose.msra.mxu0 0.0
    %2447 = vmatprep.subr.mxu0 0.0
    %2448 = vmatpush1.xpose.msra.mxu0 0.0
    %2449 = vmatprep.subr.mxu0 0.0
    %2450 = vmatpush1.xpose.msra.mxu0 0.0
    %2451 = vmatprep.subr.mxu0 0.0
    %2452 = vmatpush1.xpose.msra.mxu0 0.0
    %2453 = vmatprep.subr.mxu0 0.0
    %2454 = vmatpush1.xpose.msra.mxu0 0.0
    %2455 = vmatprep.subr.mxu0 0.0
    %2456 = vmatpush1.xpose.msra.mxu0 0.0
    %2457 = vmatprep.subr.mxu0 0.0
    %2458 = vmatpush1.xpose.msra.mxu0 0.0
    %2459 = vmatprep.subr.mxu0 0.0
    %2460 = vmatpush1.xpose.msra.mxu0 0.0
    %2461 = vmatprep.subr.mxu0 0.0
    %2462 = vmatpush1.xpose.msra.mxu0 0.0
    %2463 = vmatprep.subr.mxu0 0.0
    %2464 = vmatpush1.xpose.msra.mxu0 0.0
    %2465 = vmatprep.subr.mxu0 0.0
    %2466 = vmatpush1.xpose.msra.mxu0 0.0
    %2467 = vmatprep.subr.mxu0 0.0
    %2468 = vmatpush1.xpose.msra.mxu0 0.0
    %2469 = vmatprep.subr.mxu0 0.0
    %2470 = vmatpush1.xpose.msra.mxu0 0.0
    %2471 = vmatprep.subr.mxu0 0.0
    %2472 = vmatpush1.xpose.msra.mxu0 0.0
    %2473 = vmatprep.mubr.f32.mxu0 0.0
    %2474 = vmatmul.mubr.f32.gmra.mrb[0].mxu0 %v2405
    %v2475 = vpop.f32.mrb[0].mxu0
    %v2476 = vadd.f32 0.0, %v2475
    %v2477 = vpop.f32.mrb[0].mxu0
    %2478 = vdwg.mxu0
    %v2479 = vmul.f32 %v2476, 0.35355338
    %v2480 = vadd.f32 %v2479, %v527
    %v2481 = vsel %vm447, %v2480, -inf
    %2482 = vmax.xlane.f32.xlu0 %v2481
    %v2483 = vpop.xlane.xlu0 %2482
    %v2484 = vsub.f32 %v2480, %v2483
    %v2485 = vmul.f32 %v2484, 1.442695
    %v2486 = vpow.pop %v2485
    %v2487 = vsel %vm447, %v2486, 0.0
    %2488 = vadd.xlane.f32.xlu0 %v2487
    %v2489 = vpop.xlane.xlu0 %2488
    %v2490 = vrcp.pop %v2489
    %v2491 = vmul.f32 %v2486, %v2490
    %2492 = vrot.lane.b32.xlu0 %v2230, 56
    %v2493 = vpop.permute.xlu0 %2492
    %v2496 = vsel %vm447, %v2491, 0
    %2498 = vmatprep.subr.mxu0 0.0
    %2499 = vmatpush1.msra.mxu0 %v2493
    %2500 = vmatprep.subr.mxu0 0.0
    %2501 = vmatpush1.msra.mxu0 0.0
    %2502 = vmatprep.subr.mxu0 0.0
    %2503 = vmatpush1.msra.mxu0 0.0
    %2504 = vmatprep.subr.mxu0 0.0
    %2505 = vmatpush1.msra.mxu0 0.0
    %2506 = vmatprep.subr.mxu0 0.0
    %2507 = vmatpush1.msra.mxu0 0.0
    %2508 = vmatprep.subr.mxu0 0.0
    %2509 = vmatpush1.msra.mxu0 0.0
    %2510 = vmatprep.subr.mxu0 0.0
    %2511 = vmatpush1.msra.mxu0 0.0
    %2512 = vmatprep.subr.mxu0 0.0
    %2513 = vmatpush1.msra.mxu0 0.0
    %2514 = vmatprep.subr.mxu0 0.0
    %2515 = vmatpush1.msra.mxu0 0.0
    %2516 = vmatprep.subr.mxu0 0.0
    %2517 = vmatpush1.msra.mxu0 0.0
    %2518 = vmatprep.subr.mxu0 0.0
    %2519 = vmatpush1.msra.mxu0 0.0
    %2520 = vmatprep.subr.mxu0 0.0
    %2521 = vmatpush1.msra.mxu0 0.0
    %2522 = vmatprep.subr.mxu0 0.0
    %2523 = vmatpush1.msra.mxu0 0.0
    %2524 = vmatprep.subr.mxu0 0.0
    %2525 = vmatpush1.msra.mxu0 0.0
    %2526 = vmatprep.subr.mxu0 0.0
    %2527 = vmatpush1.msra.mxu0 0.0
    %2528 = vmatprep.subr.mxu0 0.0
    %2529 = vmatpush1.msra.mxu0 0.0
    %2530 = vmatprep.subr.mxu0 0.0
    %2531 = vmatpush1.msra.mxu0 0.0
    %2532 = vmatprep.subr.mxu0 0.0
    %2533 = vmatpush1.msra.mxu0 0.0
    %2534 = vmatprep.subr.mxu0 0.0
    %2535 = vmatpush1.msra.mxu0 0.0
    %2536 = vmatprep.subr.mxu0 0.0
    %2537 = vmatpush1.msra.mxu0 0.0
    %2538 = vmatprep.subr.mxu0 0.0
    %2539 = vmatpush1.msra.mxu0 0.0
    %2540 = vmatprep.subr.mxu0 0.0
    %2541 = vmatpush1.msra.mxu0 0.0
    %2542 = vmatprep.subr.mxu0 0.0
    %2543 = vmatpush1.msra.mxu0 0.0
    %2544 = vmatprep.subr.mxu0 0.0
    %2545 = vmatpush1.msra.mxu0 0.0
    %2546 = vmatprep.subr.mxu0 0.0
    %2547 = vmatpush1.msra.mxu0 0.0
    %2548 = vmatprep.subr.mxu0 0.0
    %2549 = vmatpush1.msra.mxu0 0.0
    %2550 = vmatprep.subr.mxu0 0.0
    %2551 = vmatpush1.msra.mxu0 0.0
    %2552 = vmatprep.subr.mxu0 0.0
    %2553 = vmatpush1.msra.mxu0 0.0
    %2554 = vmatprep.subr.mxu0 0.0
    %2555 = vmatpush1.msra.mxu0 0.0
    %2556 = vmatprep.subr.mxu0 0.0
    %2557 = vmatpush1.msra.mxu0 0.0
    %2558 = vmatprep.subr.mxu0 0.0
    %2559 = vmatpush1.msra.mxu0 0.0
    %2560 = vmatprep.subr.mxu0 0.0
    %2561 = vmatpush1.msra.mxu0 0.0
    %2562 = vmatprep.mubr.f32.mxu0 0.0
    %2563 = vmatmul.mubr.f32.gmra.mrb[0].mxu0 %v2496
    %v2564 = vpop.f32.mrb[0].mxu0
    %v2565 = vadd.f32 0.0, %v2564
    %v2566 = vpop.f32.mrb[0].mxu0
    %2567 = vdwg.mxu0
    %2569 = vrot.lane.b32.xlu0 %v2565, 8
    %v2570 = vpop.permute.xlu0 %2569
    %2572 = vst.msk [vmem:[#allocation2] sm:$0xff] %vm789, %v2570
    %2573 = vrot.lane.b32.xlu0 %v2210, 112
    %v2574 = vpop.permute.xlu0 %2573
    %2575 = vrot.lane.b32.xlu0 %v2220, 80
    %v2576 = vpop.permute.xlu0 %2575
    %v2577 = vsel %vm447, %v2574, 0
    %v2579 = vsel %vm447, %v2576, 0
    %2581 = vmatprep.subr.mxu0 0.0
    %2582 = vmatpush1.xpose.msra.mxu0 %v2579
    %2583 = vmatprep.subr.mxu0 0.0
    %2584 = vmatpush1.xpose.msra.mxu0 0.0
    %2585 = vmatprep.subr.mxu0 0.0
    %2586 = vmatpush1.xpose.msra.mxu0 0.0
    %2587 = vmatprep.subr.mxu0 0.0
    %2588 = vmatpush1.xpose.msra.mxu0 0.0
    %2589 = vmatprep.subr.mxu0 0.0
    %2590 = vmatpush1.xpose.msra.mxu0 0.0
    %2591 = vmatprep.subr.mxu0 0.0
    %2592 = vmatpush1.xpose.msra.mxu0 0.0
    %2593 = vmatprep.subr.mxu0 0.0
    %2594 = vmatpush1.xpose.msra.mxu0 0.0
    %2595 = vmatprep.subr.mxu0 0.0
    %2596 = vmatpush1.xpose.msra.mxu0 0.0
    %2597 = vmatprep.subr.mxu0 0.0
    %2598 = vmatpush1.xpose.msra.mxu0 0.0
    %2599 = vmatprep.subr.mxu0 0.0
    %2600 = vmatpush1.xpose.msra.mxu0 0.0
    %2601 = vmatprep.subr.mxu0 0.0
    %2602 = vmatpush1.xpose.msra.mxu0 0.0
    %2603 = vmatprep.subr.mxu0 0.0
    %2604 = vmatpush1.xpose.msra.mxu0 0.0
    %2605 = vmatprep.subr.mxu0 0.0
    %2606 = vmatpush1.xpose.msra.mxu0 0.0
    %2607 = vmatprep.subr.mxu0 0.0
    %2608 = vmatpush1.xpose.msra.mxu0 0.0
    %2609 = vmatprep.subr.mxu0 0.0
    %2610 = vmatpush1.xpose.msra.mxu0 0.0
    %2611 = vmatprep.subr.mxu0 0.0
    %2612 = vmatpush1.xpose.msra.mxu0 0.0
    %2613 = vmatprep.subr.mxu0 0.0
    %2614 = vmatpush1.xpose.msra.mxu0 0.0
    %2615 = vmatprep.subr.mxu0 0.0
    %2616 = vmatpush1.xpose.msra.mxu0 0.0
    %2617 = vmatprep.subr.mxu0 0.0
    %2618 = vmatpush1.xpose.msra.mxu0 0.0
    %2619 = vmatprep.subr.mxu0 0.0
    %2620 = vmatpush1.xpose.msra.mxu0 0.0
    %2621 = vmatprep.subr.mxu0 0.0
    %2622 = vmatpush1.xpose.msra.mxu0 0.0
    %2623 = vmatprep.subr.mxu0 0.0
    %2624 = vmatpush1.xpose.msra.mxu0 0.0
    %2625 = vmatprep.subr.mxu0 0.0
    %2626 = vmatpush1.xpose.msra.mxu0 0.0
    %2627 = vmatprep.subr.mxu0 0.0
    %2628 = vmatpush1.xpose.msra.mxu0 0.0
    %2629 = vmatprep.subr.mxu0 0.0
    %2630 = vmatpush1.xpose.msra.mxu0 0.0
    %2631 = vmatprep.subr.mxu0 0.0
    %2632 = vmatpush1.xpose.msra.mxu0 0.0
    %2633 = vmatprep.subr.mxu0 0.0
    %2634 = vmatpush1.xpose.msra.mxu0 0.0
    %2635 = vmatprep.subr.mxu0 0.0
    %2636 = vmatpush1.xpose.msra.mxu0 0.0
    %2637 = vmatprep.subr.mxu0 0.0
    %2638 = vmatpush1.xpose.msra.mxu0 0.0
    %2639 = vmatprep.subr.mxu0 0.0
    %2640 = vmatpush1.xpose.msra.mxu0 0.0
    %2641 = vmatprep.subr.mxu0 0.0
    %2642 = vmatpush1.xpose.msra.mxu0 0.0
    %2643 = vmatprep.subr.mxu0 0.0
    %2644 = vmatpush1.xpose.msra.mxu0 0.0
    %2645 = vmatprep.mubr.f32.mxu0 0.0
    %2646 = vmatmul.mubr.f32.gmra.mrb[0].mxu0 %v2577
    %v2647 = vpop.f32.mrb[0].mxu0
    %v2648 = vadd.f32 0.0, %v2647
    %v2649 = vpop.f32.mrb[0].mxu0
    %2650 = vdwg.mxu0
    %v2651 = vmul.f32 %v2648, 0.35355338
    %v2652 = vadd.f32 %v2651, %v527
    %v2653 = vsel %vm447, %v2652, -inf
    %2654 = vmax.xlane.f32.xlu0 %v2653
    %v2655 = vpop.xlane.xlu0 %2654
    %v2656 = vsub.f32 %v2652, %v2655
    %v2657 = vmul.f32 %v2656, 1.442695
    %v2658 = vpow.pop %v2657
    %v2659 = vsel %vm447, %v2658, 0.0
    %2660 = vadd.xlane.f32.xlu0 %v2659
    %v2661 = vpop.xlane.xlu0 %2660
    %v2662 = vrcp.pop %v2661
    %v2663 = vmul.f32 %v2658, %v2662
    %2664 = vrot.lane.b32.xlu0 %v2230, 48
    %v2665 = vpop.permute.xlu0 %2664
    %v2668 = vsel %vm447, %v2663, 0
    %2670 = vmatprep.subr.mxu0 0.0
    %2671 = vmatpush1.msra.mxu0 %v2665
    %2672 = vmatprep.subr.mxu0 0.0
    %2673 = vmatpush1.msra.mxu0 0.0
    %2674 = vmatprep.subr.mxu0 0.0
    %2675 = vmatpush1.msra.mxu0 0.0
    %2676 = vmatprep.subr.mxu0 0.0
    %2677 = vmatpush1.msra.mxu0 0.0
    %2678 = vmatprep.subr.mxu0 0.0
    %2679 = vmatpush1.msra.mxu0 0.0
    %2680 = vmatprep.subr.mxu0 0.0
    %2681 = vmatpush1.msra.mxu0 0.0
    %2682 = vmatprep.subr.mxu0 0.0
    %2683 = vmatpush1.msra.mxu0 0.0
    %2684 = vmatprep.subr.mxu0 0.0
    %2685 = vmatpush1.msra.mxu0 0.0
    %2686 = vmatprep.subr.mxu0 0.0
    %2687 = vmatpush1.msra.mxu0 0.0
    %2688 = vmatprep.subr.mxu0 0.0
    %2689 = vmatpush1.msra.mxu0 0.0
    %2690 = vmatprep.subr.mxu0 0.0
    %2691 = vmatpush1.msra.mxu0 0.0
    %2692 = vmatprep.subr.mxu0 0.0
    %2693 = vmatpush1.msra.mxu0 0.0
    %2694 = vmatprep.subr.mxu0 0.0
    %2695 = vmatpush1.msra.mxu0 0.0
    %2696 = vmatprep.subr.mxu0 0.0
    %2697 = vmatpush1.msra.mxu0 0.0
    %2698 = vmatprep.subr.mxu0 0.0
    %2699 = vmatpush1.msra.mxu0 0.0
    %2700 = vmatprep.subr.mxu0 0.0
    %2701 = vmatpush1.msra.mxu0 0.0
    %2702 = vmatprep.subr.mxu0 0.0
    %2703 = vmatpush1.msra.mxu0 0.0
    %2704 = vmatprep.subr.mxu0 0.0
    %2705 = vmatpush1.msra.mxu0 0.0
    %2706 = vmatprep.subr.mxu0 0.0
    %2707 = vmatpush1.msra.mxu0 0.0
    %2708 = vmatprep.subr.mxu0 0.0
    %2709 = vmatpush1.msra.mxu0 0.0
    %2710 = vmatprep.subr.mxu0 0.0
    %2711 = vmatpush1.msra.mxu0 0.0
    %2712 = vmatprep.subr.mxu0 0.0
    %2713 = vmatpush1.msra.mxu0 0.0
    %2714 = vmatprep.subr.mxu0 0.0
    %2715 = vmatpush1.msra.mxu0 0.0
    %2716 = vmatprep.subr.mxu0 0.0
    %2717 = vmatpush1.msra.mxu0 0.0
    %2718 = vmatprep.subr.mxu0 0.0
    %2719 = vmatpush1.msra.mxu0 0.0
    %2720 = vmatprep.subr.mxu0 0.0
    %2721 = vmatpush1.msra.mxu0 0.0
    %2722 = vmatprep.subr.mxu0 0.0
    %2723 = vmatpush1.msra.mxu0 0.0
    %2724 = vmatprep.subr.mxu0 0.0
    %2725 = vmatpush1.msra.mxu0 0.0
    %2726 = vmatprep.subr.mxu0 0.0
    %2727 = vmatpush1.msra.mxu0 0.0
    %2728 = vmatprep.subr.mxu0 0.0
    %2729 = vmatpush1.msra.mxu0 0.0
    %2730 = vmatprep.subr.mxu0 0.0
    %2731 = vmatpush1.msra.mxu0 0.0
    %2732 = vmatprep.subr.mxu0 0.0
    %2733 = vmatpush1.msra.mxu0 0.0
    %2734 = vmatprep.mubr.f32.mxu0 0.0
    %2735 = vmatmul.mubr.f32.gmra.mrb[0].mxu0 %v2668
    %v2736 = vpop.f32.mrb[0].mxu0
    %v2737 = vadd.f32 0.0, %v2736
    %v2738 = vpop.f32.mrb[0].mxu0
    %2739 = vdwg.mxu0
    %2741 = vrot.lane.b32.xlu0 %v2737, 16
    %v2742 = vpop.permute.xlu0 %2741
    %2744 = vst.msk [vmem:[#allocation2] sm:$0xff] %vm962, %v2742
    %2745 = vrot.lane.b32.xlu0 %v2210, 104
    %v2746 = vpop.permute.xlu0 %2745
    %2747 = vrot.lane.b32.xlu0 %v2220, 72
    %v2748 = vpop.permute.xlu0 %2747
    %v2749 = vsel %vm447, %v2746, 0
    %v2751 = vsel %vm447, %v2748, 0
    %2753 = vmatprep.subr.mxu0 0.0
    %2754 = vmatpush1.xpose.msra.mxu0 %v2751
    %2755 = vmatprep.subr.mxu0 0.0
    %2756 = vmatpush1.xpose.msra.mxu0 0.0
    %2757 = vmatprep.subr.mxu0 0.0
    %2758 = vmatpush1.xpose.msra.mxu0 0.0
    %2759 = vmatprep.subr.mxu0 0.0
    %2760 = vmatpush1.xpose.msra.mxu0 0.0
    %2761 = vmatprep.subr.mxu0 0.0
    %2762 = vmatpush1.xpose.msra.mxu0 0.0
    %2763 = vmatprep.subr.mxu0 0.0
    %2764 = vmatpush1.xpose.msra.mxu0 0.0
    %2765 = vmatprep.subr.mxu0 0.0
    %2766 = vmatpush1.xpose.msra.mxu0 0.0
    %2767 = vmatprep.subr.mxu0 0.0
    %2768 = vmatpush1.xpose.msra.mxu0 0.0
    %2769 = vmatprep.subr.mxu0 0.0
    %2770 = vmatpush1.xpose.msra.mxu0 0.0
    %2771 = vmatprep.subr.mxu0 0.0
    %2772 = vmatpush1.xpose.msra.mxu0 0.0
    %2773 = vmatprep.subr.mxu0 0.0
    %2774 = vmatpush1.xpose.msra.mxu0 0.0
    %2775 = vmatprep.subr.mxu0 0.0
    %2776 = vmatpush1.xpose.msra.mxu0 0.0
    %2777 = vmatprep.subr.mxu0 0.0
    %2778 = vmatpush1.xpose.msra.mxu0 0.0
    %2779 = vmatprep.subr.mxu0 0.0
    %2780 = vmatpush1.xpose.msra.mxu0 0.0
    %2781 = vmatprep.subr.mxu0 0.0
    %2782 = vmatpush1.xpose.msra.mxu0 0.0
    %2783 = vmatprep.subr.mxu0 0.0
    %2784 = vmatpush1.xpose.msra.mxu0 0.0
    %2785 = vmatprep.subr.mxu0 0.0
    %2786 = vmatpush1.xpose.msra.mxu0 0.0
    %2787 = vmatprep.subr.mxu0 0.0
    %2788 = vmatpush1.xpose.msra.mxu0 0.0
    %2789 = vmatprep.subr.mxu0 0.0
    %2790 = vmatpush1.xpose.msra.mxu0 0.0
    %2791 = vmatprep.subr.mxu0 0.0
    %2792 = vmatpush1.xpose.msra.mxu0 0.0
    %2793 = vmatprep.subr.mxu0 0.0
    %2794 = vmatpush1.xpose.msra.mxu0 0.0
    %2795 = vmatprep.subr.mxu0 0.0
    %2796 = vmatpush1.xpose.msra.mxu0 0.0
    %2797 = vmatprep.subr.mxu0 0.0
    %2798 = vmatpush1.xpose.msra.mxu0 0.0
    %2799 = vmatprep.subr.mxu0 0.0
    %2800 = vmatpush1.xpose.msra.mxu0 0.0
    %2801 = vmatprep.subr.mxu0 0.0
    %2802 = vmatpush1.xpose.msra.mxu0 0.0
    %2803 = vmatprep.subr.mxu0 0.0
    %2804 = vmatpush1.xpose.msra.mxu0 0.0
    %2805 = vmatprep.subr.mxu0 0.0
    %2806 = vmatpush1.xpose.msra.mxu0 0.0
    %2807 = vmatprep.subr.mxu0 0.0
    %2808 = vmatpush1.xpose.msra.mxu0 0.0
    %2809 = vmatprep.subr.mxu0 0.0
    %2810 = vmatpush1.xpose.msra.mxu0 0.0
    %2811 = vmatprep.subr.mxu0 0.0
    %2812 = vmatpush1.xpose.msra.mxu0 0.0
    %2813 = vmatprep.subr.mxu0 0.0
    %2814 = vmatpush1.xpose.msra.mxu0 0.0
    %2815 = vmatprep.subr.mxu0 0.0
    %2816 = vmatpush1.xpose.msra.mxu0 0.0
    %2817 = vmatprep.mubr.f32.mxu0 0.0
    %2818 = vmatmul.mubr.f32.gmra.mrb[0].mxu0 %v2749
    %v2819 = vpop.f32.mrb[0].mxu0
    %v2820 = vadd.f32 0.0, %v2819
    %v2821 = vpop.f32.mrb[0].mxu0
    %2822 = vdwg.mxu0
    %v2823 = vmul.f32 %v2820, 0.35355338
    %v2824 = vadd.f32 %v2823, %v527
    %v2825 = vsel %vm447, %v2824, -inf
    %2826 = vmax.xlane.f32.xlu0 %v2825
    %v2827 = vpop.xlane.xlu0 %2826
    %v2828 = vsub.f32 %v2824, %v2827
    %v2829 = vmul.f32 %v2828, 1.442695
    %v2830 = vpow.pop %v2829
    %v2831 = vsel %vm447, %v2830, 0.0
    %2832 = vadd.xlane.f32.xlu0 %v2831
    %v2833 = vpop.xlane.xlu0 %2832
    %v2834 = vrcp.pop %v2833
    %v2835 = vmul.f32 %v2830, %v2834
    %2836 = vrot.lane.b32.xlu0 %v2230, 40
    %v2837 = vpop.permute.xlu0 %2836
    %v2840 = vsel %vm447, %v2835, 0
    %2842 = vmatprep.subr.mxu0 0.0
    %2843 = vmatpush1.msra.mxu0 %v2837
    %2844 = vmatprep.subr.mxu0 0.0
    %2845 = vmatpush1.msra.mxu0 0.0
    %2846 = vmatprep.subr.mxu0 0.0
    %2847 = vmatpush1.msra.mxu0 0.0
    %2848 = vmatprep.subr.mxu0 0.0
    %2849 = vmatpush1.msra.mxu0 0.0
    %2850 = vmatprep.subr.mxu0 0.0
    %2851 = vmatpush1.msra.mxu0 0.0
    %2852 = vmatprep.subr.mxu0 0.0
    %2853 = vmatpush1.msra.mxu0 0.0
    %2854 = vmatprep.subr.mxu0 0.0
    %2855 = vmatpush1.msra.mxu0 0.0
    %2856 = vmatprep.subr.mxu0 0.0
    %2857 = vmatpush1.msra.mxu0 0.0
    %2858 = vmatprep.subr.mxu0 0.0
    %2859 = vmatpush1.msra.mxu0 0.0
    %2860 = vmatprep.subr.mxu0 0.0
    %2861 = vmatpush1.msra.mxu0 0.0
    %2862 = vmatprep.subr.mxu0 0.0
    %2863 = vmatpush1.msra.mxu0 0.0
    %2864 = vmatprep.subr.mxu0 0.0
    %2865 = vmatpush1.msra.mxu0 0.0
    %2866 = vmatprep.subr.mxu0 0.0
    %2867 = vmatpush1.msra.mxu0 0.0
    %2868 = vmatprep.subr.mxu0 0.0
    %2869 = vmatpush1.msra.mxu0 0.0
    %2870 = vmatprep.subr.mxu0 0.0
    %2871 = vmatpush1.msra.mxu0 0.0
    %2872 = vmatprep.subr.mxu0 0.0
    %2873 = vmatpush1.msra.mxu0 0.0
    %2874 = vmatprep.subr.mxu0 0.0
    %2875 = vmatpush1.msra.mxu0 0.0
    %2876 = vmatprep.subr.mxu0 0.0
    %2877 = vmatpush1.msra.mxu0 0.0
    %2878 = vmatprep.subr.mxu0 0.0
    %2879 = vmatpush1.msra.mxu0 0.0
    %2880 = vmatprep.subr.mxu0 0.0
    %2881 = vmatpush1.msra.mxu0 0.0
    %2882 = vmatprep.subr.mxu0 0.0
    %2883 = vmatpush1.msra.mxu0 0.0
    %2884 = vmatprep.subr.mxu0 0.0
    %2885 = vmatpush1.msra.mxu0 0.0
    %2886 = vmatprep.subr.mxu0 0.0
    %2887 = vmatpush1.msra.mxu0 0.0
    %2888 = vmatprep.subr.mxu0 0.0
    %2889 = vmatpush1.msra.mxu0 0.0
    %2890 = vmatprep.subr.mxu0 0.0
    %2891 = vmatpush1.msra.mxu0 0.0
    %2892 = vmatprep.subr.mxu0 0.0
    %2893 = vmatpush1.msra.mxu0 0.0
    %2894 = vmatprep.subr.mxu0 0.0
    %2895 = vmatpush1.msra.mxu0 0.0
    %2896 = vmatprep.subr.mxu0 0.0
    %2897 = vmatpush1.msra.mxu0 0.0
    %2898 = vmatprep.subr.mxu0 0.0
    %2899 = vmatpush1.msra.mxu0 0.0
    %2900 = vmatprep.subr.mxu0 0.0
    %2901 = vmatpush1.msra.mxu0 0.0
    %2902 = vmatprep.subr.mxu0 0.0
    %2903 = vmatpush1.msra.mxu0 0.0
    %2904 = vmatprep.subr.mxu0 0.0
    %2905 = vmatpush1.msra.mxu0 0.0
    %2906 = vmatprep.mubr.f32.mxu0 0.0
    %2907 = vmatmul.mubr.f32.gmra.mrb[0].mxu0 %v2840
    %v2908 = vpop.f32.mrb[0].mxu0
    %v2909 = vadd.f32 0.0, %v2908
    %v2910 = vpop.f32.mrb[0].mxu0
    %2911 = vdwg.mxu0
    %2913 = vrot.lane.b32.xlu0 %v2909, 24
    %v2914 = vpop.permute.xlu0 %2913
    %2916 = vst.msk [vmem:[#allocation2] sm:$0xff] %vm1135, %v2914
    %2918 = vrot.lane.b32.xlu0 %v2221, 96
    %v2919 = vpop.permute.xlu0 %2918
    %v2921 = vsel %vm447, %v2211, 0
    %v2923 = vsel %vm447, %v2919, 0
    %2925 = vmatprep.subr.mxu0 0.0
    %2926 = vmatpush1.xpose.msra.mxu0 %v2923
    %2927 = vmatprep.subr.mxu0 0.0
    %2928 = vmatpush1.xpose.msra.mxu0 0.0
    %2929 = vmatprep.subr.mxu0 0.0
    %2930 = vmatpush1.xpose.msra.mxu0 0.0
    %2931 = vmatprep.subr.mxu0 0.0
    %2932 = vmatpush1.xpose.msra.mxu0 0.0
    %2933 = vmatprep.subr.mxu0 0.0
    %2934 = vmatpush1.xpose.msra.mxu0 0.0
    %2935 = vmatprep.subr.mxu0 0.0
    %2936 = vmatpush1.xpose.msra.mxu0 0.0
    %2937 = vmatprep.subr.mxu0 0.0
    %2938 = vmatpush1.xpose.msra.mxu0 0.0
    %2939 = vmatprep.subr.mxu0 0.0
    %2940 = vmatpush1.xpose.msra.mxu0 0.0
    %2941 = vmatprep.subr.mxu0 0.0
    %2942 = vmatpush1.xpose.msra.mxu0 0.0
    %2943 = vmatprep.subr.mxu0 0.0
    %2944 = vmatpush1.xpose.msra.mxu0 0.0
    %2945 = vmatprep.subr.mxu0 0.0
    %2946 = vmatpush1.xpose.msra.mxu0 0.0
    %2947 = vmatprep.subr.mxu0 0.0
    %2948 = vmatpush1.xpose.msra.mxu0 0.0
    %2949 = vmatprep.subr.mxu0 0.0
    %2950 = vmatpush1.xpose.msra.mxu0 0.0
    %2951 = vmatprep.subr.mxu0 0.0
    %2952 = vmatpush1.xpose.msra.mxu0 0.0
    %2953 = vmatprep.subr.mxu0 0.0
    %2954 = vmatpush1.xpose.msra.mxu0 0.0
    %2955 = vmatprep.subr.mxu0 0.0
    %2956 = vmatpush1.xpose.msra.mxu0 0.0
    %2957 = vmatprep.subr.mxu0 0.0
    %2958 = vmatpush1.xpose.msra.mxu0 0.0
    %2959 = vmatprep.subr.mxu0 0.0
    %2960 = vmatpush1.xpose.msra.mxu0 0.0
    %2961 = vmatprep.subr.mxu0 0.0
    %2962 = vmatpush1.xpose.msra.mxu0 0.0
    %2963 = vmatprep.subr.mxu0 0.0
    %2964 = vmatpush1.xpose.msra.mxu0 0.0
    %2965 = vmatprep.subr.mxu0 0.0
    %2966 = vmatpush1.xpose.msra.mxu0 0.0
    %2967 = vmatprep.subr.mxu0 0.0
    %2968 = vmatpush1.xpose.msra.mxu0 0.0
    %2969 = vmatprep.subr.mxu0 0.0
    %2970 = vmatpush1.xpose.msra.mxu0 0.0
    %2971 = vmatprep.subr.mxu0 0.0
    %2972 = vmatpush1.xpose.msra.mxu0 0.0
    %2973 = vmatprep.subr.mxu0 0.0
    %2974 = vmatpush1.xpose.msra.mxu0 0.0
    %2975 = vmatprep.subr.mxu0 0.0
    %2976 = vmatpush1.xpose.msra.mxu0 0.0
    %2977 = vmatprep.subr.mxu0 0.0
    %2978 = vmatpush1.xpose.msra.mxu0 0.0
    %2979 = vmatprep.subr.mxu0 0.0
    %2980 = vmatpush1.xpose.msra.mxu0 0.0
    %2981 = vmatprep.subr.mxu0 0.0
    %2982 = vmatpush1.xpose.msra.mxu0 0.0
    %2983 = vmatprep.subr.mxu0 0.0
    %2984 = vmatpush1.xpose.msra.mxu0 0.0
    %2985 = vmatprep.subr.mxu0 0.0
    %2986 = vmatpush1.xpose.msra.mxu0 0.0
    %2987 = vmatprep.subr.mxu0 0.0
    %2988 = vmatpush1.xpose.msra.mxu0 0.0
    %2989 = vmatprep.mubr.f32.mxu0 0.0
    %2990 = vmatmul.mubr.f32.gmra.mrb[0].mxu0 %v2921
    %v2991 = vpop.f32.mrb[0].mxu0
    %v2992 = vadd.f32 0.0, %v2991
    %v2993 = vpop.f32.mrb[0].mxu0
    %2994 = vdwg.mxu0
    %v2995 = vmul.f32 %v2992, 0.35355338
    %v2996 = vadd.f32 %v2995, %v1219
    %v2997 = vsel %vm447, %v2996, -inf
    %2998 = vmax.xlane.f32.xlu0 %v2997
    %v2999 = vpop.xlane.xlu0 %2998
    %v3000 = vsub.f32 %v2996, %v2999
    %v3001 = vmul.f32 %v3000, 1.442695
    %v3002 = vpow.pop %v3001
    %v3003 = vsel %vm447, %v3002, 0.0
    %3004 = vadd.xlane.f32.xlu0 %v3003
    %v3005 = vpop.xlane.xlu0 %3004
    %v3006 = vrcp.pop %v3005
    %v3007 = vmul.f32 %v3002, %v3006
    %3009 = vrot.lane.b32.xlu0 %v2231, 64
    %v3010 = vpop.permute.xlu0 %3009
    %v3013 = vsel %vm447, %v3007, 0
    %3015 = vmatprep.subr.mxu0 0.0
    %3016 = vmatpush1.msra.mxu0 %v3010
    %3017 = vmatprep.subr.mxu0 0.0
    %3018 = vmatpush1.msra.mxu0 0.0
    %3019 = vmatprep.subr.mxu0 0.0
    %3020 = vmatpush1.msra.mxu0 0.0
    %3021 = vmatprep.subr.mxu0 0.0
    %3022 = vmatpush1.msra.mxu0 0.0
    %3023 = vmatprep.subr.mxu0 0.0
    %3024 = vmatpush1.msra.mxu0 0.0
    %3025 = vmatprep.subr.mxu0 0.0
    %3026 = vmatpush1.msra.mxu0 0.0
    %3027 = vmatprep.subr.mxu0 0.0
    %3028 = vmatpush1.msra.mxu0 0.0
    %3029 = vmatprep.subr.mxu0 0.0
    %3030 = vmatpush1.msra.mxu0 0.0
    %3031 = vmatprep.subr.mxu0 0.0
    %3032 = vmatpush1.msra.mxu0 0.0
    %3033 = vmatprep.subr.mxu0 0.0
    %3034 = vmatpush1.msra.mxu0 0.0
    %3035 = vmatprep.subr.mxu0 0.0
    %3036 = vmatpush1.msra.mxu0 0.0
    %3037 = vmatprep.subr.mxu0 0.0
    %3038 = vmatpush1.msra.mxu0 0.0
    %3039 = vmatprep.subr.mxu0 0.0
    %3040 = vmatpush1.msra.mxu0 0.0
    %3041 = vmatprep.subr.mxu0 0.0
    %3042 = vmatpush1.msra.mxu0 0.0
    %3043 = vmatprep.subr.mxu0 0.0
    %3044 = vmatpush1.msra.mxu0 0.0
    %3045 = vmatprep.subr.mxu0 0.0
    %3046 = vmatpush1.msra.mxu0 0.0
    %3047 = vmatprep.subr.mxu0 0.0
    %3048 = vmatpush1.msra.mxu0 0.0
    %3049 = vmatprep.subr.mxu0 0.0
    %3050 = vmatpush1.msra.mxu0 0.0
    %3051 = vmatprep.subr.mxu0 0.0
    %3052 = vmatpush1.msra.mxu0 0.0
    %3053 = vmatprep.subr.mxu0 0.0
    %3054 = vmatpush1.msra.mxu0 0.0
    %3055 = vmatprep.subr.mxu0 0.0
    %3056 = vmatpush1.msra.mxu0 0.0
    %3057 = vmatprep.subr.mxu0 0.0
    %3058 = vmatpush1.msra.mxu0 0.0
    %3059 = vmatprep.subr.mxu0 0.0
    %3060 = vmatpush1.msra.mxu0 0.0
    %3061 = vmatprep.subr.mxu0 0.0
    %3062 = vmatpush1.msra.mxu0 0.0
    %3063 = vmatprep.subr.mxu0 0.0
    %3064 = vmatpush1.msra.mxu0 0.0
    %3065 = vmatprep.subr.mxu0 0.0
    %3066 = vmatpush1.msra.mxu0 0.0
    %3067 = vmatprep.subr.mxu0 0.0
    %3068 = vmatpush1.msra.mxu0 0.0
    %3069 = vmatprep.subr.mxu0 0.0
    %3070 = vmatpush1.msra.mxu0 0.0
    %3071 = vmatprep.subr.mxu0 0.0
    %3072 = vmatpush1.msra.mxu0 0.0
    %3073 = vmatprep.subr.mxu0 0.0
    %3074 = vmatpush1.msra.mxu0 0.0
    %3075 = vmatprep.subr.mxu0 0.0
    %3076 = vmatpush1.msra.mxu0 0.0
    %3077 = vmatprep.subr.mxu0 0.0
    %3078 = vmatpush1.msra.mxu0 0.0
    %3079 = vmatprep.mubr.f32.mxu0 0.0
    %3080 = vmatmul.mubr.f32.gmra.mrb[0].mxu0 %v3013
    %v3081 = vpop.f32.mrb[0].mxu0
    %v3082 = vadd.f32 0.0, %v3081
    %v3083 = vpop.f32.mrb[0].mxu0
    %3084 = vdwg.mxu0
    %3085 = vst.msk [vmem:[#allocation2 + $0x8] sm:$0xff] %vm447, %v3082
    %3086 = vrot.lane.b32.xlu0 %v2211, 120
    %v3087 = vpop.permute.xlu0 %3086
    %3088 = vrot.lane.b32.xlu0 %v2221, 88
    %v3089 = vpop.permute.xlu0 %3088
    %v3090 = vsel %vm447, %v3087, 0
    %v3092 = vsel %vm447, %v3089, 0
    %3094 = vmatprep.subr.mxu0 0.0
    %3095 = vmatpush1.xpose.msra.mxu0 %v3092
    %3096 = vmatprep.subr.mxu0 0.0
    %3097 = vmatpush1.xpose.msra.mxu0 0.0
    %3098 = vmatprep.subr.mxu0 0.0
    %3099 = vmatpush1.xpose.msra.mxu0 0.0
    %3100 = vmatprep.subr.mxu0 0.0
    %3101 = vmatpush1.xpose.msra.mxu0 0.0
    %3102 = vmatprep.subr.mxu0 0.0
    %3103 = vmatpush1.xpose.msra.mxu0 0.0
    %3104 = vmatprep.subr.mxu0 0.0
    %3105 = vmatpush1.xpose.msra.mxu0 0.0
    %3106 = vmatprep.subr.mxu0 0.0
    %3107 = vmatpush1.xpose.msra.mxu0 0.0
    %3108 = vmatprep.subr.mxu0 0.0
    %3109 = vmatpush1.xpose.msra.mxu0 0.0
    %3110 = vmatprep.subr.mxu0 0.0
    %3111 = vmatpush1.xpose.msra.mxu0 0.0
    %3112 = vmatprep.subr.mxu0 0.0
    %3113 = vmatpush1.xpose.msra.mxu0 0.0
    %3114 = vmatprep.subr.mxu0 0.0
    %3115 = vmatpush1.xpose.msra.mxu0 0.0
    %3116 = vmatprep.subr.mxu0 0.0
    %3117 = vmatpush1.xpose.msra.mxu0 0.0
    %3118 = vmatprep.subr.mxu0 0.0
    %3119 = vmatpush1.xpose.msra.mxu0 0.0
    %3120 = vmatprep.subr.mxu0 0.0
    %3121 = vmatpush1.xpose.msra.mxu0 0.0
    %3122 = vmatprep.subr.mxu0 0.0
    %3123 = vmatpush1.xpose.msra.mxu0 0.0
    %3124 = vmatprep.subr.mxu0 0.0
    %3125 = vmatpush1.xpose.msra.mxu0 0.0
    %3126 = vmatprep.subr.mxu0 0.0
    %3127 = vmatpush1.xpose.msra.mxu0 0.0
    %3128 = vmatprep.subr.mxu0 0.0
    %3129 = vmatpush1.xpose.msra.mxu0 0.0
    %3130 = vmatprep.subr.mxu0 0.0
    %3131 = vmatpush1.xpose.msra.mxu0 0.0
    %3132 = vmatprep.subr.mxu0 0.0
    %3133 = vmatpush1.xpose.msra.mxu0 0.0
    %3134 = vmatprep.subr.mxu0 0.0
    %3135 = vmatpush1.xpose.msra.mxu0 0.0
    %3136 = vmatprep.subr.mxu0 0.0
    %3137 = vmatpush1.xpose.msra.mxu0 0.0
    %3138 = vmatprep.subr.mxu0 0.0
    %3139 = vmatpush1.xpose.msra.mxu0 0.0
    %3140 = vmatprep.subr.mxu0 0.0
    %3141 = vmatpush1.xpose.msra.mxu0 0.0
    %3142 = vmatprep.subr.mxu0 0.0
    %3143 = vmatpush1.xpose.msra.mxu0 0.0
    %3144 = vmatprep.subr.mxu0 0.0
    %3145 = vmatpush1.xpose.msra.mxu0 0.0
    %3146 = vmatprep.subr.mxu0 0.0
    %3147 = vmatpush1.xpose.msra.mxu0 0.0
    %3148 = vmatprep.subr.mxu0 0.0
    %3149 = vmatpush1.xpose.msra.mxu0 0.0
    %3150 = vmatprep.subr.mxu0 0.0
    %3151 = vmatpush1.xpose.msra.mxu0 0.0
    %3152 = vmatprep.subr.mxu0 0.0
    %3153 = vmatpush1.xpose.msra.mxu0 0.0
    %3154 = vmatprep.subr.mxu0 0.0
    %3155 = vmatpush1.xpose.msra.mxu0 0.0
    %3156 = vmatprep.subr.mxu0 0.0
    %3157 = vmatpush1.xpose.msra.mxu0 0.0
    %3158 = vmatprep.mubr.f32.mxu0 0.0
    %3159 = vmatmul.mubr.f32.gmra.mrb[0].mxu0 %v3090
    %v3160 = vpop.f32.mrb[0].mxu0
    %v3161 = vadd.f32 0.0, %v3160
    %v3162 = vpop.f32.mrb[0].mxu0
    %3163 = vdwg.mxu0
    %v3164 = vmul.f32 %v3161, 0.35355338
    %v3165 = vadd.f32 %v3164, %v1219
    %v3166 = vsel %vm447, %v3165, -inf
    %3167 = vmax.xlane.f32.xlu0 %v3166
    %v3168 = vpop.xlane.xlu0 %3167
    %v3169 = vsub.f32 %v3165, %v3168
    %v3170 = vmul.f32 %v3169, 1.442695
    %v3171 = vpow.pop %v3170
    %v3172 = vsel %vm447, %v3171, 0.0
    %3173 = vadd.xlane.f32.xlu0 %v3172
    %v3174 = vpop.xlane.xlu0 %3173
    %v3175 = vrcp.pop %v3174
    %v3176 = vmul.f32 %v3171, %v3175
    %3177 = vrot.lane.b32.xlu0 %v2231, 56
    %v3178 = vpop.permute.xlu0 %3177
    %v3181 = vsel %vm447, %v3176, 0
    %3183 = vmatprep.subr.mxu0 0.0
    %3184 = vmatpush1.msra.mxu0 %v3178
    %3185 = vmatprep.subr.mxu0 0.0
    %3186 = vmatpush1.msra.mxu0 0.0
    %3187 = vmatprep.subr.mxu0 0.0
    %3188 = vmatpush1.msra.mxu0 0.0
    %3189 = vmatprep.subr.mxu0 0.0
    %3190 = vmatpush1.msra.mxu0 0.0
    %3191 = vmatprep.subr.mxu0 0.0
    %3192 = vmatpush1.msra.mxu0 0.0
    %3193 = vmatprep.subr.mxu0 0.0
    %3194 = vmatpush1.msra.mxu0 0.0
    %3195 = vmatprep.subr.mxu0 0.0
    %3196 = vmatpush1.msra.mxu0 0.0
    %3197 = vmatprep.subr.mxu0 0.0
    %3198 = vmatpush1.msra.mxu0 0.0
    %3199 = vmatprep.subr.mxu0 0.0
    %3200 = vmatpush1.msra.mxu0 0.0
    %3201 = vmatprep.subr.mxu0 0.0
    %3202 = vmatpush1.msra.mxu0 0.0
    %3203 = vmatprep.subr.mxu0 0.0
    %3204 = vmatpush1.msra.mxu0 0.0
    %3205 = vmatprep.subr.mxu0 0.0
    %3206 = vmatpush1.msra.mxu0 0.0
    %3207 = vmatprep.subr.mxu0 0.0
    %3208 = vmatpush1.msra.mxu0 0.0
    %3209 = vmatprep.subr.mxu0 0.0
    %3210 = vmatpush1.msra.mxu0 0.0
    %3211 = vmatprep.subr.mxu0 0.0
    %3212 = vmatpush1.msra.mxu0 0.0
    %3213 = vmatprep.subr.mxu0 0.0
    %3214 = vmatpush1.msra.mxu0 0.0
    %3215 = vmatprep.subr.mxu0 0.0
    %3216 = vmatpush1.msra.mxu0 0.0
    %3217 = vmatprep.subr.mxu0 0.0
    %3218 = vmatpush1.msra.mxu0 0.0
    %3219 = vmatprep.subr.mxu0 0.0
    %3220 = vmatpush1.msra.mxu0 0.0
    %3221 = vmatprep.subr.mxu0 0.0
    %3222 = vmatpush1.msra.mxu0 0.0
    %3223 = vmatprep.subr.mxu0 0.0
    %3224 = vmatpush1.msra.mxu0 0.0
    %3225 = vmatprep.subr.mxu0 0.0
    %3226 = vmatpush1.msra.mxu0 0.0
    %3227 = vmatprep.subr.mxu0 0.0
    %3228 = vmatpush1.msra.mxu0 0.0
    %3229 = vmatprep.subr.mxu0 0.0
    %3230 = vmatpush1.msra.mxu0 0.0
    %3231 = vmatprep.subr.mxu0 0.0
    %3232 = vmatpush1.msra.mxu0 0.0
    %3233 = vmatprep.subr.mxu0 0.0
    %3234 = vmatpush1.msra.mxu0 0.0
    %3235 = vmatprep.subr.mxu0 0.0
    %3236 = vmatpush1.msra.mxu0 0.0
    %3237 = vmatprep.subr.mxu0 0.0
    %3238 = vmatpush1.msra.mxu0 0.0
    %3239 = vmatprep.subr.mxu0 0.0
    %3240 = vmatpush1.msra.mxu0 0.0
    %3241 = vmatprep.subr.mxu0 0.0
    %3242 = vmatpush1.msra.mxu0 0.0
    %3243 = vmatprep.subr.mxu0 0.0
    %3244 = vmatpush1.msra.mxu0 0.0
    %3245 = vmatprep.subr.mxu0 0.0
    %3246 = vmatpush1.msra.mxu0 0.0
    %3247 = vmatprep.mubr.f32.mxu0 0.0
    %3248 = vmatmul.mubr.f32.gmra.mrb[0].mxu0 %v3181
    %v3249 = vpop.f32.mrb[0].mxu0
    %v3250 = vadd.f32 0.0, %v3249
    %v3251 = vpop.f32.mrb[0].mxu0
    %3252 = vdwg.mxu0
    %3254 = vrot.lane.b32.xlu0 %v3250, 8
    %v3255 = vpop.permute.xlu0 %3254
    %3257 = vst.msk [vmem:[#allocation2 + $0x8] sm:$0xff] %vm789, %v3255
    %3258 = vrot.lane.b32.xlu0 %v2211, 112
    %v3259 = vpop.permute.xlu0 %3258
    %3260 = vrot.lane.b32.xlu0 %v2221, 80
    %v3261 = vpop.permute.xlu0 %3260
    %v3262 = vsel %vm447, %v3259, 0
    %v3264 = vsel %vm447, %v3261, 0
    %3266 = vmatprep.subr.mxu0 0.0
    %3267 = vmatpush1.xpose.msra.mxu0 %v3264
    %3268 = vmatprep.subr.mxu0 0.0
    %3269 = vmatpush1.xpose.msra.mxu0 0.0
    %3270 = vmatprep.subr.mxu0 0.0
    %3271 = vmatpush1.xpose.msra.mxu0 0.0
    %3272 = vmatprep.subr.mxu0 0.0
    %3273 = vmatpush1.xpose.msra.mxu0 0.0
    %3274 = vmatprep.subr.mxu0 0.0
    %3275 = vmatpush1.xpose.msra.mxu0 0.0
    %3276 = vmatprep.subr.mxu0 0.0
    %3277 = vmatpush1.xpose.msra.mxu0 0.0
    %3278 = vmatprep.subr.mxu0 0.0
    %3279 = vmatpush1.xpose.msra.mxu0 0.0
    %3280 = vmatprep.subr.mxu0 0.0
    %3281 = vmatpush1.xpose.msra.mxu0 0.0
    %3282 = vmatprep.subr.mxu0 0.0
    %3283 = vmatpush1.xpose.msra.mxu0 0.0
    %3284 = vmatprep.subr.mxu0 0.0
    %3285 = vmatpush1.xpose.msra.mxu0 0.0
    %3286 = vmatprep.subr.mxu0 0.0
    %3287 = vmatpush1.xpose.msra.mxu0 0.0
    %3288 = vmatprep.subr.mxu0 0.0
    %3289 = vmatpush1.xpose.msra.mxu0 0.0
    %3290 = vmatprep.subr.mxu0 0.0
    %3291 = vmatpush1.xpose.msra.mxu0 0.0
    %3292 = vmatprep.subr.mxu0 0.0
    %3293 = vmatpush1.xpose.msra.mxu0 0.0
    %3294 = vmatprep.subr.mxu0 0.0
    %3295 = vmatpush1.xpose.msra.mxu0 0.0
    %3296 = vmatprep.subr.mxu0 0.0
    %3297 = vmatpush1.xpose.msra.mxu0 0.0
    %3298 = vmatprep.subr.mxu0 0.0
    %3299 = vmatpush1.xpose.msra.mxu0 0.0
    %3300 = vmatprep.subr.mxu0 0.0
    %3301 = vmatpush1.xpose.msra.mxu0 0.0
    %3302 = vmatprep.subr.mxu0 0.0
    %3303 = vmatpush1.xpose.msra.mxu0 0.0
    %3304 = vmatprep.subr.mxu0 0.0
    %3305 = vmatpush1.xpose.msra.mxu0 0.0
    %3306 = vmatprep.subr.mxu0 0.0
    %3307 = vmatpush1.xpose.msra.mxu0 0.0
    %3308 = vmatprep.subr.mxu0 0.0
    %3309 = vmatpush1.xpose.msra.mxu0 0.0
    %3310 = vmatprep.subr.mxu0 0.0
    %3311 = vmatpush1.xpose.msra.mxu0 0.0
    %3312 = vmatprep.subr.mxu0 0.0
    %3313 = vmatpush1.xpose.msra.mxu0 0.0
    %3314 = vmatprep.subr.mxu0 0.0
    %3315 = vmatpush1.xpose.msra.mxu0 0.0
    %3316 = vmatprep.subr.mxu0 0.0
    %3317 = vmatpush1.xpose.msra.mxu0 0.0
    %3318 = vmatprep.subr.mxu0 0.0
    %3319 = vmatpush1.xpose.msra.mxu0 0.0
    %3320 = vmatprep.subr.mxu0 0.0
    %3321 = vmatpush1.xpose.msra.mxu0 0.0
    %3322 = vmatprep.subr.mxu0 0.0
    %3323 = vmatpush1.xpose.msra.mxu0 0.0
    %3324 = vmatprep.subr.mxu0 0.0
    %3325 = vmatpush1.xpose.msra.mxu0 0.0
    %3326 = vmatprep.subr.mxu0 0.0
    %3327 = vmatpush1.xpose.msra.mxu0 0.0
    %3328 = vmatprep.subr.mxu0 0.0
    %3329 = vmatpush1.xpose.msra.mxu0 0.0
    %3330 = vmatprep.mubr.f32.mxu0 0.0
    %3331 = vmatmul.mubr.f32.gmra.mrb[0].mxu0 %v3262
    %v3332 = vpop.f32.mrb[0].mxu0
    %v3333 = vadd.f32 0.0, %v3332
    %v3334 = vpop.f32.mrb[0].mxu0
    %3335 = vdwg.mxu0
    %v3336 = vmul.f32 %v3333, 0.35355338
    %v3337 = vadd.f32 %v3336, %v1219
    %v3338 = vsel %vm447, %v3337, -inf
    %3339 = vmax.xlane.f32.xlu0 %v3338
    %v3340 = vpop.xlane.xlu0 %3339
    %v3341 = vsub.f32 %v3337, %v3340
    %v3342 = vmul.f32 %v3341, 1.442695
    %v3343 = vpow.pop %v3342
    %v3344 = vsel %vm447, %v3343, 0.0
    %3345 = vadd.xlane.f32.xlu0 %v3344
    %v3346 = vpop.xlane.xlu0 %3345
    %v3347 = vrcp.pop %v3346
    %v3348 = vmul.f32 %v3343, %v3347
    %3349 = vrot.lane.b32.xlu0 %v2231, 48
    %v3350 = vpop.permute.xlu0 %3349
    %v3353 = vsel %vm447, %v3348, 0
    %3355 = vmatprep.subr.mxu0 0.0
    %3356 = vmatpush1.msra.mxu0 %v3350
    %3357 = vmatprep.subr.mxu0 0.0
    %3358 = vmatpush1.msra.mxu0 0.0
    %3359 = vmatprep.subr.mxu0 0.0
    %3360 = vmatpush1.msra.mxu0 0.0
    %3361 = vmatprep.subr.mxu0 0.0
    %3362 = vmatpush1.msra.mxu0 0.0
    %3363 = vmatprep.subr.mxu0 0.0
    %3364 = vmatpush1.msra.mxu0 0.0
    %3365 = vmatprep.subr.mxu0 0.0
    %3366 = vmatpush1.msra.mxu0 0.0
    %3367 = vmatprep.subr.mxu0 0.0
    %3368 = vmatpush1.msra.mxu0 0.0
    %3369 = vmatprep.subr.mxu0 0.0
    %3370 = vmatpush1.msra.mxu0 0.0
    %3371 = vmatprep.subr.mxu0 0.0
    %3372 = vmatpush1.msra.mxu0 0.0
    %3373 = vmatprep.subr.mxu0 0.0
    %3374 = vmatpush1.msra.mxu0 0.0
    %3375 = vmatprep.subr.mxu0 0.0
    %3376 = vmatpush1.msra.mxu0 0.0
    %3377 = vmatprep.subr.mxu0 0.0
    %3378 = vmatpush1.msra.mxu0 0.0
    %3379 = vmatprep.subr.mxu0 0.0
    %3380 = vmatpush1.msra.mxu0 0.0
    %3381 = vmatprep.subr.mxu0 0.0
    %3382 = vmatpush1.msra.mxu0 0.0
    %3383 = vmatprep.subr.mxu0 0.0
    %3384 = vmatpush1.msra.mxu0 0.0
    %3385 = vmatprep.subr.mxu0 0.0
    %3386 = vmatpush1.msra.mxu0 0.0
    %3387 = vmatprep.subr.mxu0 0.0
    %3388 = vmatpush1.msra.mxu0 0.0
    %3389 = vmatprep.subr.mxu0 0.0
    %3390 = vmatpush1.msra.mxu0 0.0
    %3391 = vmatprep.subr.mxu0 0.0
    %3392 = vmatpush1.msra.mxu0 0.0
    %3393 = vmatprep.subr.mxu0 0.0
    %3394 = vmatpush1.msra.mxu0 0.0
    %3395 = vmatprep.subr.mxu0 0.0
    %3396 = vmatpush1.msra.mxu0 0.0
    %3397 = vmatprep.subr.mxu0 0.0
    %3398 = vmatpush1.msra.mxu0 0.0
    %3399 = vmatprep.subr.mxu0 0.0
    %3400 = vmatpush1.msra.mxu0 0.0
    %3401 = vmatprep.subr.mxu0 0.0
    %3402 = vmatpush1.msra.mxu0 0.0
    %3403 = vmatprep.subr.mxu0 0.0
    %3404 = vmatpush1.msra.mxu0 0.0
    %3405 = vmatprep.subr.mxu0 0.0
    %3406 = vmatpush1.msra.mxu0 0.0
    %3407 = vmatprep.subr.mxu0 0.0
    %3408 = vmatpush1.msra.mxu0 0.0
    %3409 = vmatprep.subr.mxu0 0.0
    %3410 = vmatpush1.msra.mxu0 0.0
    %3411 = vmatprep.subr.mxu0 0.0
    %3412 = vmatpush1.msra.mxu0 0.0
    %3413 = vmatprep.subr.mxu0 0.0
    %3414 = vmatpush1.msra.mxu0 0.0
    %3415 = vmatprep.subr.mxu0 0.0
    %3416 = vmatpush1.msra.mxu0 0.0
    %3417 = vmatprep.subr.mxu0 0.0
    %3418 = vmatpush1.msra.mxu0 0.0
    %3419 = vmatprep.mubr.f32.mxu0 0.0
    %3420 = vmatmul.mubr.f32.gmra.mrb[0].mxu0 %v3353
    %v3421 = vpop.f32.mrb[0].mxu0
    %v3422 = vadd.f32 0.0, %v3421
    %v3423 = vpop.f32.mrb[0].mxu0
    %3424 = vdwg.mxu0
    %3426 = vrot.lane.b32.xlu0 %v3422, 16
    %v3427 = vpop.permute.xlu0 %3426
    %3429 = vst.msk [vmem:[#allocation2 + $0x8] sm:$0xff] %vm962, %v3427
    %3430 = vrot.lane.b32.xlu0 %v2211, 104
    %v3431 = vpop.permute.xlu0 %3430
    %3432 = vrot.lane.b32.xlu0 %v2221, 72
    %v3433 = vpop.permute.xlu0 %3432
    %v3434 = vsel %vm447, %v3431, 0
    %v3436 = vsel %vm447, %v3433, 0
    %3438 = vmatprep.subr.mxu0 0.0
    %3439 = vmatpush1.xpose.msra.mxu0 %v3436
    %3440 = vmatprep.subr.mxu0 0.0
    %3441 = vmatpush1.xpose.msra.mxu0 0.0
    %3442 = vmatprep.subr.mxu0 0.0
    %3443 = vmatpush1.xpose.msra.mxu0 0.0
    %3444 = vmatprep.subr.mxu0 0.0
    %3445 = vmatpush1.xpose.msra.mxu0 0.0
    %3446 = vmatprep.subr.mxu0 0.0
    %3447 = vmatpush1.xpose.msra.mxu0 0.0
    %3448 = vmatprep.subr.mxu0 0.0
    %3449 = vmatpush1.xpose.msra.mxu0 0.0
    %3450 = vmatprep.subr.mxu0 0.0
    %3451 = vmatpush1.xpose.msra.mxu0 0.0
    %3452 = vmatprep.subr.mxu0 0.0
    %3453 = vmatpush1.xpose.msra.mxu0 0.0
    %3454 = vmatprep.subr.mxu0 0.0
    %3455 = vmatpush1.xpose.msra.mxu0 0.0
    %3456 = vmatprep.subr.mxu0 0.0
    %3457 = vmatpush1.xpose.msra.mxu0 0.0
    %3458 = vmatprep.subr.mxu0 0.0
    %3459 = vmatpush1.xpose.msra.mxu0 0.0
    %3460 = vmatprep.subr.mxu0 0.0
    %3461 = vmatpush1.xpose.msra.mxu0 0.0
    %3462 = vmatprep.subr.mxu0 0.0
    %3463 = vmatpush1.xpose.msra.mxu0 0.0
    %3464 = vmatprep.subr.mxu0 0.0
    %3465 = vmatpush1.xpose.msra.mxu0 0.0
    %3466 = vmatprep.subr.mxu0 0.0
    %3467 = vmatpush1.xpose.msra.mxu0 0.0
    %3468 = vmatprep.subr.mxu0 0.0
    %3469 = vmatpush1.xpose.msra.mxu0 0.0
    %3470 = vmatprep.subr.mxu0 0.0
    %3471 = vmatpush1.xpose.msra.mxu0 0.0
    %3472 = vmatprep.subr.mxu0 0.0
    %3473 = vmatpush1.xpose.msra.mxu0 0.0
    %3474 = vmatprep.subr.mxu0 0.0
    %3475 = vmatpush1.xpose.msra.mxu0 0.0
    %3476 = vmatprep.subr.mxu0 0.0
    %3477 = vmatpush1.xpose.msra.mxu0 0.0
    %3478 = vmatprep.subr.mxu0 0.0
    %3479 = vmatpush1.xpose.msra.mxu0 0.0
    %3480 = vmatprep.subr.mxu0 0.0
    %3481 = vmatpush1.xpose.msra.mxu0 0.0
    %3482 = vmatprep.subr.mxu0 0.0
    %3483 = vmatpush1.xpose.msra.mxu0 0.0
    %3484 = vmatprep.subr.mxu0 0.0
    %3485 = vmatpush1.xpose.msra.mxu0 0.0
    %3486 = vmatprep.subr.mxu0 0.0
    %3487 = vmatpush1.xpose.msra.mxu0 0.0
    %3488 = vmatprep.subr.mxu0 0.0
    %3489 = vmatpush1.xpose.msra.mxu0 0.0
    %3490 = vmatprep.subr.mxu0 0.0
    %3491 = vmatpush1.xpose.msra.mxu0 0.0
    %3492 = vmatprep.subr.mxu0 0.0
    %3493 = vmatpush1.xpose.msra.mxu0 0.0
    %3494 = vmatprep.subr.mxu0 0.0
    %3495 = vmatpush1.xpose.msra.mxu0 0.0
    %3496 = vmatprep.subr.mxu0 0.0
    %3497 = vmatpush1.xpose.msra.mxu0 0.0
    %3498 = vmatprep.subr.mxu0 0.0
    %3499 = vmatpush1.xpose.msra.mxu0 0.0
    %3500 = vmatprep.subr.mxu0 0.0
    %3501 = vmatpush1.xpose.msra.mxu0 0.0
    %3502 = vmatprep.mubr.f32.mxu0 0.0
    %3503 = vmatmul.mubr.f32.gmra.mrb[0].mxu0 %v3434
    %v3504 = vpop.f32.mrb[0].mxu0
    %v3505 = vadd.f32 0.0, %v3504
    %v3506 = vpop.f32.mrb[0].mxu0
    %3507 = vdwg.mxu0
    %v3508 = vmul.f32 %v3505, 0.35355338
    %v3509 = vadd.f32 %v3508, %v1219
    %v3510 = vsel %vm447, %v3509, -inf
    %3511 = vmax.xlane.f32.xlu0 %v3510
    %v3512 = vpop.xlane.xlu0 %3511
    %v3513 = vsub.f32 %v3509, %v3512
    %v3514 = vmul.f32 %v3513, 1.442695
    %v3515 = vpow.pop %v3514
    %v3516 = vsel %vm447, %v3515, 0.0
    %3517 = vadd.xlane.f32.xlu0 %v3516
    %v3518 = vpop.xlane.xlu0 %3517
    %v3519 = vrcp.pop %v3518
    %v3520 = vmul.f32 %v3515, %v3519
    %3521 = vrot.lane.b32.xlu0 %v2231, 40
    %v3522 = vpop.permute.xlu0 %3521
    %v3525 = vsel %vm447, %v3520, 0
    %3527 = vmatprep.subr.mxu0 0.0
    %3528 = vmatpush1.msra.mxu0 %v3522
    %3529 = vmatprep.subr.mxu0 0.0
    %3530 = vmatpush1.msra.mxu0 0.0
    %3531 = vmatprep.subr.mxu0 0.0
    %3532 = vmatpush1.msra.mxu0 0.0
    %3533 = vmatprep.subr.mxu0 0.0
    %3534 = vmatpush1.msra.mxu0 0.0
    %3535 = vmatprep.subr.mxu0 0.0
    %3536 = vmatpush1.msra.mxu0 0.0
    %3537 = vmatprep.subr.mxu0 0.0
    %3538 = vmatpush1.msra.mxu0 0.0
    %3539 = vmatprep.subr.mxu0 0.0
    %3540 = vmatpush1.msra.mxu0 0.0
    %3541 = vmatprep.subr.mxu0 0.0
    %3542 = vmatpush1.msra.mxu0 0.0
    %3543 = vmatprep.subr.mxu0 0.0
    %3544 = vmatpush1.msra.mxu0 0.0
    %3545 = vmatprep.subr.mxu0 0.0
    %3546 = vmatpush1.msra.mxu0 0.0
    %3547 = vmatprep.subr.mxu0 0.0
    %3548 = vmatpush1.msra.mxu0 0.0
    %3549 = vmatprep.subr.mxu0 0.0
    %3550 = vmatpush1.msra.mxu0 0.0
    %3551 = vmatprep.subr.mxu0 0.0
    %3552 = vmatpush1.msra.mxu0 0.0
    %3553 = vmatprep.subr.mxu0 0.0
    %3554 = vmatpush1.msra.mxu0 0.0
    %3555 = vmatprep.subr.mxu0 0.0
    %3556 = vmatpush1.msra.mxu0 0.0
    %3557 = vmatprep.subr.mxu0 0.0
    %3558 = vmatpush1.msra.mxu0 0.0
    %3559 = vmatprep.subr.mxu0 0.0
    %3560 = vmatpush1.msra.mxu0 0.0
    %3561 = vmatprep.subr.mxu0 0.0
    %3562 = vmatpush1.msra.mxu0 0.0
    %3563 = vmatprep.subr.mxu0 0.0
    %3564 = vmatpush1.msra.mxu0 0.0
    %3565 = vmatprep.subr.mxu0 0.0
    %3566 = vmatpush1.msra.mxu0 0.0
    %3567 = vmatprep.subr.mxu0 0.0
    %3568 = vmatpush1.msra.mxu0 0.0
    %3569 = vmatprep.subr.mxu0 0.0
    %3570 = vmatpush1.msra.mxu0 0.0
    %3571 = vmatprep.subr.mxu0 0.0
    %3572 = vmatpush1.msra.mxu0 0.0
    %3573 = vmatprep.subr.mxu0 0.0
    %3574 = vmatpush1.msra.mxu0 0.0
    %3575 = vmatprep.subr.mxu0 0.0
    %3576 = vmatpush1.msra.mxu0 0.0
    %3577 = vmatprep.subr.mxu0 0.0
    %3578 = vmatpush1.msra.mxu0 0.0
    %3579 = vmatprep.subr.mxu0 0.0
    %3580 = vmatpush1.msra.mxu0 0.0
    %3581 = vmatprep.subr.mxu0 0.0
    %3582 = vmatpush1.msra.mxu0 0.0
    %3583 = vmatprep.subr.mxu0 0.0
    %3584 = vmatpush1.msra.mxu0 0.0
    %3585 = vmatprep.subr.mxu0 0.0
    %3586 = vmatpush1.msra.mxu0 0.0
    %3587 = vmatprep.subr.mxu0 0.0
    %3588 = vmatpush1.msra.mxu0 0.0
    %3589 = vmatprep.subr.mxu0 0.0
    %3590 = vmatpush1.msra.mxu0 0.0
    %3591 = vmatprep.mubr.f32.mxu0 0.0
    %3592 = vmatmul.mubr.f32.gmra.mrb[0].mxu0 %v3525
    %v3593 = vpop.f32.mrb[0].mxu0
    %v3594 = vadd.f32 0.0, %v3593
    %v3595 = vpop.f32.mrb[0].mxu0
    %3596 = vdwg.mxu0
    %3598 = vrot.lane.b32.xlu0 %v3594, 24
    %v3599 = vpop.permute.xlu0 %3598
    %3601 = vst.msk [vmem:[#allocation2 + $0x8] sm:$0xff] %vm1135, %v3599
    %v3602 = vld [vmem:[#allocation2] sm:$0xff]
    %v3603 = vld [vmem:[#allocation2 + $0x8] sm:$0xff]
    %v3604 = vpack.c.bf16 %v3603, %v3602
    %s3605 = scalar_lea.vmem %s8, 16
    %v3606 = vld [vmem:[%s3605] sm:$0xf]
    %v3607 = vld [vmem:[%s3605 + $0x4] sm:$0xf]
    %v3608 = vld [vmem:[%s3605 + $0x8] sm:$0xf]
    %v3609 = vld [vmem:[%s3605 + $0xc] sm:$0xf]
    %v3610 = vlaneseq
    %v3611 = vshrl.u32 %v3610, 7
    %v3612 = vsub.s32 3, %v3611
    %v3613 = vrot.slane %v2142, %v3612
    %v3618 = vunpack.c.l.b16 %v3606
    %v3619 = vunpack.c.l.b16 %v3607
    %v3620 = vunpack.c.l.b16 %v3608
    %v3621 = vunpack.c.l.b16 %v3609
    %v3622 = vpack.c.b16 %v3619, %v3618
    %v3623 = vpack.c.b16 %v3621, %v3620
    %v3627 = vsel %vm312, %v3604, 0
    %3629 = vmatprep.subr.bf16.mxu0 0
    %3630 = vmatpush1.bf16.msra.mxu0 %v3622
    %3631 = vmatprep.subr.bf16.mxu0 0
    %3632 = vmatpush1.bf16.msra.mxu0 %v3623
    %3633 = vmatprep.subr.bf16.mxu0 0
    %3634 = vmatpush1.bf16.msra.mxu0 0
    %3635 = vmatprep.subr.bf16.mxu0 0
    %3636 = vmatpush1.bf16.msra.mxu0 0
    %3637 = vmatprep.subr.bf16.mxu0 0
    %3638 = vmatpush1.bf16.msra.mxu0 0
    %3639 = vmatprep.subr.bf16.mxu0 0
    %3640 = vmatpush1.bf16.msra.mxu0 0
    %3641 = vmatprep.subr.bf16.mxu0 0
    %3642 = vmatpush1.bf16.msra.mxu0 0
    %3643 = vmatprep.subr.bf16.mxu0 0
    %3644 = vmatpush1.bf16.msra.mxu0 0
    %3645 = vmatprep.subr.bf16.mxu0 0
    %3646 = vmatpush1.bf16.msra.mxu0 0
    %3647 = vmatprep.subr.bf16.mxu0 0
    %3648 = vmatpush1.bf16.msra.mxu0 0
    %3649 = vmatprep.subr.bf16.mxu0 0
    %3650 = vmatpush1.bf16.msra.mxu0 0
    %3651 = vmatprep.subr.bf16.mxu0 0
    %3652 = vmatpush1.bf16.msra.mxu0 0
    %3653 = vmatprep.subr.bf16.mxu0 0
    %3654 = vmatpush1.bf16.msra.mxu0 0
    %3655 = vmatprep.subr.bf16.mxu0 0
    %3656 = vmatpush1.bf16.msra.mxu0 0
    %3657 = vmatprep.subr.bf16.mxu0 0
    %3658 = vmatpush1.bf16.msra.mxu0 0
    %3659 = vmatprep.subr.bf16.mxu0 0
    %3660 = vmatpush1.bf16.msra.mxu0 0
    %3661 = vmatprep.mubr.bf16.mxu0 0
    %3662 = vmatmul.mubr.bf16.gmra.mrb[0].mxu0 %v3627
    %v3663 = vpop.f32.mrb[0].mxu0
    %v3664 = vadd.f32 %v3613, %v3663
    %v3665 = vpop.f32.mrb[0].mxu0
    %v3666 = vpop.f32.mrb[0].mxu0
    %v3667 = vadd.f32 %v3613, %v3666
    %v3668 = vpop.f32.mrb[0].mxu0
    %3669 = vdwg.mxu0
    %v3670 = vadd.f32 %v2139, %v3664
    %v3671 = vadd.f32 %v2140, %v3667
    %v3672 = vsel %vm312, %v3670, 0.0
    %3673 = vadd.xlane.f32.xlu0 %v3672
    %v3674 = vpop.xlane.xlu0 %3673
    %v3675 = vsel %vm312, %v3671, 0.0
    %3676 = vadd.xlane.f32.xlu0 %v3675
    %v3677 = vpop.xlane.xlu0 %3676
    %v3678 = vmul.f32 %v3674, %v319
    %v3679 = vmul.f32 %v3677, %v319
    %v3680 = vsub.f32 %v3670, %v3678
    %v3681 = vsub.f32 %v3671, %v3679
    %v3682 = vmul.f32 %v3680, %v3680
    %v3683 = vmul.f32 %v3681, %v3681
    %v3684 = vsel %vm312, %v3682, 0.0
    %3685 = vadd.xlane.f32.xlu0 %v3684
    %v3686 = vpop.xlane.xlu0 %3685
    %v3687 = vsel %vm312, %v3683, 0.0
    %3688 = vadd.xlane.f32.xlu0 %v3687
    %v3689 = vpop.xlane.xlu0 %3688
    %v3690 = vmul.f32 %v3686, %v319
    %v3691 = vmul.f32 %v3689, %v319
    %v3692 = vadd.f32 %v3690, 1e-05
    %v3693 = vadd.f32 %v3691, 1e-05
    %v3694 = vrsqrt.pop %v3692
    %v3695 = vrsqrt.pop %v3693
    %v3696 = vmul.f32 %v3680, %v3694
    %v3697 = vmul.f32 %v3681, %v3695
    %v3698 = vlaneseq
    %v3699 = vshrl.u32 %v3698, 7
    %v3700 = vsub.s32 5, %v3699
    %v3701 = vrot.slane %v2142, %v3700
    %v3702 = vmul.f32 %v3696, %v3701
    %v3703 = vmul.f32 %v3697, %v3701
    %v3704 = vlaneseq
    %v3705 = vshrl.u32 %v3704, 7
    %v3706 = vsub.s32 6, %v3705
    %v3707 = vrot.slane %v2142, %v3706
    %v3708 = vadd.f32 %v3702, %v3707
    %v3709 = vadd.f32 %v3703, %v3707
    %v3710 = vpack.c.bf16 %v3709, %v3708
    %s3711 = scalar_lea.vmem %s9, 16
    %v3712 = vld [vmem:[%s3711] sm:$0xf]
    %v3713 = vld [vmem:[%s3711 + $0x4] sm:$0xf]
    %v3714 = vld [vmem:[%s3711 + $0x8] sm:$0xf]
    %v3715 = vld [vmem:[%s3711 + $0xc] sm:$0xf]
    %s3716 = scalar_lea.vmem %s12, 1
    %v3717 = vld [vmem:[%s3716] sm:$0x1]
    %v3719 = vlaneseq
    %v3720 = vshrl.u32 %v3719, 7
    %v3721 = vsub.s32 0, %v3720
    %v3722 = vrot.slane %v3717, %v3721
    %v3728 = vunpack.c.l.b16 %v3712
    %v3729 = vunpack.c.l.b16 %v3713
    %v3730 = vunpack.c.l.b16 %v3714
    %v3731 = vunpack.c.l.b16 %v3715
    %v3732 = vpack.c.b16 %v3729, %v3728
    %v3733 = vpack.c.b16 %v3731, %v3730
    %v3737 = vsel %vm312, %v3710, 0
    %3739 = vmatprep.subr.bf16.mxu0 0
    %3740 = vmatpush1.bf16.msra.mxu0 %v3732
    %3741 = vmatprep.subr.bf16.mxu0 0
    %3742 = vmatpush1.bf16.msra.mxu0 %v3733
    %3743 = vmatprep.subr.bf16.mxu0 0
    %3744 = vmatpush1.bf16.msra.mxu0 0
    %3745 = vmatprep.subr.bf16.mxu0 0
    %3746 = vmatpush1.bf16.msra.mxu0 0
    %3747 = vmatprep.subr.bf16.mxu0 0
    %3748 = vmatpush1.bf16.msra.mxu0 0
    %3749 = vmatprep.subr.bf16.mxu0 0
    %3750 = vmatpush1.bf16.msra.mxu0 0
    %3751 = vmatprep.subr.bf16.mxu0 0
    %3752 = vmatpush1.bf16.msra.mxu0 0
    %3753 = vmatprep.subr.bf16.mxu0 0
    %3754 = vmatpush1.bf16.msra.mxu0 0
    %3755 = vmatprep.subr.bf16.mxu0 0
    %3756 = vmatpush1.bf16.msra.mxu0 0
    %3757 = vmatprep.subr.bf16.mxu0 0
    %3758 = vmatpush1.bf16.msra.mxu0 0
    %3759 = vmatprep.subr.bf16.mxu0 0
    %3760 = vmatpush1.bf16.msra.mxu0 0
    %3761 = vmatprep.subr.bf16.mxu0 0
    %3762 = vmatpush1.bf16.msra.mxu0 0
    %3763 = vmatprep.subr.bf16.mxu0 0
    %3764 = vmatpush1.bf16.msra.mxu0 0
    %3765 = vmatprep.subr.bf16.mxu0 0
    %3766 = vmatpush1.bf16.msra.mxu0 0
    %3767 = vmatprep.subr.bf16.mxu0 0
    %3768 = vmatpush1.bf16.msra.mxu0 0
    %3769 = vmatprep.subr.bf16.mxu0 0
    %3770 = vmatpush1.bf16.msra.mxu0 0
    %3771 = vmatprep.mubr.bf16.mxu0 0
    %3772 = vmatmul.mubr.bf16.gmra.mrb[0].mxu0 %v3737
    %v3773 = vpop.f32.mrb[0].mxu0
    %v3774 = vadd.f32 %v3722, %v3773
    %v3775 = vpop.f32.mrb[0].mxu0
    %v3776 = vpop.f32.mrb[0].mxu0
    %v3777 = vadd.f32 %v3722, %v3776
    %v3778 = vpop.f32.mrb[0].mxu0
    %3779 = vdwg.mxu0
    %v3780 = vmul.f32 %v3774, 0.5
    %v3781 = vmul.f32 %v3777, 0.5
    %v3782 = vmul.f32 %v3774, 0.044715
    %v3783 = vmul.f32 %v3777, 0.044715
    %v3784 = vmul.f32 %v3782, %v3774
    %v3785 = vmul.f32 %v3783, %v3777
    %v3786 = vmul.f32 %v3784, %v3774
    %v3787 = vmul.f32 %v3785, %v3777
    %v3788 = vadd.f32 %v3774, %v3786
    %v3789 = vadd.f32 %v3777, %v3787
    %v3790 = vmul.f32 %v3788, 0.7978846
    %v3791 = vmul.f32 %v3789, 0.7978846
    %v3792 = vtanh.pop %v3790
    %v3793 = vtanh.pop %v3791
    %v3794 = vadd.f32 %v3792, 1.0
    %v3795 = vadd.f32 %v3793, 1.0
    %v3796 = vmul.f32 %v3780, %v3794
    %v3797 = vmul.f32 %v3781, %v3795
    %v3798 = vpack.c.bf16 %v3797, %v3796
    %s3799 = scalar_lea.vmem %s10, 32
    %v3800 = vld [vmem:[%s3799] sm:$0xf]
    %v3801 = vld [vmem:[%s3799 + $0x4] sm:$0xf]
    %v3802 = vld [vmem:[%s3799 + $0x8] sm:$0xf]
    %v3803 = vld [vmem:[%s3799 + $0xc] sm:$0xf]
    %v3804 = vld [vmem:[%s3799 + $0x10] sm:$0xf]
    %v3805 = vld [vmem:[%s3799 + $0x14] sm:$0xf]
    %v3806 = vld [vmem:[%s3799 + $0x18] sm:$0xf]
    %v3807 = vld [vmem:[%s3799 + $0x1c] sm:$0xf]
    %v3808 = vlaneseq
    %v3809 = vshrl.u32 %v3808, 7
    %v3810 = vsub.s32 4, %v3809
    %v3811 = vrot.slane %v2142, %v3810
    %v3820 = vunpack.c.l.b16 %v3800
    %v3821 = vunpack.c.l.b16 %v3801
    %v3822 = vunpack.c.l.b16 %v3802
    %v3823 = vunpack.c.l.b16 %v3803
    %v3824 = vunpack.c.l.b16 %v3804
    %v3825 = vunpack.c.l.b16 %v3805
    %v3826 = vunpack.c.l.b16 %v3806
    %v3827 = vunpack.c.l.b16 %v3807
    %v3828 = vpack.c.b16 %v3821, %v3820
    %v3829 = vpack.c.b16 %v3823, %v3822
    %v3830 = vpack.c.b16 %v3825, %v3824
    %v3831 = vpack.c.b16 %v3827, %v3826
    %v3837 = vsel %vm2056, %v3798, 0
    %3839 = vmatprep.subr.bf16.mxu0 0
    %3840 = vmatpush1.bf16.msra.mxu0 %v3828
    %3841 = vmatprep.subr.bf16.mxu0 0
    %3842 = vmatpush1.bf16.msra.mxu0 %v3829
    %3843 = vmatprep.subr.bf16.mxu0 0
    %3844 = vmatpush1.bf16.msra.mxu0 %v3830
    %3845 = vmatprep.subr.bf16.mxu0 0
    %3846 = vmatpush1.bf16.msra.mxu0 %v3831
    %3847 = vmatprep.subr.bf16.mxu0 0
    %3848 = vmatpush1.bf16.msra.mxu0 0
    %3849 = vmatprep.subr.bf16.mxu0 0
    %3850 = vmatpush1.bf16.msra.mxu0 0
    %3851 = vmatprep.subr.bf16.mxu0 0
    %3852 = vmatpush1.bf16.msra.mxu0 0
    %3853 = vmatprep.subr.bf16.mxu0 0
    %3854 = vmatpush1.bf16.msra.mxu0 0
    %3855 = vmatprep.subr.bf16.mxu0 0
    %3856 = vmatpush1.bf16.msra.mxu0 0
    %3857 = vmatprep.subr.bf16.mxu0 0
    %3858 = vmatpush1.bf16.msra.mxu0 0
    %3859 = vmatprep.subr.bf16.mxu0 0
    %3860 = vmatpush1.bf16.msra.mxu0 0
    %3861 = vmatprep.subr.bf16.mxu0 0
    %3862 = vmatpush1.bf16.msra.mxu0 0
    %3863 = vmatprep.subr.bf16.mxu0 0
    %3864 = vmatpush1.bf16.msra.mxu0 0
    %3865 = vmatprep.subr.bf16.mxu0 0
    %3866 = vmatpush1.bf16.msra.mxu0 0
    %3867 = vmatprep.subr.bf16.mxu0 0
    %3868 = vmatpush1.bf16.msra.mxu0 0
    %3869 = vmatprep.subr.bf16.mxu0 0
    %3870 = vmatpush1.bf16.msra.mxu0 0
    %3871 = vmatprep.mubr.bf16.mxu0 0
    %3872 = vmatmul.mubr.bf16.gmra.mrb[0].mxu0 %v3837
    %v3873 = vpop.f32.mrb[0].mxu0
    %v3874 = vadd.f32 %v3811, %v3873
    %v3875 = vpop.f32.mrb[0].mxu0
    %v3876 = vpop.f32.mrb[0].mxu0
    %v3877 = vadd.f32 %v3811, %v3876
    %v3878 = vpop.f32.mrb[0].mxu0
    %3879 = vdwg.mxu0
    %v3880 = vadd.f32 %v3708, %v3874
    %v3881 = vadd.f32 %v3709, %v3877
    %v3882 = vsel %vm312, %v3880, 0.0
    %3883 = vadd.xlane.f32.xlu0 %v3882
    %v3884 = vpop.xlane.xlu0 %3883
    %v3885 = vsel %vm312, %v3881, 0.0
    %3886 = vadd.xlane.f32.xlu0 %v3885
    %v3887 = vpop.xlane.xlu0 %3886
    %v3888 = vmul.f32 %v3884, %v319
    %v3889 = vmul.f32 %v3887, %v319
    %v3890 = vsub.f32 %v3880, %v3888
    %v3891 = vsub.f32 %v3881, %v3889
    %v3892 = vmul.f32 %v3890, %v3890
    %v3893 = vmul.f32 %v3891, %v3891
    %v3894 = vsel %vm312, %v3892, 0.0
    %3895 = vadd.xlane.f32.xlu0 %v3894
    %v3896 = vpop.xlane.xlu0 %3895
    %v3897 = vsel %vm312, %v3893, 0.0
    %3898 = vadd.xlane.f32.xlu0 %v3897
    %v3899 = vpop.xlane.xlu0 %3898
    %v3900 = vmul.f32 %v3896, %v319
    %v3901 = vmul.f32 %v3899, %v319
    %v3902 = vadd.f32 %v3900, 1e-05
    %v3903 = vadd.f32 %v3901, 1e-05
    %v3904 = vrsqrt.pop %v3902
    %v3905 = vrsqrt.pop %v3903
    %v3906 = vmul.f32 %v3890, %v3904
    %v3907 = vmul.f32 %v3891, %v3905
    %v3908 = vlaneseq
    %v3909 = vshrl.u32 %v3908, 7
    %v3910 = vsub.s32 7, %v3909
    %v3911 = vrot.slane %v2142, %v3910
    %v3912 = vmul.f32 %v3906, %v3911
    %v3913 = vmul.f32 %v3907, %v3911
    %v3914 = vlaneseq
    %v3915 = vshrl.u32 %v3914, 7
    %v3916 = vsub.s32 0, %v3915
    %v3917 = vrot.slane %v2143, %v3916
    %v3918 = vadd.f32 %v3912, %v3917
    %v3919 = vadd.f32 %v3913, %v3917
    %v3920 = vlaneseq
    %v3921 = vshrl.u32 %v3920, 7
    %v3922 = vmul.u32 %v3921, 8
    %vm3923 = vcmp.eq.s32.totalorder %v64, %v3922
    %v3924 = vsel %vm3923, 1, 0
    %v3925 = vcvt.s32.f32 %v3924
    %v3927 = vsel %vm112, %v3925, 0
    %3929 = vmatprep.subr.mxu0 0.0
    %3930 = vmatpush1.msra.mxu0 %v3918
    %3931 = vmatprep.subr.mxu0 0.0
    %3932 = vmatpush1.msra.mxu0 %v3919
    %3933 = vmatprep.subr.mxu0 0.0
    %3934 = vmatpush1.msra.mxu0 0.0
    %3935 = vmatprep.subr.mxu0 0.0
    %3936 = vmatpush1.msra.mxu0 0.0
    %3937 = vmatprep.subr.mxu0 0.0
    %3938 = vmatpush1.msra.mxu0 0.0
    %3939 = vmatprep.subr.mxu0 0.0
    %3940 = vmatpush1.msra.mxu0 0.0
    %3941 = vmatprep.subr.mxu0 0.0
    %3942 = vmatpush1.msra.mxu0 0.0
    %3943 = vmatprep.subr.mxu0 0.0
    %3944 = vmatpush1.msra.mxu0 0.0
    %3945 = vmatprep.subr.mxu0 0.0
    %3946 = vmatpush1.msra.mxu0 0.0
    %3947 = vmatprep.subr.mxu0 0.0
    %3948 = vmatpush1.msra.mxu0 0.0
    %3949 = vmatprep.subr.mxu0 0.0
    %3950 = vmatpush1.msra.mxu0 0.0
    %3951 = vmatprep.subr.mxu0 0.0
    %3952 = vmatpush1.msra.mxu0 0.0
    %3953 = vmatprep.subr.mxu0 0.0
    %3954 = vmatpush1.msra.mxu0 0.0
    %3955 = vmatprep.subr.mxu0 0.0
    %3956 = vmatpush1.msra.mxu0 0.0
    %3957 = vmatprep.subr.mxu0 0.0
    %3958 = vmatpush1.msra.mxu0 0.0
    %3959 = vmatprep.subr.mxu0 0.0
    %3960 = vmatpush1.msra.mxu0 0.0
    %3961 = vmatprep.subr.mxu0 0.0
    %3962 = vmatpush1.msra.mxu0 0.0
    %3963 = vmatprep.subr.mxu0 0.0
    %3964 = vmatpush1.msra.mxu0 0.0
    %3965 = vmatprep.subr.mxu0 0.0
    %3966 = vmatpush1.msra.mxu0 0.0
    %3967 = vmatprep.subr.mxu0 0.0
    %3968 = vmatpush1.msra.mxu0 0.0
    %3969 = vmatprep.subr.mxu0 0.0
    %3970 = vmatpush1.msra.mxu0 0.0
    %3971 = vmatprep.subr.mxu0 0.0
    %3972 = vmatpush1.msra.mxu0 0.0
    %3973 = vmatprep.subr.mxu0 0.0
    %3974 = vmatpush1.msra.mxu0 0.0
    %3975 = vmatprep.subr.mxu0 0.0
    %3976 = vmatpush1.msra.mxu0 0.0
    %3977 = vmatprep.subr.mxu0 0.0
    %3978 = vmatpush1.msra.mxu0 0.0
    %3979 = vmatprep.subr.mxu0 0.0
    %3980 = vmatpush1.msra.mxu0 0.0
    %3981 = vmatprep.subr.mxu0 0.0
    %3982 = vmatpush1.msra.mxu0 0.0
    %3983 = vmatprep.subr.mxu0 0.0
    %3984 = vmatpush1.msra.mxu0 0.0
    %3985 = vmatprep.subr.mxu0 0.0
    %3986 = vmatpush1.msra.mxu0 0.0
    %3987 = vmatprep.subr.mxu0 0.0
    %3988 = vmatpush1.msra.mxu0 0.0
    %3989 = vmatprep.subr.mxu0 0.0
    %3990 = vmatpush1.msra.mxu0 0.0
    %3991 = vmatprep.subr.mxu0 0.0
    %3992 = vmatpush1.msra.mxu0 0.0
    %3993 = vmatprep.mubr.f32.mxu0 0.0
    %3994 = vmatmul.mubr.f32.gmra.mrb[0].mxu0 %v3927
    %v3995 = vpop.f32.mrb[0].mxu0
    %v3996 = vadd.f32 0.0, %v3995
    %v3997 = vpop.f32.mrb[0].mxu0
    %3998 = vdwg.mxu0
    %v3999 = vpack.c.bf16 %v3996, %v3996
    %v4000 = vld [vmem:[%s13] sm:$0xf]
    %v4001 = vld [vmem:[%s13 + $0x4] sm:$0xf]
    %v4002 = vld [vmem:[%s13 + $0x8] sm:$0xf]
    %v4003 = vld [vmem:[%s13 + $0xc] sm:$0xf]
    %v4004 = vld [vmem:[%s14] sm:$0x1]
    %v4006 = vlaneseq
    %v4007 = vshrl.u32 %v4006, 7
    %v4008 = vsub.s32 0, %v4007
    %v4009 = vrot.slane %v4004, %v4008
    %v4015 = vunpack.c.l.b16 %v4000
    %v4016 = vunpack.c.l.b16 %v4001
    %v4017 = vunpack.c.l.b16 %v4002
    %v4018 = vunpack.c.l.b16 %v4003
    %v4019 = vpack.c.b16 %v4016, %v4015
    %v4020 = vpack.c.b16 %v4018, %v4017
    %v4024 = vsel %vm312, %v3999, 0
    %4026 = vmatprep.subr.bf16.mxu0 0
    %4027 = vmatpush1.bf16.msra.mxu0 %v4019
    %4028 = vmatprep.subr.bf16.mxu0 0
    %4029 = vmatpush1.bf16.msra.mxu0 %v4020
    %4030 = vmatprep.subr.bf16.mxu0 0
    %4031 = vmatpush1.bf16.msra.mxu0 0
    %4032 = vmatprep.subr.bf16.mxu0 0
    %4033 = vmatpush1.bf16.msra.mxu0 0
    %4034 = vmatprep.subr.bf16.mxu0 0
    %4035 = vmatpush1.bf16.msra.mxu0 0
    %4036 = vmatprep.subr.bf16.mxu0 0
    %4037 = vmatpush1.bf16.msra.mxu0 0
    %4038 = vmatprep.subr.bf16.mxu0 0
    %4039 = vmatpush1.bf16.msra.mxu0 0
    %4040 = vmatprep.subr.bf16.mxu0 0
    %4041 = vmatpush1.bf16.msra.mxu0 0
    %4042 = vmatprep.subr.bf16.mxu0 0
    %4043 = vmatpush1.bf16.msra.mxu0 0
    %4044 = vmatprep.subr.bf16.mxu0 0
    %4045 = vmatpush1.bf16.msra.mxu0 0
    %4046 = vmatprep.subr.bf16.mxu0 0
    %4047 = vmatpush1.bf16.msra.mxu0 0
    %4048 = vmatprep.subr.bf16.mxu0 0
    %4049 = vmatpush1.bf16.msra.mxu0 0
    %4050 = vmatprep.subr.bf16.mxu0 0
    %4051 = vmatpush1.bf16.msra.mxu0 0
    %4052 = vmatprep.subr.bf16.mxu0 0
    %4053 = vmatpush1.bf16.msra.mxu0 0
    %4054 = vmatprep.subr.bf16.mxu0 0
    %4055 = vmatpush1.bf16.msra.mxu0 0
    %4056 = vmatprep.subr.bf16.mxu0 0
    %4057 = vmatpush1.bf16.msra.mxu0 0
    %4058 = vmatprep.mubr.bf16.mxu0 0
    %4059 = vmatmul.mubr.bf16.gmra.mrb[0].mxu0 %v4024
    %v4060 = vpop.f32.mrb[0].mxu0
    %v4061 = vadd.f32 %v4009, %v4060
    %v4062 = vpop.f32.mrb[0].mxu0
    %v4063 = vpop.f32.mrb[0].mxu0
    %v4064 = vpop.f32.mrb[0].mxu0
    %4065 = vdwg.mxu0
    %v4066 = vtanh.pop %v4061
    %v4067 = vpack.c.bf16 %v4066, %v4066
    %v4068 = vld [vmem:[%s15] sm:$0xf]
    %v4069 = vld [vmem:[%s15 + $0x4] sm:$0xf]
    %v4070 = vld [vmem:[%s15 + $0x8] sm:$0xf]
    %v4071 = vld [vmem:[%s15 + $0xc] sm:$0xf]
    %v4072 = vld [vmem:[%s16] sm:$0x1]
    %v4074 = vlaneseq
    %v4075 = vshrl.u32 %v4074, 7
    %v4076 = vsub.s32 0, %v4075
    %v4077 = vrot.slane %v4072, %v4076
    %v4083 = vunpack.c.l.b16 %v4068
    %v4084 = vunpack.c.l.b16 %v4069
    %v4085 = vunpack.c.l.b16 %v4070
    %v4086 = vunpack.c.l.b16 %v4071
    %v4087 = vpack.c.b16 %v4084, %v4083
    %v4088 = vpack.c.b16 %v4086, %v4085
    %v4092 = vsel %vm312, %v4067, 0
    %4094 = vmatprep.subr.bf16.mxu0 0
    %4095 = vmatpush1.bf16.msra.mxu0 %v4087
    %4096 = vmatprep.subr.bf16.mxu0 0
    %4097 = vmatpush1.bf16.msra.mxu0 %v4088
    %4098 = vmatprep.subr.bf16.mxu0 0
    %4099 = vmatpush1.bf16.msra.mxu0 0
    %4100 = vmatprep.subr.bf16.mxu0 0
    %4101 = vmatpush1.bf16.msra.mxu0 0
    %4102 = vmatprep.subr.bf16.mxu0 0
    %4103 = vmatpush1.bf16.msra.mxu0 0
    %4104 = vmatprep.subr.bf16.mxu0 0
    %4105 = vmatpush1.bf16.msra.mxu0 0
    %4106 = vmatprep.subr.bf16.mxu0 0
    %4107 = vmatpush1.bf16.msra.mxu0 0
    %4108 = vmatprep.subr.bf16.mxu0 0
    %4109 = vmatpush1.bf16.msra.mxu0 0
    %4110 = vmatprep.subr.bf16.mxu0 0
    %4111 = vmatpush1.bf16.msra.mxu0 0
    %4112 = vmatprep.subr.bf16.mxu0 0
    %4113 = vmatpush1.bf16.msra.mxu0 0
    %4114 = vmatprep.subr.bf16.mxu0 0
    %4115 = vmatpush1.bf16.msra.mxu0 0
    %4116 = vmatprep.subr.bf16.mxu0 0
    %4117 = vmatpush1.bf16.msra.mxu0 0
    %4118 = vmatprep.subr.bf16.mxu0 0
    %4119 = vmatpush1.bf16.msra.mxu0 0
    %4120 = vmatprep.subr.bf16.mxu0 0
    %4121 = vmatpush1.bf16.msra.mxu0 0
    %4122 = vmatprep.subr.bf16.mxu0 0
    %4123 = vmatpush1.bf16.msra.mxu0 0
    %4124 = vmatprep.subr.bf16.mxu0 0
    %4125 = vmatpush1.bf16.msra.mxu0 0
    %4126 = vmatprep.mubr.bf16.mxu0 0
    %4127 = vmatmul.mubr.bf16.gmra.mrb[0].mxu0 %v4092
    %v4128 = vpop.f32.mrb[0].mxu0
    %v4129 = vadd.f32 %v4077, %v4128
    %v4130 = vpop.f32.mrb[0].mxu0
    %v4131 = vpop.f32.mrb[0].mxu0
    %v4132 = vpop.f32.mrb[0].mxu0
    %4133 = vdwg.mxu0
    %4134 = vst [vmem:[#allocation3] sm:$0x3] %v4129
    %vm4135 = vcmp.lt.s32.totalorder %v64, 53
    %v4136 = vsel %vm4135, %v4129, -1e+30
    %v4137 = vsel %vm200, %v4136, -inf
    %4138 = vmax.xlane.f32.xlu0 %v4137
    %v4139 = vpop.xlane.xlu0 %4138
    %v4140 = vsub.f32 %v4136, %v4139
    %v4141 = vmul.f32 %v4140, 1.442695
    %v4142 = vpow.pop %v4141
    %v4143 = vsel %vm200, %v4142, 0.0
    %4144 = vadd.xlane.f32.xlu0 %v4143
    %v4145 = vpop.xlane.xlu0 %4144
    %v4146 = vlog2.pop %v4145
    %v4147 = vmul.f32 %v4146, 0.6931472
    %v4148 = vadd.f32 %v4139, %v4147
    %v4149 = vld [vmem:[%s2] sm:$0x3]
    %4150 = vset.pattern.permute.xlu0 0
    %4151 = vperm.xlu0 %4150, %v4149
    %v4152 = vpop.permute.xlu0 %4151
    %vm4153 = vcmp.eq.s32.totalorder %v64, %v4152
    %v4154 = vsel %vm4153, 1, 0
    %v4155 = vcvt.s32.f32 %v4154
    %v4156 = vmul.f32 %v4129, %v4155
    %v4157 = vsel %vm200, %v4156, 0.0
    %4158 = vadd.xlane.f32.xlu0 %v4157
    %v4159 = vpop.xlane.xlu0 %4158
    %v4160 = vsub.f32 %v4148, %v4159
    %v4161 = vsel %vm200, %v4160, 0.0
    %v4162 = vrot.slane %v4161, 4
    %v4163 = vadd.f32 %v4161, %v4162
    %v4164 = vrot.slane %v4163, 2
    %v4165 = vadd.f32 %v4163, %v4164
    %v4166 = vrot.slane %v4165, 1
    %v4167 = vadd.f32 %v4165, %v4166
    %v4168 = vrcp.pop 2.0
    %v4169 = vmul.f32 %v4167, %v4168
    %vm4170 = vcmask 0
    %4171 = vst.msk [vmem:[#allocation5] sm:$0x1] %vm4170, %v4169
    // Predicated region
    $region70: #{parser_model_forward.1} parent=1 // pred_check
      _
    $region71: #{parser_model_forward.1} parent=1 // pred_check_branch
      %4173 = sbr.rel (0) target = $region73
    $region72: #{parser_model_forward.1} parent=1 // pred_region
      %s4175 = ssub.s32 32, 32
      %4176 = vsyncadd [#allocation4], %s4175
      %s4178 = sshll.u32 [#allocation3], 4
      %s4179 = int_to_ptr.vmem [resolvable:$true] %s4178
      %4181 = dma.vmem_to_hbm [thread:$0]  %s4179, 32, %s17, [#allocation4]
    $region73: #{parser_model_forward.1} parent=1 // pred_fallthru
      _
    // Predicated region
    $region74: #{parser_model_forward.1} parent=1 // pred_check
      _
    $region75: #{parser_model_forward.1} parent=1 // pred_check_branch
      %4183 = sbr.rel (0) target = $region77
    $region76: #{parser_model_forward.1} parent=1 // pred_region
      %s4185 = ssub.s32 16, 16
      %4186 = vsyncadd [#allocation6], %s4185
      %s4188 = sshll.u32 [#allocation5], 4
      %s4189 = int_to_ptr.vmem [resolvable:$true] %s4188
      %4191 = dma.vmem_to_hbm [thread:$0]  %s4189, 16, %s18, [#allocation6]
    $region77: #{parser_model_forward.1} parent=1 // pred_fallthru
      _
    // Predicated region
    $region78: #{parser_model_forward.1} parent=1 // pred_check
      _
    $region79: #{parser_model_forward.1} parent=1 // pred_check_branch
      %4193 = sbr.rel (0) target = $region81
    $region80: #{parser_model_forward.1} parent=1 // pred_region
      %4194 = dma.done [#allocation4], 32
    $region81: #{parser_model_forward.1} parent=1 // pred_fallthru
      _
    // Predicated region
    $region82: #{parser_model_forward.1} parent=1 // pred_check
      _
    $region83: #{parser_model_forward.1} parent=1 // pred_check_branch
      %4196 = sbr.rel (0) target = $region85
    $region84: #{parser_model_forward.1} parent=1 // pred_region
      %4197 = dma.done [#allocation6], 16
    $region85: #{parser_model_forward.1} parent=1 // pred_fallthru
      _
    %4198 = vsyncpa [#allocation4], 1
    %4199 = vsyncpa [#allocation6], 1

</llo_original>
